<compile_context>
chip_gen: v5e
topology: v5e:2x2
jax: 0.10.0
libtpu: 0.0.40
codegen_flags: <defaults>
</compile_context>

<pallas_src>
import jax
import jax.numpy as jnp
from jax.experimental import pallas as pl
from jax.experimental.pallas import tpu as pltpu

# ----------------------------- model config (small) -----------------------------
IMG = 32          # image size (real model: 224)
PATCH = 16        # patch size (same as real model)
C_IN = 3
EMBED_DIM = 128   # real: 768
NUM_HEADS = 4     # real: 12
HEAD_DIM = EMBED_DIM // NUM_HEADS
DEPTH = 2         # real: 12
MLP_HIDDEN = 128  # real: ~2048 (SwiGLU)
NUM_CLASSES = 1
LN_EPS = 1e-6
N_PATCHES = (IMG // PATCH) ** 2
SEQ = N_PATCHES + 1                 # 5 = cls + patches
SEQ_PAD = 8                         # padded to a sublane multiple
PATCH_DIM = C_IN * PATCH * PATCH    # 768


# ================================ kernel helpers ================================

def _ln(x, g, b):
    """LayerNorm over the last axis (f32 VPU math)."""
    mean = jnp.mean(x, axis=-1, keepdims=True)
    var = jnp.mean((x - mean) ** 2, axis=-1, keepdims=True)
    return (x - mean) * jax.lax.rsqrt(var + LN_EPS) * g + b


# ================================ fused model kernel ================================

def _eva2_kernel(patch_ref, tmpl_ref, cos_ref, sin_ref, bias_ref, patch_w_ref,
                 ln1_g, ln1_b, qkvr_w, qkvr_b, proj_w, proj_b,
                 ln2_g, ln2_b, w12, b12, lnm_g, lnm_b, w3, b3,
                 lnf_g, lnf_b, head_w, head_b, out_ref):
    D = EMBED_DIM
    Hm = MLP_HIDDEN
    bg = tmpl_ref.shape[0] // SEQ_PAD          # images per grid step (flattened into M)
    bf = jnp.bfloat16

    # ---- patch embed + token assembly (template already holds cls+pos / pos+patch_bias;
    #      padded patch rows are zero so they contribute nothing) ----
    tok = tmpl_ref[...] + jnp.dot(patch_ref[0], patch_w_ref[...],
                                  preferred_element_type=jnp.float32)

    cos = cos_ref[...]
    sin = sin_ref[...]
    attn_bias = bias_ref[...]                  # 0 / -1e30: padded keys + cross-image blocks

    for d in range(DEPTH):
        x = tok
        # -------- attention --------
        h = _ln(x, ln1_g[d], ln1_b[d])
        qkvr = jnp.dot(h.astype(bf), qkvr_w[d],
                       preferred_element_type=jnp.float32) + qkvr_b[d]      # (M, 5D)
        q = qkvr[:, 0 * D:1 * D]
        k = qkvr[:, 1 * D:2 * D]
        v = qkvr[:, 2 * D:3 * D].astype(bf)
        qr = qkvr[:, 3 * D:4 * D]              # q @ R (rotate-half) via folded weights
        kr = qkvr[:, 4 * D:5 * D]              # k @ R
        q = (q * cos + qr * sin).astype(bf)    # 1/sqrt(head_dim) already folded into W_q
        k = (k * cos + kr * sin).astype(bf)

        o_heads = []
        for hd in range(NUM_HEADS):
            lo = hd * HEAD_DIM
            hi = lo + HEAD_DIM
            s = jax.lax.dot_general(q[:, lo:hi], k[:, lo:hi],
                                    (((1,), (1,)), ((), ())),
                                    preferred_element_type=jnp.float32)     # (M, M)
            s = s + attn_bias
            s = s - jnp.max(s, axis=-1, keepdims=True)
            p = jnp.exp(s)
            p = p * pl.reciprocal(jnp.sum(p, axis=-1, keepdims=True), approx=True)
            o_heads.append(jnp.dot(p.astype(bf), v[:, lo:hi],
                                   preferred_element_type=jnp.float32))     # (M, Dh)
        o = jnp.concatenate(o_heads, axis=-1)                               # (M, D) lane-dense
        x = x + jnp.dot(o.astype(bf), proj_w[d],
                        preferred_element_type=jnp.float32) + proj_b[d]

        # -------- SwiGLU MLP with sub-LN --------
        h = _ln(x, ln2_g[d], ln2_b[d])
        h12 = jnp.dot(h.astype(bf), w12[d],
                      preferred_element_type=jnp.float32) + b12[d]           # (M, 2*Hm)
        h1 = h12[:, :Hm]
        h2 = h12[:, Hm:]
        gate = (h1 * jax.nn.sigmoid(h1)) * h2                                # SiLU(h1) * h2
        gate = _ln(gate, lnm_g[d], lnm_b[d])
        tok = x + jnp.dot(gate.astype(bf), w3[d],
                          preferred_element_type=jnp.float32) + b3[d]

    # ---- final LN on cls rows only + linear head (VPU reduce) + sigmoid * 18 ----
    if bg == 1:
        cls = tok[0:1, :]
    else:
        cls = jnp.concatenate([tok[i * SEQ_PAD:i * SEQ_PAD + 1, :] for i in range(bg)],
                              axis=0)
    hc = _ln(cls, lnf_g[...], lnf_b[...])
    logits = jnp.sum(hc * head_w[...], axis=-1, keepdims=True) + head_b[...]
    out_ref[0] = jax.nn.sigmoid(logits) * 18.0


# ================================ wrapper ================================

def eva2_forward(x_nchw, params):
    """x_nchw: [B, 3, IMG, IMG] float32 -> [B, NUM_CLASSES] = sigmoid(logits) * 18."""
    B = x_nchw.shape[0]
    num_groups = 2 if (B % 2 == 0 and B >= 2) else 1   # "parallel" axis for v7x's 2 TCs
    bg = B // num_groups                               # images flattened into M per step
    m = bg * SEQ_PAD
    D = EMBED_DIM
    Hm = MLP_HIDDEN
    hp = IMG // PATCH

    # im2col (flatten order C, ph, pw = timm conv), laid out per-image as
    # [cls row (zeros), patch rows 1..SEQ-1, pad rows] so the kernel matmul lands in place.
    patches = (x_nchw.reshape(B, C_IN, hp, PATCH, hp, PATCH)
                      .transpose(0, 2, 4, 1, 3, 5)
                      .reshape(B, N_PATCHES, PATCH_DIM))
    patches = jnp.pad(patches, ((0, 0), (1, SEQ_PAD - SEQ), (0, 0)))
    patches = patches.reshape(num_groups, m, PATCH_DIM).astype(jnp.bfloat16)

    # param-only constants, tiled to the flattened group length (constant-folded under jit)
    tmpl = jnp.tile(params["tok_template"], (bg, 1))
    cos = jnp.tile(params["rope_cos"], (bg, 1))
    sin = jnp.tile(params["rope_sin"], (bg, 1))

    # additive attention bias: key valid iff within-SEQ and same image block
    j = jnp.arange(m)
    valid = (((j % SEQ_PAD) < SEQ)[None, :]
             & ((j // SEQ_PAD)[None, :] == (j // SEQ_PAD)[:, None]))
    attn_bias = jnp.where(valid, 0.0, -1e30).astype(jnp.float32)

    def cspec(shape):
        zeros = (0,) * len(shape)
        return pl.BlockSpec(shape, lambda g, z=zeros: z)

    out = pl.pallas_call(
        _eva2_kernel,
        grid=(num_groups,),
        out_shape=jax.ShapeDtypeStruct((num_groups, bg, NUM_CLASSES), jnp.float32),
        in_specs=[
            pl.BlockSpec((1, m, PATCH_DIM), lambda g: (g, 0, 0)),    # patches
            cspec((m, D)), cspec((m, D)), cspec((m, D)),             # template, cos, sin
            cspec((m, m)),                                           # attention bias
            cspec((PATCH_DIM, D)),                                   # patch embed weight
            cspec((DEPTH, 1, D)), cspec((DEPTH, 1, D)),              # ln1
            cspec((DEPTH, D, 5 * D)), cspec((DEPTH, 1, 5 * D)),      # fused qkv+rope
            cspec((DEPTH, D, D)), cspec((DEPTH, 1, D)),              # out proj
            cspec((DEPTH, 1, D)), cspec((DEPTH, 1, D)),              # ln2
            cspec((DEPTH, D, 2 * Hm)), cspec((DEPTH, 1, 2 * Hm)),    # fused w1|w2
            cspec((DEPTH, 1, Hm)), cspec((DEPTH, 1, Hm)),            # sub-LN
            cspec((DEPTH, Hm, D)), cspec((DEPTH, 1, D)),             # w3
            cspec((1, D)), cspec((1, D)),                            # final LN
            cspec((1, D)), cspec((1, 1)),                            # head
        ],
        out_specs=pl.BlockSpec((1, bg, NUM_CLASSES), lambda g: (g, 0, 0)),
        compiler_params=pltpu.CompilerParams(dimension_semantics=("parallel",)),
    )(patches, tmpl, cos, sin, attn_bias, params["patch_w"],
      params["ln1_g"], params["ln1_b"], params["qkvr_w"], params["qkvr_b"],
      params["proj_w"], params["proj_b"],
      params["ln2_g"], params["ln2_b"], params["w12"], params["b12"],
      params["lnm_g"], params["lnm_b"], params["w3"], params["b3"],
      params["lnf_g"], params["lnf_b"], params["head_w"], params["head_b"])
    return out.reshape(B, NUM_CLASSES)


# ================================ params (pre-baked) ================================

def init_params(key):
    """Synthetic weights, pre-baked for the kernel: bf16 matmul weights, rope matrix and
    1/sqrt(head_dim) folded into the QKV weight, w1|w2 fused, depth-stacked arrays."""
    def nrm(k, shape, scale=0.02):
        return (scale * jax.random.normal(k, shape)).astype(jnp.float32)

    D, Hm = EMBED_DIM, MLP_HIDDEN
    bf = jnp.bfloat16
    keys = jax.random.split(key, 8 + DEPTH)

    # 1D rotate-half rope tables (identity at pos 0 / cls), tiled to full lane width.
    half = HEAD_DIM // 2
    inv_freq = 1.0 / (10000.0 ** (jnp.arange(0, half, dtype=jnp.float32) / half))
    ang = jnp.arange(SEQ_PAD, dtype=jnp.float32)[:, None] * inv_freq[None, :]
    cos = jnp.tile(jnp.concatenate([jnp.cos(ang), jnp.cos(ang)], axis=-1), (1, NUM_HEADS))
    sin = jnp.tile(jnp.concatenate([jnp.sin(ang), jnp.sin(ang)], axis=-1), (1, NUM_HEADS))
    # rotate-half matrix R (per head, x @ R == [-x2, x1]); folded into the QKV weights.
    eye = jnp.eye(half, dtype=jnp.float32)
    zer = jnp.zeros((half, half), jnp.float32)
    r_head = jnp.block([[zer, eye], [-eye, zer]])
    rot = jnp.kron(jnp.eye(NUM_HEADS, dtype=jnp.float32), r_head)

    patch_w = nrm(keys[0], (PATCH_DIM, D))
    patch_b = jnp.zeros((D,), jnp.float32)
    cls_token = nrm(keys[1], (D,))
    pos_embed = nrm(keys[2], (SEQ, D))
    head_w = nrm(keys[3], (D,))

    # token template: row 0 = cls + pos0 ; rows 1..SEQ-1 = pos + patch bias ; pad rows = 0
    tmpl = jnp.zeros((SEQ_PAD, D), jnp.float32)
    tmpl = tmpl.at[0].set(cls_token + pos_embed[0])
    tmpl = tmpl.at[1:SEQ].set(pos_embed[1:] + patch_b)

    scale = 1.0 / (HEAD_DIM ** 0.5)
    qkvr_w, qkvr_b, proj_w, proj_b = [], [], [], []
    w12, b12, w3, b3 = [], [], [], []
    for d in range(DEPTH):
        bk = jax.random.split(keys[8 + d], 6)
        wq = nrm(bk[0], (D, D)) * scale          # fold 1/sqrt(head_dim) into W_q
        wk = nrm(bk[1], (D, D))
        wv = nrm(bk[2], (D, D))
        bq = jnp.zeros((D,), jnp.float32) * scale
        bkk = jnp.zeros((D,), jnp.float32)       # k-bias is zero in EVA
        bv = jnp.zeros((D,), jnp.float32)
        qkvr_w.append(jnp.concatenate([wq, wk, wv, wq @ rot, wk @ rot], axis=1))
        qkvr_b.append(jnp.concatenate([bq, bkk, bv, bq @ rot, bkk @ rot])[None])
        proj_w.append(nrm(bk[3], (D, D)))
        proj_b.append(jnp.zeros((1, D), jnp.float32))
        w12.append(jnp.concatenate([nrm(bk[4], (D, Hm)), nrm(bk[5], (D, Hm))], axis=1))
        b12.append(jnp.zeros((1, 2 * Hm), jnp.float32))
        w3.append(nrm(jax.random.fold_in(bk[5], 1), (Hm, D)))
        b3.append(jnp.zeros((1, D), jnp.float32))

    ones_d = jnp.ones((DEPTH, 1, D), jnp.float32)
    zeros_d = jnp.zeros((DEPTH, 1, D), jnp.float32)

    return {
        "tok_template": tmpl, "rope_cos": cos, "rope_sin": sin,
        "patch_w": patch_w.astype(bf),
        "ln1_g": ones_d, "ln1_b": zeros_d,
        "qkvr_w": jnp.stack(qkvr_w).astype(bf), "qkvr_b": jnp.stack(qkvr_b),
        "proj_w": jnp.stack(proj_w).astype(bf), "proj_b": jnp.stack(proj_b),
        "ln2_g": ones_d, "ln2_b": zeros_d,
        "w12": jnp.stack(w12).astype(bf), "b12": jnp.stack(b12),
        "lnm_g": jnp.ones((DEPTH, 1, Hm), jnp.float32),
        "lnm_b": jnp.zeros((DEPTH, 1, Hm), jnp.float32),
        "w3": jnp.stack(w3).astype(bf), "b3": jnp.stack(b3),
        "lnf_g": jnp.ones((1, D), jnp.float32), "lnf_b": jnp.zeros((1, D), jnp.float32),
        "head_w": head_w.reshape(1, D), "head_b": jnp.zeros((1, 1), jnp.float32),
    }


if __name__ == "__main__":
    key = jax.random.PRNGKey(0)
    k_param, k_input = jax.random.split(key)
    params = init_params(k_param)
    x = jax.random.normal(k_input, (2, C_IN, IMG, IMG), dtype=jnp.float32)  # NCHW

    fwd = jax.jit(eva2_forward)
    out = jax.block_until_ready(fwd(x, params))

    assert out.shape == (2, NUM_CLASSES)
    assert bool(jnp.all(jnp.isfinite(out)))
    assert bool(jnp.all((out >= 0.0) & (out <= 18.0)))
    print("KERNEL_OK")
</pallas_src>

<mosaic_0001>
module attributes {stable_mosaic.version = 11 : i64} {
  func.func @_eva2_kernel(%arg0: i32, %arg1: memref<1x8x768xbf16, #tpu.memory_space<vmem>>, %arg2: memref<8x128xf32, #tpu.memory_space<vmem>>, %arg3: memref<8x128xf32, #tpu.memory_space<vmem>>, %arg4: memref<8x128xf32, #tpu.memory_space<vmem>>, %arg5: memref<8x8xf32, #tpu.memory_space<vmem>>, %arg6: memref<768x128xbf16, #tpu.memory_space<vmem>>, %arg7: memref<2x1x128xf32, #tpu.memory_space<vmem>>, %arg8: memref<2x1x128xf32, #tpu.memory_space<vmem>>, %arg9: memref<2x128x640xbf16, #tpu.memory_space<vmem>>, %arg10: memref<2x1x640xf32, #tpu.memory_space<vmem>>, %arg11: memref<2x128x128xbf16, #tpu.memory_space<vmem>>, %arg12: memref<2x1x128xf32, #tpu.memory_space<vmem>>, %arg13: memref<2x1x128xf32, #tpu.memory_space<vmem>>, %arg14: memref<2x1x128xf32, #tpu.memory_space<vmem>>, %arg15: memref<2x128x256xbf16, #tpu.memory_space<vmem>>, %arg16: memref<2x1x256xf32, #tpu.memory_space<vmem>>, %arg17: memref<2x1x128xf32, #tpu.memory_space<vmem>>, %arg18: memref<2x1x128xf32, #tpu.memory_space<vmem>>, %arg19: memref<2x128x128xbf16, #tpu.memory_space<vmem>>, %arg20: memref<2x1x128xf32, #tpu.memory_space<vmem>>, %arg21: memref<1x128xf32, #tpu.memory_space<vmem>>, %arg22: memref<1x128xf32, #tpu.memory_space<vmem>>, %arg23: memref<1x128xf32, #tpu.memory_space<vmem>>, %arg24: memref<1x1xf32, #tpu.memory_space<vmem>>, %arg25: memref<1x1x1xf32, #tpu.memory_space<vmem>>) attributes {dimension_semantics = [#tpu.dimension_semantics<parallel>], iteration_bounds = array<i64: 2>, scalar_prefetch = 0 : i64, scratch_operands = 0 : i64, tpu.core_type = #tpu.core_type<tc>, window_params = [{transform_indices = @transform_0, window_bounds = array<i64: 1, 8, 768>}, {pipeline_mode = #tpu.pipeline_mode<synchronous>, transform_indices = @transform_1, window_bounds = array<i64: 8, 128>}, {pipeline_mode = #tpu.pipeline_mode<synchronous>, transform_indices = @transform_2, window_bounds = array<i64: 8, 128>}, {pipeline_mode = #tpu.pipeline_mode<synchronous>, transform_indices = @transform_3, window_bounds = array<i64: 8, 128>}, {pipeline_mode = #tpu.pipeline_mode<synchronous>, transform_indices = @transform_4, window_bounds = array<i64: 8, 8>}, {pipeline_mode = #tpu.pipeline_mode<synchronous>, transform_indices = @transform_5, window_bounds = array<i64: 768, 128>}, {pipeline_mode = #tpu.pipeline_mode<synchronous>, transform_indices = @transform_6, window_bounds = array<i64: 2, 1, 128>}, {pipeline_mode = #tpu.pipeline_mode<synchronous>, transform_indices = @transform_7, window_bounds = array<i64: 2, 1, 128>}, {pipeline_mode = #tpu.pipeline_mode<synchronous>, transform_indices = @transform_8, window_bounds = array<i64: 2, 128, 640>}, {pipeline_mode = #tpu.pipeline_mode<synchronous>, transform_indices = @transform_9, window_bounds = array<i64: 2, 1, 640>}, {pipeline_mode = #tpu.pipeline_mode<synchronous>, transform_indices = @transform_10, window_bounds = array<i64: 2, 128, 128>}, {pipeline_mode = #tpu.pipeline_mode<synchronous>, transform_indices = @transform_11, window_bounds = array<i64: 2, 1, 128>}, {pipeline_mode = #tpu.pipeline_mode<synchronous>, transform_indices = @transform_12, window_bounds = array<i64: 2, 1, 128>}, {pipeline_mode = #tpu.pipeline_mode<synchronous>, transform_indices = @transform_13, window_bounds = array<i64: 2, 1, 128>}, {pipeline_mode = #tpu.pipeline_mode<synchronous>, transform_indices = @transform_14, window_bounds = array<i64: 2, 128, 256>}, {pipeline_mode = #tpu.pipeline_mode<synchronous>, transform_indices = @transform_15, window_bounds = array<i64: 2, 1, 256>}, {pipeline_mode = #tpu.pipeline_mode<synchronous>, transform_indices = @transform_16, window_bounds = array<i64: 2, 1, 128>}, {pipeline_mode = #tpu.pipeline_mode<synchronous>, transform_indices = @transform_17, window_bounds = array<i64: 2, 1, 128>}, {pipeline_mode = #tpu.pipeline_mode<synchronous>, transform_indices = @transform_18, window_bounds = array<i64: 2, 128, 128>}, {pipeline_mode = #tpu.pipeline_mode<synchronous>, transform_indices = @transform_19, window_bounds = array<i64: 2, 1, 128>}, {pipeline_mode = #tpu.pipeline_mode<synchronous>, transform_indices = @transform_20, window_bounds = array<i64: 1, 128>}, {pipeline_mode = #tpu.pipeline_mode<synchronous>, transform_indices = @transform_21, window_bounds = array<i64: 1, 128>}, {pipeline_mode = #tpu.pipeline_mode<synchronous>, transform_indices = @transform_22, window_bounds = array<i64: 1, 128>}, {pipeline_mode = #tpu.pipeline_mode<synchronous>, transform_indices = @transform_23, window_bounds = array<i64: 1, 1>}, {transform_indices = @transform_24, window_bounds = array<i64: 1, 1, 1>}]} {
    %c0 = arith.constant 0 : index
    %c0_0 = arith.constant 0 : index
    %0 = vector.load %arg2[%c0, %c0_0] : memref<8x128xf32, #tpu.memory_space<vmem>>, vector<8x128xf32>
    %c0_1 = arith.constant 0 : index
    %c0_2 = arith.constant 0 : index
    %c0_3 = arith.constant 0 : index
    %1 = vector.load %arg1[%c0_1, %c0_2, %c0_3] : memref<1x8x768xbf16, #tpu.memory_space<vmem>>, vector<1x8x768xbf16>
    %2 = vector.shape_cast %1 : vector<1x8x768xbf16> to vector<8x768xbf16>
    %c0_4 = arith.constant 0 : index
    %c0_5 = arith.constant 0 : index
    %3 = vector.load %arg6[%c0_4, %c0_5] : memref<768x128xbf16, #tpu.memory_space<vmem>>, vector<768x128xbf16>
    %cst = arith.constant dense<0.000000e+00> : vector<8x128xf32>
    %4 = tpu.matmul %2, %3, %cst {dimension_numbers = #tpu.dot_dimension_numbers<[1], [0], [0], [1], [0, 0, 1, 1], [], []>} : vector<8x768xbf16>, vector<768x128xbf16>, vector<8x128xf32> -> vector<8x128xf32>
    %5 = arith.addf %0, %4 : vector<8x128xf32>
    %c0_6 = arith.constant 0 : index
    %c0_7 = arith.constant 0 : index
    %6 = vector.load %arg3[%c0_6, %c0_7] : memref<8x128xf32, #tpu.memory_space<vmem>>, vector<8x128xf32>
    %c0_8 = arith.constant 0 : index
    %c0_9 = arith.constant 0 : index
    %7 = vector.load %arg4[%c0_8, %c0_9] : memref<8x128xf32, #tpu.memory_space<vmem>>, vector<8x128xf32>
    %c0_10 = arith.constant 0 : index
    %c0_11 = arith.constant 0 : index
    %8 = vector.load %arg5[%c0_10, %c0_11] : memref<8x8xf32, #tpu.memory_space<vmem>>, vector<8x8xf32>
    %c0_12 = arith.constant 0 : index
    %c0_13 = arith.constant 0 : index
    %c0_14 = arith.constant 0 : index
    %9 = vector.load %arg7[%c0_12, %c0_13, %c0_14] : memref<2x1x128xf32, #tpu.memory_space<vmem>>, vector<1x1x128xf32>
    %10 = vector.shape_cast %9 : vector<1x1x128xf32> to vector<1x128xf32>
    %c0_15 = arith.constant 0 : index
    %c0_16 = arith.constant 0 : index
    %c0_17 = arith.constant 0 : index
    %11 = vector.load %arg8[%c0_15, %c0_16, %c0_17] : memref<2x1x128xf32, #tpu.memory_space<vmem>>, vector<1x1x128xf32>
    %12 = vector.shape_cast %11 : vector<1x1x128xf32> to vector<1x128xf32>
    %cst_18 = arith.constant dense<0.000000e+00> : vector<8xf32>
    %13 = vector.multi_reduction <add>, %5, %cst_18 [1] : vector<8x128xf32> to vector<8xf32>
    %14 = vector.shape_cast %13 : vector<8xf32> to vector<8x1xf32>
    %cst_19 = arith.constant 1.280000e+02 : f32
    %15 = vector.broadcast %cst_19 : f32 to vector<8x1xf32>
    %16 = arith.divf %14, %15 : vector<8x1xf32>
    %17 = vector.broadcast %16 : vector<8x1xf32> to vector<8x128xf32>
    %18 = arith.subf %5, %17 : vector<8x128xf32>
    %19 = arith.mulf %18, %18 : vector<8x128xf32>
    %cst_20 = arith.constant dense<0.000000e+00> : vector<8xf32>
    %20 = vector.multi_reduction <add>, %19, %cst_20 [1] : vector<8x128xf32> to vector<8xf32>
    %21 = vector.shape_cast %20 : vector<8xf32> to vector<8x1xf32>
    %cst_21 = arith.constant 1.280000e+02 : f32
    %22 = vector.broadcast %cst_21 : f32 to vector<8x1xf32>
    %23 = arith.divf %21, %22 : vector<8x1xf32>
    %24 = vector.broadcast %16 : vector<8x1xf32> to vector<8x128xf32>
    %25 = arith.subf %5, %24 : vector<8x128xf32>
    %cst_22 = arith.constant 9.99999997E-7 : f32
    %26 = vector.broadcast %cst_22 : f32 to vector<8x1xf32>
    %27 = arith.addf %23, %26 : vector<8x1xf32>
    %28 = math.rsqrt %27 : vector<8x1xf32>
    %29 = vector.broadcast %28 : vector<8x1xf32> to vector<8x128xf32>
    %30 = arith.mulf %25, %29 : vector<8x128xf32>
    %31 = vector.broadcast %10 : vector<1x128xf32> to vector<8x128xf32>
    %32 = arith.mulf %30, %31 : vector<8x128xf32>
    %33 = vector.broadcast %12 : vector<1x128xf32> to vector<8x128xf32>
    %34 = arith.addf %32, %33 : vector<8x128xf32>
    %35 = arith.truncf %34 : vector<8x128xf32> to vector<8x128xbf16>
    %c0_23 = arith.constant 0 : index
    %c0_24 = arith.constant 0 : index
    %c0_25 = arith.constant 0 : index
    %36 = vector.load %arg9[%c0_23, %c0_24, %c0_25] : memref<2x128x640xbf16, #tpu.memory_space<vmem>>, vector<1x128x640xbf16>
    %37 = vector.shape_cast %36 : vector<1x128x640xbf16> to vector<128x640xbf16>
    %cst_26 = arith.constant dense<0.000000e+00> : vector<8x640xf32>
    %38 = tpu.matmul %35, %37, %cst_26 {dimension_numbers = #tpu.dot_dimension_numbers<[1], [0], [0], [1], [0, 0, 1, 1], [], []>} : vector<8x128xbf16>, vector<128x640xbf16>, vector<8x640xf32> -> vector<8x640xf32>
    %c0_27 = arith.constant 0 : index
    %c0_28 = arith.constant 0 : index
    %c0_29 = arith.constant 0 : index
    %39 = vector.load %arg10[%c0_27, %c0_28, %c0_29] : memref<2x1x640xf32, #tpu.memory_space<vmem>>, vector<1x1x640xf32>
    %40 = vector.shape_cast %39 : vector<1x1x640xf32> to vector<1x640xf32>
    %41 = vector.broadcast %40 : vector<1x640xf32> to vector<8x640xf32>
    %42 = arith.addf %38, %41 : vector<8x640xf32>
    %43 = vector.extract_strided_slice %42 {offsets = [0, 0], sizes = [8, 128], strides = [1, 1]} : vector<8x640xf32> to vector<8x128xf32>
    %44 = vector.extract_strided_slice %42 {offsets = [0, 128], sizes = [8, 128], strides = [1, 1]} : vector<8x640xf32> to vector<8x128xf32>
    %45 = vector.extract_strided_slice %42 {offsets = [0, 256], sizes = [8, 128], strides = [1, 1]} : vector<8x640xf32> to vector<8x128xf32>
    %46 = arith.truncf %45 : vector<8x128xf32> to vector<8x128xbf16>
    %47 = vector.extract_strided_slice %42 {offsets = [0, 384], sizes = [8, 128], strides = [1, 1]} : vector<8x640xf32> to vector<8x128xf32>
    %48 = vector.extract_strided_slice %42 {offsets = [0, 512], sizes = [8, 128], strides = [1, 1]} : vector<8x640xf32> to vector<8x128xf32>
    %49 = arith.mulf %43, %6 : vector<8x128xf32>
    %50 = arith.mulf %47, %7 : vector<8x128xf32>
    %51 = arith.addf %49, %50 : vector<8x128xf32>
    %52 = arith.truncf %51 : vector<8x128xf32> to vector<8x128xbf16>
    %53 = arith.mulf %44, %6 : vector<8x128xf32>
    %54 = arith.mulf %48, %7 : vector<8x128xf32>
    %55 = arith.addf %53, %54 : vector<8x128xf32>
    %56 = arith.truncf %55 : vector<8x128xf32> to vector<8x128xbf16>
    %57 = vector.extract_strided_slice %52 {offsets = [0, 0], sizes = [8, 32], strides = [1, 1]} : vector<8x128xbf16> to vector<8x32xbf16>
    %58 = vector.extract_strided_slice %56 {offsets = [0, 0], sizes = [8, 32], strides = [1, 1]} : vector<8x128xbf16> to vector<8x32xbf16>
    %cst_30 = arith.constant dense<0.000000e+00> : vector<8x8xf32>
    %59 = tpu.matmul %57, %58, %cst_30 {dimension_numbers = #tpu.dot_dimension_numbers<[1], [1], [0], [0], [0, 0, 1, 0], [], []>} : vector<8x32xbf16>, vector<8x32xbf16>, vector<8x8xf32> -> vector<8x8xf32>
    %60 = arith.addf %59, %8 : vector<8x8xf32>
    %cst_31 = arith.constant dense<0xFF800000> : vector<8xf32>
    %61 = vector.multi_reduction <maximumf>, %60, %cst_31 [1] : vector<8x8xf32> to vector<8xf32>
    %62 = vector.shape_cast %61 : vector<8xf32> to vector<8x1xf32>
    %63 = vector.broadcast %62 : vector<8x1xf32> to vector<8x8xf32>
    %64 = arith.subf %60, %63 : vector<8x8xf32>
    %65 = math.exp %64 : vector<8x8xf32>
    %cst_32 = arith.constant dense<0.000000e+00> : vector<8xf32>
    %66 = vector.multi_reduction <add>, %65, %cst_32 [1] : vector<8x8xf32> to vector<8xf32>
    %67 = vector.shape_cast %66 : vector<8xf32> to vector<8x1xf32>
    %68 = tpu.reciprocal %67 {approx = true} : vector<8x1xf32> -> vector<8x1xf32>
    %69 = vector.broadcast %68 : vector<8x1xf32> to vector<8x8xf32>
    %70 = arith.mulf %65, %69 : vector<8x8xf32>
    %71 = arith.truncf %70 : vector<8x8xf32> to vector<8x8xbf16>
    %72 = vector.extract_strided_slice %46 {offsets = [0, 0], sizes = [8, 32], strides = [1, 1]} : vector<8x128xbf16> to vector<8x32xbf16>
    %cst_33 = arith.constant dense<0.000000e+00> : vector<8x32xf32>
    %73 = tpu.matmul %71, %72, %cst_33 {dimension_numbers = #tpu.dot_dimension_numbers<[1], [0], [0], [1], [0, 0, 1, 1], [], []>} : vector<8x8xbf16>, vector<8x32xbf16>, vector<8x32xf32> -> vector<8x32xf32>
    %74 = vector.extract_strided_slice %52 {offsets = [0, 32], sizes = [8, 32], strides = [1, 1]} : vector<8x128xbf16> to vector<8x32xbf16>
    %75 = vector.extract_strided_slice %56 {offsets = [0, 32], sizes = [8, 32], strides = [1, 1]} : vector<8x128xbf16> to vector<8x32xbf16>
    %cst_34 = arith.constant dense<0.000000e+00> : vector<8x8xf32>
    %76 = tpu.matmul %74, %75, %cst_34 {dimension_numbers = #tpu.dot_dimension_numbers<[1], [1], [0], [0], [0, 0, 1, 0], [], []>} : vector<8x32xbf16>, vector<8x32xbf16>, vector<8x8xf32> -> vector<8x8xf32>
    %77 = arith.addf %76, %8 : vector<8x8xf32>
    %cst_35 = arith.constant dense<0xFF800000> : vector<8xf32>
    %78 = vector.multi_reduction <maximumf>, %77, %cst_35 [1] : vector<8x8xf32> to vector<8xf32>
    %79 = vector.shape_cast %78 : vector<8xf32> to vector<8x1xf32>
    %80 = vector.broadcast %79 : vector<8x1xf32> to vector<8x8xf32>
    %81 = arith.subf %77, %80 : vector<8x8xf32>
    %82 = math.exp %81 : vector<8x8xf32>
    %cst_36 = arith.constant dense<0.000000e+00> : vector<8xf32>
    %83 = vector.multi_reduction <add>, %82, %cst_36 [1] : vector<8x8xf32> to vector<8xf32>
    %84 = vector.shape_cast %83 : vector<8xf32> to vector<8x1xf32>
    %85 = tpu.reciprocal %84 {approx = true} : vector<8x1xf32> -> vector<8x1xf32>
    %86 = vector.broadcast %85 : vector<8x1xf32> to vector<8x8xf32>
    %87 = arith.mulf %82, %86 : vector<8x8xf32>
    %88 = arith.truncf %87 : vector<8x8xf32> to vector<8x8xbf16>
    %89 = vector.extract_strided_slice %46 {offsets = [0, 32], sizes = [8, 32], strides = [1, 1]} : vector<8x128xbf16> to vector<8x32xbf16>
    %cst_37 = arith.constant dense<0.000000e+00> : vector<8x32xf32>
    %90 = tpu.matmul %88, %89, %cst_37 {dimension_numbers = #tpu.dot_dimension_numbers<[1], [0], [0], [1], [0, 0, 1, 1], [], []>} : vector<8x8xbf16>, vector<8x32xbf16>, vector<8x32xf32> -> vector<8x32xf32>
    %91 = vector.extract_strided_slice %52 {offsets = [0, 64], sizes = [8, 32], strides = [1, 1]} : vector<8x128xbf16> to vector<8x32xbf16>
    %92 = vector.extract_strided_slice %56 {offsets = [0, 64], sizes = [8, 32], strides = [1, 1]} : vector<8x128xbf16> to vector<8x32xbf16>
    %cst_38 = arith.constant dense<0.000000e+00> : vector<8x8xf32>
    %93 = tpu.matmul %91, %92, %cst_38 {dimension_numbers = #tpu.dot_dimension_numbers<[1], [1], [0], [0], [0, 0, 1, 0], [], []>} : vector<8x32xbf16>, vector<8x32xbf16>, vector<8x8xf32> -> vector<8x8xf32>
    %94 = arith.addf %93, %8 : vector<8x8xf32>
    %cst_39 = arith.constant dense<0xFF800000> : vector<8xf32>
    %95 = vector.multi_reduction <maximumf>, %94, %cst_39 [1] : vector<8x8xf32> to vector<8xf32>
    %96 = vector.shape_cast %95 : vector<8xf32> to vector<8x1xf32>
    %97 = vector.broadcast %96 : vector<8x1xf32> to vector<8x8xf32>
    %98 = arith.subf %94, %97 : vector<8x8xf32>
    %99 = math.exp %98 : vector<8x8xf32>
    %cst_40 = arith.constant dense<0.000000e+00> : vector<8xf32>
    %100 = vector.multi_reduction <add>, %99, %cst_40 [1] : vector<8x8xf32> to vector<8xf32>
    %101 = vector.shape_cast %100 : vector<8xf32> to vector<8x1xf32>
    %102 = tpu.reciprocal %101 {approx = true} : vector<8x1xf32> -> vector<8x1xf32>
    %103 = vector.broadcast %102 : vector<8x1xf32> to vector<8x8xf32>
    %104 = arith.mulf %99, %103 : vector<8x8xf32>
    %105 = arith.truncf %104 : vector<8x8xf32> to vector<8x8xbf16>
    %106 = vector.extract_strided_slice %46 {offsets = [0, 64], sizes = [8, 32], strides = [1, 1]} : vector<8x128xbf16> to vector<8x32xbf16>
    %cst_41 = arith.constant dense<0.000000e+00> : vector<8x32xf32>
    %107 = tpu.matmul %105, %106, %cst_41 {dimension_numbers = #tpu.dot_dimension_numbers<[1], [0], [0], [1], [0, 0, 1, 1], [], []>} : vector<8x8xbf16>, vector<8x32xbf16>, vector<8x32xf32> -> vector<8x32xf32>
    %108 = vector.extract_strided_slice %52 {offsets = [0, 96], sizes = [8, 32], strides = [1, 1]} : vector<8x128xbf16> to vector<8x32xbf16>
    %109 = vector.extract_strided_slice %56 {offsets = [0, 96], sizes = [8, 32], strides = [1, 1]} : vector<8x128xbf16> to vector<8x32xbf16>
    %cst_42 = arith.constant dense<0.000000e+00> : vector<8x8xf32>
    %110 = tpu.matmul %108, %109, %cst_42 {dimension_numbers = #tpu.dot_dimension_numbers<[1], [1], [0], [0], [0, 0, 1, 0], [], []>} : vector<8x32xbf16>, vector<8x32xbf16>, vector<8x8xf32> -> vector<8x8xf32>
    %111 = arith.addf %110, %8 : vector<8x8xf32>
    %cst_43 = arith.constant dense<0xFF800000> : vector<8xf32>
    %112 = vector.multi_reduction <maximumf>, %111, %cst_43 [1] : vector<8x8xf32> to vector<8xf32>
    %113 = vector.shape_cast %112 : vector<8xf32> to vector<8x1xf32>
    %114 = vector.broadcast %113 : vector<8x1xf32> to vector<8x8xf32>
    %115 = arith.subf %111, %114 : vector<8x8xf32>
    %116 = math.exp %115 : vector<8x8xf32>
    %cst_44 = arith.constant dense<0.000000e+00> : vector<8xf32>
    %117 = vector.multi_reduction <add>, %116, %cst_44 [1] : vector<8x8xf32> to vector<8xf32>
    %118 = vector.shape_cast %117 : vector<8xf32> to vector<8x1xf32>
    %119 = tpu.reciprocal %118 {approx = true} : vector<8x1xf32> -> vector<8x1xf32>
    %120 = vector.broadcast %119 : vector<8x1xf32> to vector<8x8xf32>
    %121 = arith.mulf %116, %120 : vector<8x8xf32>
    %122 = arith.truncf %121 : vector<8x8xf32> to vector<8x8xbf16>
    %123 = vector.extract_strided_slice %46 {offsets = [0, 96], sizes = [8, 32], strides = [1, 1]} : vector<8x128xbf16> to vector<8x32xbf16>
    %cst_45 = arith.constant dense<0.000000e+00> : vector<8x32xf32>
    %124 = tpu.matmul %122, %123, %cst_45 {dimension_numbers = #tpu.dot_dimension_numbers<[1], [0], [0], [1], [0, 0, 1, 1], [], []>} : vector<8x8xbf16>, vector<8x32xbf16>, vector<8x32xf32> -> vector<8x32xf32>
    %125 = tpu.concatenate %73, %90, %107, %124 in 1 : vector<8x32xf32>, vector<8x32xf32>, vector<8x32xf32>, vector<8x32xf32> -> vector<8x128xf32>
    %126 = arith.truncf %125 : vector<8x128xf32> to vector<8x128xbf16>
    %c0_46 = arith.constant 0 : index
    %c0_47 = arith.constant 0 : index
    %c0_48 = arith.constant 0 : index
    %127 = vector.load %arg11[%c0_46, %c0_47, %c0_48] : memref<2x128x128xbf16, #tpu.memory_space<vmem>>, vector<1x128x128xbf16>
    %128 = vector.shape_cast %127 : vector<1x128x128xbf16> to vector<128x128xbf16>
    %cst_49 = arith.constant dense<0.000000e+00> : vector<8x128xf32>
    %129 = tpu.matmul %126, %128, %cst_49 {dimension_numbers = #tpu.dot_dimension_numbers<[1], [0], [0], [1], [0, 0, 1, 1], [], []>} : vector<8x128xbf16>, vector<128x128xbf16>, vector<8x128xf32> -> vector<8x128xf32>
    %130 = arith.addf %5, %129 : vector<8x128xf32>
    %c0_50 = arith.constant 0 : index
    %c0_51 = arith.constant 0 : index
    %c0_52 = arith.constant 0 : index
    %131 = vector.load %arg12[%c0_50, %c0_51, %c0_52] : memref<2x1x128xf32, #tpu.memory_space<vmem>>, vector<1x1x128xf32>
    %132 = vector.shape_cast %131 : vector<1x1x128xf32> to vector<1x128xf32>
    %133 = vector.broadcast %132 : vector<1x128xf32> to vector<8x128xf32>
    %134 = arith.addf %130, %133 : vector<8x128xf32>
    %c0_53 = arith.constant 0 : index
    %c0_54 = arith.constant 0 : index
    %c0_55 = arith.constant 0 : index
    %135 = vector.load %arg13[%c0_53, %c0_54, %c0_55] : memref<2x1x128xf32, #tpu.memory_space<vmem>>, vector<1x1x128xf32>
    %136 = vector.shape_cast %135 : vector<1x1x128xf32> to vector<1x128xf32>
    %c0_56 = arith.constant 0 : index
    %c0_57 = arith.constant 0 : index
    %c0_58 = arith.constant 0 : index
    %137 = vector.load %arg14[%c0_56, %c0_57, %c0_58] : memref<2x1x128xf32, #tpu.memory_space<vmem>>, vector<1x1x128xf32>
    %138 = vector.shape_cast %137 : vector<1x1x128xf32> to vector<1x128xf32>
    %cst_59 = arith.constant dense<0.000000e+00> : vector<8xf32>
    %139 = vector.multi_reduction <add>, %134, %cst_59 [1] : vector<8x128xf32> to vector<8xf32>
    %140 = vector.shape_cast %139 : vector<8xf32> to vector<8x1xf32>
    %cst_60 = arith.constant 1.280000e+02 : f32
    %141 = vector.broadcast %cst_60 : f32 to vector<8x1xf32>
    %142 = arith.divf %140, %141 : vector<8x1xf32>
    %143 = vector.broadcast %142 : vector<8x1xf32> to vector<8x128xf32>
    %144 = arith.subf %134, %143 : vector<8x128xf32>
    %145 = arith.mulf %144, %144 : vector<8x128xf32>
    %cst_61 = arith.constant dense<0.000000e+00> : vector<8xf32>
    %146 = vector.multi_reduction <add>, %145, %cst_61 [1] : vector<8x128xf32> to vector<8xf32>
    %147 = vector.shape_cast %146 : vector<8xf32> to vector<8x1xf32>
    %cst_62 = arith.constant 1.280000e+02 : f32
    %148 = vector.broadcast %cst_62 : f32 to vector<8x1xf32>
    %149 = arith.divf %147, %148 : vector<8x1xf32>
    %150 = vector.broadcast %142 : vector<8x1xf32> to vector<8x128xf32>
    %151 = arith.subf %134, %150 : vector<8x128xf32>
    %cst_63 = arith.constant 9.99999997E-7 : f32
    %152 = vector.broadcast %cst_63 : f32 to vector<8x1xf32>
    %153 = arith.addf %149, %152 : vector<8x1xf32>
    %154 = math.rsqrt %153 : vector<8x1xf32>
    %155 = vector.broadcast %154 : vector<8x1xf32> to vector<8x128xf32>
    %156 = arith.mulf %151, %155 : vector<8x128xf32>
    %157 = vector.broadcast %136 : vector<1x128xf32> to vector<8x128xf32>
    %158 = arith.mulf %156, %157 : vector<8x128xf32>
    %159 = vector.broadcast %138 : vector<1x128xf32> to vector<8x128xf32>
    %160 = arith.addf %158, %159 : vector<8x128xf32>
    %161 = arith.truncf %160 : vector<8x128xf32> to vector<8x128xbf16>
    %c0_64 = arith.constant 0 : index
    %c0_65 = arith.constant 0 : index
    %c0_66 = arith.constant 0 : index
    %162 = vector.load %arg15[%c0_64, %c0_65, %c0_66] : memref<2x128x256xbf16, #tpu.memory_space<vmem>>, vector<1x128x256xbf16>
    %163 = vector.shape_cast %162 : vector<1x128x256xbf16> to vector<128x256xbf16>
    %cst_67 = arith.constant dense<0.000000e+00> : vector<8x256xf32>
    %164 = tpu.matmul %161, %163, %cst_67 {dimension_numbers = #tpu.dot_dimension_numbers<[1], [0], [0], [1], [0, 0, 1, 1], [], []>} : vector<8x128xbf16>, vector<128x256xbf16>, vector<8x256xf32> -> vector<8x256xf32>
    %c0_68 = arith.constant 0 : index
    %c0_69 = arith.constant 0 : index
    %c0_70 = arith.constant 0 : index
    %165 = vector.load %arg16[%c0_68, %c0_69, %c0_70] : memref<2x1x256xf32, #tpu.memory_space<vmem>>, vector<1x1x256xf32>
    %166 = vector.shape_cast %165 : vector<1x1x256xf32> to vector<1x256xf32>
    %167 = vector.broadcast %166 : vector<1x256xf32> to vector<8x256xf32>
    %168 = arith.addf %164, %167 : vector<8x256xf32>
    %169 = vector.extract_strided_slice %168 {offsets = [0, 0], sizes = [8, 128], strides = [1, 1]} : vector<8x256xf32> to vector<8x128xf32>
    %170 = vector.extract_strided_slice %168 {offsets = [0, 128], sizes = [8, 128], strides = [1, 1]} : vector<8x256xf32> to vector<8x128xf32>
    %171 = arith.negf %169 : vector<8x128xf32>
    %172 = math.exp %171 : vector<8x128xf32>
    %cst_71 = arith.constant 1.000000e+00 : f32
    %173 = vector.broadcast %cst_71 : f32 to vector<8x128xf32>
    %174 = arith.addf %173, %172 : vector<8x128xf32>
    %175 = arith.divf %173, %174 : vector<8x128xf32>
    %176 = arith.mulf %169, %175 : vector<8x128xf32>
    %177 = arith.mulf %176, %170 : vector<8x128xf32>
    %c0_72 = arith.constant 0 : index
    %c0_73 = arith.constant 0 : index
    %c0_74 = arith.constant 0 : index
    %178 = vector.load %arg17[%c0_72, %c0_73, %c0_74] : memref<2x1x128xf32, #tpu.memory_space<vmem>>, vector<1x1x128xf32>
    %179 = vector.shape_cast %178 : vector<1x1x128xf32> to vector<1x128xf32>
    %c0_75 = arith.constant 0 : index
    %c0_76 = arith.constant 0 : index
    %c0_77 = arith.constant 0 : index
    %180 = vector.load %arg18[%c0_75, %c0_76, %c0_77] : memref<2x1x128xf32, #tpu.memory_space<vmem>>, vector<1x1x128xf32>
    %181 = vector.shape_cast %180 : vector<1x1x128xf32> to vector<1x128xf32>
    %cst_78 = arith.constant dense<0.000000e+00> : vector<8xf32>
    %182 = vector.multi_reduction <add>, %177, %cst_78 [1] : vector<8x128xf32> to vector<8xf32>
    %183 = vector.shape_cast %182 : vector<8xf32> to vector<8x1xf32>
    %cst_79 = arith.constant 1.280000e+02 : f32
    %184 = vector.broadcast %cst_79 : f32 to vector<8x1xf32>
    %185 = arith.divf %183, %184 : vector<8x1xf32>
    %186 = vector.broadcast %185 : vector<8x1xf32> to vector<8x128xf32>
    %187 = arith.subf %177, %186 : vector<8x128xf32>
    %188 = arith.mulf %187, %187 : vector<8x128xf32>
    %cst_80 = arith.constant dense<0.000000e+00> : vector<8xf32>
    %189 = vector.multi_reduction <add>, %188, %cst_80 [1] : vector<8x128xf32> to vector<8xf32>
    %190 = vector.shape_cast %189 : vector<8xf32> to vector<8x1xf32>
    %cst_81 = arith.constant 1.280000e+02 : f32
    %191 = vector.broadcast %cst_81 : f32 to vector<8x1xf32>
    %192 = arith.divf %190, %191 : vector<8x1xf32>
    %193 = vector.broadcast %185 : vector<8x1xf32> to vector<8x128xf32>
    %194 = arith.subf %177, %193 : vector<8x128xf32>
    %cst_82 = arith.constant 9.99999997E-7 : f32
    %195 = vector.broadcast %cst_82 : f32 to vector<8x1xf32>
    %196 = arith.addf %192, %195 : vector<8x1xf32>
    %197 = math.rsqrt %196 : vector<8x1xf32>
    %198 = vector.broadcast %197 : vector<8x1xf32> to vector<8x128xf32>
    %199 = arith.mulf %194, %198 : vector<8x128xf32>
    %200 = vector.broadcast %179 : vector<1x128xf32> to vector<8x128xf32>
    %201 = arith.mulf %199, %200 : vector<8x128xf32>
    %202 = vector.broadcast %181 : vector<1x128xf32> to vector<8x128xf32>
    %203 = arith.addf %201, %202 : vector<8x128xf32>
    %204 = arith.truncf %203 : vector<8x128xf32> to vector<8x128xbf16>
    %c0_83 = arith.constant 0 : index
    %c0_84 = arith.constant 0 : index
    %c0_85 = arith.constant 0 : index
    %205 = vector.load %arg19[%c0_83, %c0_84, %c0_85] : memref<2x128x128xbf16, #tpu.memory_space<vmem>>, vector<1x128x128xbf16>
    %206 = vector.shape_cast %205 : vector<1x128x128xbf16> to vector<128x128xbf16>
    %cst_86 = arith.constant dense<0.000000e+00> : vector<8x128xf32>
    %207 = tpu.matmul %204, %206, %cst_86 {dimension_numbers = #tpu.dot_dimension_numbers<[1], [0], [0], [1], [0, 0, 1, 1], [], []>} : vector<8x128xbf16>, vector<128x128xbf16>, vector<8x128xf32> -> vector<8x128xf32>
    %208 = arith.addf %134, %207 : vector<8x128xf32>
    %c0_87 = arith.constant 0 : index
    %c0_88 = arith.constant 0 : index
    %c0_89 = arith.constant 0 : index
    %209 = vector.load %arg20[%c0_87, %c0_88, %c0_89] : memref<2x1x128xf32, #tpu.memory_space<vmem>>, vector<1x1x128xf32>
    %210 = vector.shape_cast %209 : vector<1x1x128xf32> to vector<1x128xf32>
    %211 = vector.broadcast %210 : vector<1x128xf32> to vector<8x128xf32>
    %212 = arith.addf %208, %211 : vector<8x128xf32>
    %c1 = arith.constant 1 : index
    %c0_90 = arith.constant 0 : index
    %c0_91 = arith.constant 0 : index
    %213 = vector.load %arg7[%c1, %c0_90, %c0_91] : memref<2x1x128xf32, #tpu.memory_space<vmem>>, vector<1x1x128xf32>
    %214 = vector.shape_cast %213 : vector<1x1x128xf32> to vector<1x128xf32>
    %c1_92 = arith.constant 1 : index
    %c0_93 = arith.constant 0 : index
    %c0_94 = arith.constant 0 : index
    %215 = vector.load %arg8[%c1_92, %c0_93, %c0_94] : memref<2x1x128xf32, #tpu.memory_space<vmem>>, vector<1x1x128xf32>
    %216 = vector.shape_cast %215 : vector<1x1x128xf32> to vector<1x128xf32>
    %cst_95 = arith.constant dense<0.000000e+00> : vector<8xf32>
    %217 = vector.multi_reduction <add>, %212, %cst_95 [1] : vector<8x128xf32> to vector<8xf32>
    %218 = vector.shape_cast %217 : vector<8xf32> to vector<8x1xf32>
    %cst_96 = arith.constant 1.280000e+02 : f32
    %219 = vector.broadcast %cst_96 : f32 to vector<8x1xf32>
    %220 = arith.divf %218, %219 : vector<8x1xf32>
    %221 = vector.broadcast %220 : vector<8x1xf32> to vector<8x128xf32>
    %222 = arith.subf %212, %221 : vector<8x128xf32>
    %223 = arith.mulf %222, %222 : vector<8x128xf32>
    %cst_97 = arith.constant dense<0.000000e+00> : vector<8xf32>
    %224 = vector.multi_reduction <add>, %223, %cst_97 [1] : vector<8x128xf32> to vector<8xf32>
    %225 = vector.shape_cast %224 : vector<8xf32> to vector<8x1xf32>
    %cst_98 = arith.constant 1.280000e+02 : f32
    %226 = vector.broadcast %cst_98 : f32 to vector<8x1xf32>
    %227 = arith.divf %225, %226 : vector<8x1xf32>
    %228 = vector.broadcast %220 : vector<8x1xf32> to vector<8x128xf32>
    %229 = arith.subf %212, %228 : vector<8x128xf32>
    %cst_99 = arith.constant 9.99999997E-7 : f32
    %230 = vector.broadcast %cst_99 : f32 to vector<8x1xf32>
    %231 = arith.addf %227, %230 : vector<8x1xf32>
    %232 = math.rsqrt %231 : vector<8x1xf32>
    %233 = vector.broadcast %232 : vector<8x1xf32> to vector<8x128xf32>
    %234 = arith.mulf %229, %233 : vector<8x128xf32>
    %235 = vector.broadcast %214 : vector<1x128xf32> to vector<8x128xf32>
    %236 = arith.mulf %234, %235 : vector<8x128xf32>
    %237 = vector.broadcast %216 : vector<1x128xf32> to vector<8x128xf32>
    %238 = arith.addf %236, %237 : vector<8x128xf32>
    %239 = arith.truncf %238 : vector<8x128xf32> to vector<8x128xbf16>
    %c1_100 = arith.constant 1 : index
    %c0_101 = arith.constant 0 : index
    %c0_102 = arith.constant 0 : index
    %240 = vector.load %arg9[%c1_100, %c0_101, %c0_102] : memref<2x128x640xbf16, #tpu.memory_space<vmem>>, vector<1x128x640xbf16>
    %241 = vector.shape_cast %240 : vector<1x128x640xbf16> to vector<128x640xbf16>
    %cst_103 = arith.constant dense<0.000000e+00> : vector<8x640xf32>
    %242 = tpu.matmul %239, %241, %cst_103 {dimension_numbers = #tpu.dot_dimension_numbers<[1], [0], [0], [1], [0, 0, 1, 1], [], []>} : vector<8x128xbf16>, vector<128x640xbf16>, vector<8x640xf32> -> vector<8x640xf32>
    %c1_104 = arith.constant 1 : index
    %c0_105 = arith.constant 0 : index
    %c0_106 = arith.constant 0 : index
    %243 = vector.load %arg10[%c1_104, %c0_105, %c0_106] : memref<2x1x640xf32, #tpu.memory_space<vmem>>, vector<1x1x640xf32>
    %244 = vector.shape_cast %243 : vector<1x1x640xf32> to vector<1x640xf32>
    %245 = vector.broadcast %244 : vector<1x640xf32> to vector<8x640xf32>
    %246 = arith.addf %242, %245 : vector<8x640xf32>
    %247 = vector.extract_strided_slice %246 {offsets = [0, 0], sizes = [8, 128], strides = [1, 1]} : vector<8x640xf32> to vector<8x128xf32>
    %248 = vector.extract_strided_slice %246 {offsets = [0, 128], sizes = [8, 128], strides = [1, 1]} : vector<8x640xf32> to vector<8x128xf32>
    %249 = vector.extract_strided_slice %246 {offsets = [0, 256], sizes = [8, 128], strides = [1, 1]} : vector<8x640xf32> to vector<8x128xf32>
    %250 = arith.truncf %249 : vector<8x128xf32> to vector<8x128xbf16>
    %251 = vector.extract_strided_slice %246 {offsets = [0, 384], sizes = [8, 128], strides = [1, 1]} : vector<8x640xf32> to vector<8x128xf32>
    %252 = vector.extract_strided_slice %246 {offsets = [0, 512], sizes = [8, 128], strides = [1, 1]} : vector<8x640xf32> to vector<8x128xf32>
    %253 = arith.mulf %247, %6 : vector<8x128xf32>
    %254 = arith.mulf %251, %7 : vector<8x128xf32>
    %255 = arith.addf %253, %254 : vector<8x128xf32>
    %256 = arith.truncf %255 : vector<8x128xf32> to vector<8x128xbf16>
    %257 = arith.mulf %248, %6 : vector<8x128xf32>
    %258 = arith.mulf %252, %7 : vector<8x128xf32>
    %259 = arith.addf %257, %258 : vector<8x128xf32>
    %260 = arith.truncf %259 : vector<8x128xf32> to vector<8x128xbf16>
    %261 = vector.extract_strided_slice %256 {offsets = [0, 0], sizes = [8, 32], strides = [1, 1]} : vector<8x128xbf16> to vector<8x32xbf16>
    %262 = vector.extract_strided_slice %260 {offsets = [0, 0], sizes = [8, 32], strides = [1, 1]} : vector<8x128xbf16> to vector<8x32xbf16>
    %cst_107 = arith.constant dense<0.000000e+00> : vector<8x8xf32>
    %263 = tpu.matmul %261, %262, %cst_107 {dimension_numbers = #tpu.dot_dimension_numbers<[1], [1], [0], [0], [0, 0, 1, 0], [], []>} : vector<8x32xbf16>, vector<8x32xbf16>, vector<8x8xf32> -> vector<8x8xf32>
    %264 = arith.addf %263, %8 : vector<8x8xf32>
    %cst_108 = arith.constant dense<0xFF800000> : vector<8xf32>
    %265 = vector.multi_reduction <maximumf>, %264, %cst_108 [1] : vector<8x8xf32> to vector<8xf32>
    %266 = vector.shape_cast %265 : vector<8xf32> to vector<8x1xf32>
    %267 = vector.broadcast %266 : vector<8x1xf32> to vector<8x8xf32>
    %268 = arith.subf %264, %267 : vector<8x8xf32>
    %269 = math.exp %268 : vector<8x8xf32>
    %cst_109 = arith.constant dense<0.000000e+00> : vector<8xf32>
    %270 = vector.multi_reduction <add>, %269, %cst_109 [1] : vector<8x8xf32> to vector<8xf32>
    %271 = vector.shape_cast %270 : vector<8xf32> to vector<8x1xf32>
    %272 = tpu.reciprocal %271 {approx = true} : vector<8x1xf32> -> vector<8x1xf32>
    %273 = vector.broadcast %272 : vector<8x1xf32> to vector<8x8xf32>
    %274 = arith.mulf %269, %273 : vector<8x8xf32>
    %275 = arith.truncf %274 : vector<8x8xf32> to vector<8x8xbf16>
    %276 = vector.extract_strided_slice %250 {offsets = [0, 0], sizes = [8, 32], strides = [1, 1]} : vector<8x128xbf16> to vector<8x32xbf16>
    %cst_110 = arith.constant dense<0.000000e+00> : vector<8x32xf32>
    %277 = tpu.matmul %275, %276, %cst_110 {dimension_numbers = #tpu.dot_dimension_numbers<[1], [0], [0], [1], [0, 0, 1, 1], [], []>} : vector<8x8xbf16>, vector<8x32xbf16>, vector<8x32xf32> -> vector<8x32xf32>
    %278 = vector.extract_strided_slice %256 {offsets = [0, 32], sizes = [8, 32], strides = [1, 1]} : vector<8x128xbf16> to vector<8x32xbf16>
    %279 = vector.extract_strided_slice %260 {offsets = [0, 32], sizes = [8, 32], strides = [1, 1]} : vector<8x128xbf16> to vector<8x32xbf16>
    %cst_111 = arith.constant dense<0.000000e+00> : vector<8x8xf32>
    %280 = tpu.matmul %278, %279, %cst_111 {dimension_numbers = #tpu.dot_dimension_numbers<[1], [1], [0], [0], [0, 0, 1, 0], [], []>} : vector<8x32xbf16>, vector<8x32xbf16>, vector<8x8xf32> -> vector<8x8xf32>
    %281 = arith.addf %280, %8 : vector<8x8xf32>
    %cst_112 = arith.constant dense<0xFF800000> : vector<8xf32>
    %282 = vector.multi_reduction <maximumf>, %281, %cst_112 [1] : vector<8x8xf32> to vector<8xf32>
    %283 = vector.shape_cast %282 : vector<8xf32> to vector<8x1xf32>
    %284 = vector.broadcast %283 : vector<8x1xf32> to vector<8x8xf32>
    %285 = arith.subf %281, %284 : vector<8x8xf32>
    %286 = math.exp %285 : vector<8x8xf32>
    %cst_113 = arith.constant dense<0.000000e+00> : vector<8xf32>
    %287 = vector.multi_reduction <add>, %286, %cst_113 [1] : vector<8x8xf32> to vector<8xf32>
    %288 = vector.shape_cast %287 : vector<8xf32> to vector<8x1xf32>
    %289 = tpu.reciprocal %288 {approx = true} : vector<8x1xf32> -> vector<8x1xf32>
    %290 = vector.broadcast %289 : vector<8x1xf32> to vector<8x8xf32>
    %291 = arith.mulf %286, %290 : vector<8x8xf32>
    %292 = arith.truncf %291 : vector<8x8xf32> to vector<8x8xbf16>
    %293 = vector.extract_strided_slice %250 {offsets = [0, 32], sizes = [8, 32], strides = [1, 1]} : vector<8x128xbf16> to vector<8x32xbf16>
    %cst_114 = arith.constant dense<0.000000e+00> : vector<8x32xf32>
    %294 = tpu.matmul %292, %293, %cst_114 {dimension_numbers = #tpu.dot_dimension_numbers<[1], [0], [0], [1], [0, 0, 1, 1], [], []>} : vector<8x8xbf16>, vector<8x32xbf16>, vector<8x32xf32> -> vector<8x32xf32>
    %295 = vector.extract_strided_slice %256 {offsets = [0, 64], sizes = [8, 32], strides = [1, 1]} : vector<8x128xbf16> to vector<8x32xbf16>
    %296 = vector.extract_strided_slice %260 {offsets = [0, 64], sizes = [8, 32], strides = [1, 1]} : vector<8x128xbf16> to vector<8x32xbf16>
    %cst_115 = arith.constant dense<0.000000e+00> : vector<8x8xf32>
    %297 = tpu.matmul %295, %296, %cst_115 {dimension_numbers = #tpu.dot_dimension_numbers<[1], [1], [0], [0], [0, 0, 1, 0], [], []>} : vector<8x32xbf16>, vector<8x32xbf16>, vector<8x8xf32> -> vector<8x8xf32>
    %298 = arith.addf %297, %8 : vector<8x8xf32>
    %cst_116 = arith.constant dense<0xFF800000> : vector<8xf32>
    %299 = vector.multi_reduction <maximumf>, %298, %cst_116 [1] : vector<8x8xf32> to vector<8xf32>
    %300 = vector.shape_cast %299 : vector<8xf32> to vector<8x1xf32>
    %301 = vector.broadcast %300 : vector<8x1xf32> to vector<8x8xf32>
    %302 = arith.subf %298, %301 : vector<8x8xf32>
    %303 = math.exp %302 : vector<8x8xf32>
    %cst_117 = arith.constant dense<0.000000e+00> : vector<8xf32>
    %304 = vector.multi_reduction <add>, %303, %cst_117 [1] : vector<8x8xf32> to vector<8xf32>
    %305 = vector.shape_cast %304 : vector<8xf32> to vector<8x1xf32>
    %306 = tpu.reciprocal %305 {approx = true} : vector<8x1xf32> -> vector<8x1xf32>
    %307 = vector.broadcast %306 : vector<8x1xf32> to vector<8x8xf32>
    %308 = arith.mulf %303, %307 : vector<8x8xf32>
    %309 = arith.truncf %308 : vector<8x8xf32> to vector<8x8xbf16>
    %310 = vector.extract_strided_slice %250 {offsets = [0, 64], sizes = [8, 32], strides = [1, 1]} : vector<8x128xbf16> to vector<8x32xbf16>
    %cst_118 = arith.constant dense<0.000000e+00> : vector<8x32xf32>
    %311 = tpu.matmul %309, %310, %cst_118 {dimension_numbers = #tpu.dot_dimension_numbers<[1], [0], [0], [1], [0, 0, 1, 1], [], []>} : vector<8x8xbf16>, vector<8x32xbf16>, vector<8x32xf32> -> vector<8x32xf32>
    %312 = vector.extract_strided_slice %256 {offsets = [0, 96], sizes = [8, 32], strides = [1, 1]} : vector<8x128xbf16> to vector<8x32xbf16>
    %313 = vector.extract_strided_slice %260 {offsets = [0, 96], sizes = [8, 32], strides = [1, 1]} : vector<8x128xbf16> to vector<8x32xbf16>
    %cst_119 = arith.constant dense<0.000000e+00> : vector<8x8xf32>
    %314 = tpu.matmul %312, %313, %cst_119 {dimension_numbers = #tpu.dot_dimension_numbers<[1], [1], [0], [0], [0, 0, 1, 0], [], []>} : vector<8x32xbf16>, vector<8x32xbf16>, vector<8x8xf32> -> vector<8x8xf32>
    %315 = arith.addf %314, %8 : vector<8x8xf32>
    %cst_120 = arith.constant dense<0xFF800000> : vector<8xf32>
    %316 = vector.multi_reduction <maximumf>, %315, %cst_120 [1] : vector<8x8xf32> to vector<8xf32>
    %317 = vector.shape_cast %316 : vector<8xf32> to vector<8x1xf32>
    %318 = vector.broadcast %317 : vector<8x1xf32> to vector<8x8xf32>
    %319 = arith.subf %315, %318 : vector<8x8xf32>
    %320 = math.exp %319 : vector<8x8xf32>
    %cst_121 = arith.constant dense<0.000000e+00> : vector<8xf32>
    %321 = vector.multi_reduction <add>, %320, %cst_121 [1] : vector<8x8xf32> to vector<8xf32>
    %322 = vector.shape_cast %321 : vector<8xf32> to vector<8x1xf32>
    %323 = tpu.reciprocal %322 {approx = true} : vector<8x1xf32> -> vector<8x1xf32>
    %324 = vector.broadcast %323 : vector<8x1xf32> to vector<8x8xf32>
    %325 = arith.mulf %320, %324 : vector<8x8xf32>
    %326 = arith.truncf %325 : vector<8x8xf32> to vector<8x8xbf16>
    %327 = vector.extract_strided_slice %250 {offsets = [0, 96], sizes = [8, 32], strides = [1, 1]} : vector<8x128xbf16> to vector<8x32xbf16>
    %cst_122 = arith.constant dense<0.000000e+00> : vector<8x32xf32>
    %328 = tpu.matmul %326, %327, %cst_122 {dimension_numbers = #tpu.dot_dimension_numbers<[1], [0], [0], [1], [0, 0, 1, 1], [], []>} : vector<8x8xbf16>, vector<8x32xbf16>, vector<8x32xf32> -> vector<8x32xf32>
    %329 = tpu.concatenate %277, %294, %311, %328 in 1 : vector<8x32xf32>, vector<8x32xf32>, vector<8x32xf32>, vector<8x32xf32> -> vector<8x128xf32>
    %330 = arith.truncf %329 : vector<8x128xf32> to vector<8x128xbf16>
    %c1_123 = arith.constant 1 : index
    %c0_124 = arith.constant 0 : index
    %c0_125 = arith.constant 0 : index
    %331 = vector.load %arg11[%c1_123, %c0_124, %c0_125] : memref<2x128x128xbf16, #tpu.memory_space<vmem>>, vector<1x128x128xbf16>
    %332 = vector.shape_cast %331 : vector<1x128x128xbf16> to vector<128x128xbf16>
    %cst_126 = arith.constant dense<0.000000e+00> : vector<8x128xf32>
    %333 = tpu.matmul %330, %332, %cst_126 {dimension_numbers = #tpu.dot_dimension_numbers<[1], [0], [0], [1], [0, 0, 1, 1], [], []>} : vector<8x128xbf16>, vector<128x128xbf16>, vector<8x128xf32> -> vector<8x128xf32>
    %334 = arith.addf %212, %333 : vector<8x128xf32>
    %c1_127 = arith.constant 1 : index
    %c0_128 = arith.constant 0 : index
    %c0_129 = arith.constant 0 : index
    %335 = vector.load %arg12[%c1_127, %c0_128, %c0_129] : memref<2x1x128xf32, #tpu.memory_space<vmem>>, vector<1x1x128xf32>
    %336 = vector.shape_cast %335 : vector<1x1x128xf32> to vector<1x128xf32>
    %337 = vector.broadcast %336 : vector<1x128xf32> to vector<8x128xf32>
    %338 = arith.addf %334, %337 : vector<8x128xf32>
    %c1_130 = arith.constant 1 : index
    %c0_131 = arith.constant 0 : index
    %c0_132 = arith.constant 0 : index
    %339 = vector.load %arg13[%c1_130, %c0_131, %c0_132] : memref<2x1x128xf32, #tpu.memory_space<vmem>>, vector<1x1x128xf32>
    %340 = vector.shape_cast %339 : vector<1x1x128xf32> to vector<1x128xf32>
    %c1_133 = arith.constant 1 : index
    %c0_134 = arith.constant 0 : index
    %c0_135 = arith.constant 0 : index
    %341 = vector.load %arg14[%c1_133, %c0_134, %c0_135] : memref<2x1x128xf32, #tpu.memory_space<vmem>>, vector<1x1x128xf32>
    %342 = vector.shape_cast %341 : vector<1x1x128xf32> to vector<1x128xf32>
    %cst_136 = arith.constant dense<0.000000e+00> : vector<8xf32>
    %343 = vector.multi_reduction <add>, %338, %cst_136 [1] : vector<8x128xf32> to vector<8xf32>
    %344 = vector.shape_cast %343 : vector<8xf32> to vector<8x1xf32>
    %cst_137 = arith.constant 1.280000e+02 : f32
    %345 = vector.broadcast %cst_137 : f32 to vector<8x1xf32>
    %346 = arith.divf %344, %345 : vector<8x1xf32>
    %347 = vector.broadcast %346 : vector<8x1xf32> to vector<8x128xf32>
    %348 = arith.subf %338, %347 : vector<8x128xf32>
    %349 = arith.mulf %348, %348 : vector<8x128xf32>
    %cst_138 = arith.constant dense<0.000000e+00> : vector<8xf32>
    %350 = vector.multi_reduction <add>, %349, %cst_138 [1] : vector<8x128xf32> to vector<8xf32>
    %351 = vector.shape_cast %350 : vector<8xf32> to vector<8x1xf32>
    %cst_139 = arith.constant 1.280000e+02 : f32
    %352 = vector.broadcast %cst_139 : f32 to vector<8x1xf32>
    %353 = arith.divf %351, %352 : vector<8x1xf32>
    %354 = vector.broadcast %346 : vector<8x1xf32> to vector<8x128xf32>
    %355 = arith.subf %338, %354 : vector<8x128xf32>
    %cst_140 = arith.constant 9.99999997E-7 : f32
    %356 = vector.broadcast %cst_140 : f32 to vector<8x1xf32>
    %357 = arith.addf %353, %356 : vector<8x1xf32>
    %358 = math.rsqrt %357 : vector<8x1xf32>
    %359 = vector.broadcast %358 : vector<8x1xf32> to vector<8x128xf32>
    %360 = arith.mulf %355, %359 : vector<8x128xf32>
    %361 = vector.broadcast %340 : vector<1x128xf32> to vector<8x128xf32>
    %362 = arith.mulf %360, %361 : vector<8x128xf32>
    %363 = vector.broadcast %342 : vector<1x128xf32> to vector<8x128xf32>
    %364 = arith.addf %362, %363 : vector<8x128xf32>
    %365 = arith.truncf %364 : vector<8x128xf32> to vector<8x128xbf16>
    %c1_141 = arith.constant 1 : index
    %c0_142 = arith.constant 0 : index
    %c0_143 = arith.constant 0 : index
    %366 = vector.load %arg15[%c1_141, %c0_142, %c0_143] : memref<2x128x256xbf16, #tpu.memory_space<vmem>>, vector<1x128x256xbf16>
    %367 = vector.shape_cast %366 : vector<1x128x256xbf16> to vector<128x256xbf16>
    %cst_144 = arith.constant dense<0.000000e+00> : vector<8x256xf32>
    %368 = tpu.matmul %365, %367, %cst_144 {dimension_numbers = #tpu.dot_dimension_numbers<[1], [0], [0], [1], [0, 0, 1, 1], [], []>} : vector<8x128xbf16>, vector<128x256xbf16>, vector<8x256xf32> -> vector<8x256xf32>
    %c1_145 = arith.constant 1 : index
    %c0_146 = arith.constant 0 : index
    %c0_147 = arith.constant 0 : index
    %369 = vector.load %arg16[%c1_145, %c0_146, %c0_147] : memref<2x1x256xf32, #tpu.memory_space<vmem>>, vector<1x1x256xf32>
    %370 = vector.shape_cast %369 : vector<1x1x256xf32> to vector<1x256xf32>
    %371 = vector.broadcast %370 : vector<1x256xf32> to vector<8x256xf32>
    %372 = arith.addf %368, %371 : vector<8x256xf32>
    %373 = vector.extract_strided_slice %372 {offsets = [0, 0], sizes = [8, 128], strides = [1, 1]} : vector<8x256xf32> to vector<8x128xf32>
    %374 = vector.extract_strided_slice %372 {offsets = [0, 128], sizes = [8, 128], strides = [1, 1]} : vector<8x256xf32> to vector<8x128xf32>
    %375 = arith.negf %373 : vector<8x128xf32>
    %376 = math.exp %375 : vector<8x128xf32>
    %cst_148 = arith.constant 1.000000e+00 : f32
    %377 = vector.broadcast %cst_148 : f32 to vector<8x128xf32>
    %378 = arith.addf %377, %376 : vector<8x128xf32>
    %379 = arith.divf %377, %378 : vector<8x128xf32>
    %380 = arith.mulf %373, %379 : vector<8x128xf32>
    %381 = arith.mulf %380, %374 : vector<8x128xf32>
    %c1_149 = arith.constant 1 : index
    %c0_150 = arith.constant 0 : index
    %c0_151 = arith.constant 0 : index
    %382 = vector.load %arg17[%c1_149, %c0_150, %c0_151] : memref<2x1x128xf32, #tpu.memory_space<vmem>>, vector<1x1x128xf32>
    %383 = vector.shape_cast %382 : vector<1x1x128xf32> to vector<1x128xf32>
    %c1_152 = arith.constant 1 : index
    %c0_153 = arith.constant 0 : index
    %c0_154 = arith.constant 0 : index
    %384 = vector.load %arg18[%c1_152, %c0_153, %c0_154] : memref<2x1x128xf32, #tpu.memory_space<vmem>>, vector<1x1x128xf32>
    %385 = vector.shape_cast %384 : vector<1x1x128xf32> to vector<1x128xf32>
    %cst_155 = arith.constant dense<0.000000e+00> : vector<8xf32>
    %386 = vector.multi_reduction <add>, %381, %cst_155 [1] : vector<8x128xf32> to vector<8xf32>
    %387 = vector.shape_cast %386 : vector<8xf32> to vector<8x1xf32>
    %cst_156 = arith.constant 1.280000e+02 : f32
    %388 = vector.broadcast %cst_156 : f32 to vector<8x1xf32>
    %389 = arith.divf %387, %388 : vector<8x1xf32>
    %390 = vector.broadcast %389 : vector<8x1xf32> to vector<8x128xf32>
    %391 = arith.subf %381, %390 : vector<8x128xf32>
    %392 = arith.mulf %391, %391 : vector<8x128xf32>
    %cst_157 = arith.constant dense<0.000000e+00> : vector<8xf32>
    %393 = vector.multi_reduction <add>, %392, %cst_157 [1] : vector<8x128xf32> to vector<8xf32>
    %394 = vector.shape_cast %393 : vector<8xf32> to vector<8x1xf32>
    %cst_158 = arith.constant 1.280000e+02 : f32
    %395 = vector.broadcast %cst_158 : f32 to vector<8x1xf32>
    %396 = arith.divf %394, %395 : vector<8x1xf32>
    %397 = vector.broadcast %389 : vector<8x1xf32> to vector<8x128xf32>
    %398 = arith.subf %381, %397 : vector<8x128xf32>
    %cst_159 = arith.constant 9.99999997E-7 : f32
    %399 = vector.broadcast %cst_159 : f32 to vector<8x1xf32>
    %400 = arith.addf %396, %399 : vector<8x1xf32>
    %401 = math.rsqrt %400 : vector<8x1xf32>
    %402 = vector.broadcast %401 : vector<8x1xf32> to vector<8x128xf32>
    %403 = arith.mulf %398, %402 : vector<8x128xf32>
    %404 = vector.broadcast %383 : vector<1x128xf32> to vector<8x128xf32>
    %405 = arith.mulf %403, %404 : vector<8x128xf32>
    %406 = vector.broadcast %385 : vector<1x128xf32> to vector<8x128xf32>
    %407 = arith.addf %405, %406 : vector<8x128xf32>
    %408 = arith.truncf %407 : vector<8x128xf32> to vector<8x128xbf16>
    %c1_160 = arith.constant 1 : index
    %c0_161 = arith.constant 0 : index
    %c0_162 = arith.constant 0 : index
    %409 = vector.load %arg19[%c1_160, %c0_161, %c0_162] : memref<2x128x128xbf16, #tpu.memory_space<vmem>>, vector<1x128x128xbf16>
    %410 = vector.shape_cast %409 : vector<1x128x128xbf16> to vector<128x128xbf16>
    %cst_163 = arith.constant dense<0.000000e+00> : vector<8x128xf32>
    %411 = tpu.matmul %408, %410, %cst_163 {dimension_numbers = #tpu.dot_dimension_numbers<[1], [0], [0], [1], [0, 0, 1, 1], [], []>} : vector<8x128xbf16>, vector<128x128xbf16>, vector<8x128xf32> -> vector<8x128xf32>
    %412 = arith.addf %338, %411 : vector<8x128xf32>
    %c1_164 = arith.constant 1 : index
    %c0_165 = arith.constant 0 : index
    %c0_166 = arith.constant 0 : index
    %413 = vector.load %arg20[%c1_164, %c0_165, %c0_166] : memref<2x1x128xf32, #tpu.memory_space<vmem>>, vector<1x1x128xf32>
    %414 = vector.shape_cast %413 : vector<1x1x128xf32> to vector<1x128xf32>
    %415 = vector.broadcast %414 : vector<1x128xf32> to vector<8x128xf32>
    %416 = arith.addf %412, %415 : vector<8x128xf32>
    %417 = vector.extract_strided_slice %416 {offsets = [0, 0], sizes = [1, 128], strides = [1, 1]} : vector<8x128xf32> to vector<1x128xf32>
    %c0_167 = arith.constant 0 : index
    %c0_168 = arith.constant 0 : index
    %418 = vector.load %arg21[%c0_167, %c0_168] : memref<1x128xf32, #tpu.memory_space<vmem>>, vector<1x128xf32>
    %c0_169 = arith.constant 0 : index
    %c0_170 = arith.constant 0 : index
    %419 = vector.load %arg22[%c0_169, %c0_170] : memref<1x128xf32, #tpu.memory_space<vmem>>, vector<1x128xf32>
    %cst_171 = arith.constant dense<0.000000e+00> : vector<1xf32>
    %420 = vector.multi_reduction <add>, %417, %cst_171 [1] : vector<1x128xf32> to vector<1xf32>
    %421 = vector.shape_cast %420 : vector<1xf32> to vector<1x1xf32>
    %cst_172 = arith.constant 1.280000e+02 : f32
    %422 = vector.broadcast %cst_172 : f32 to vector<1x1xf32>
    %423 = arith.divf %421, %422 : vector<1x1xf32>
    %424 = vector.broadcast %423 : vector<1x1xf32> to vector<1x128xf32>
    %425 = arith.subf %417, %424 : vector<1x128xf32>
    %426 = arith.mulf %425, %425 : vector<1x128xf32>
    %cst_173 = arith.constant dense<0.000000e+00> : vector<1xf32>
    %427 = vector.multi_reduction <add>, %426, %cst_173 [1] : vector<1x128xf32> to vector<1xf32>
    %428 = vector.shape_cast %427 : vector<1xf32> to vector<1x1xf32>
    %cst_174 = arith.constant 1.280000e+02 : f32
    %429 = vector.broadcast %cst_174 : f32 to vector<1x1xf32>
    %430 = arith.divf %428, %429 : vector<1x1xf32>
    %431 = vector.broadcast %423 : vector<1x1xf32> to vector<1x128xf32>
    %432 = arith.subf %417, %431 : vector<1x128xf32>
    %cst_175 = arith.constant 9.99999997E-7 : f32
    %433 = vector.broadcast %cst_175 : f32 to vector<1x1xf32>
    %434 = arith.addf %430, %433 : vector<1x1xf32>
    %435 = math.rsqrt %434 : vector<1x1xf32>
    %436 = vector.broadcast %435 : vector<1x1xf32> to vector<1x128xf32>
    %437 = arith.mulf %432, %436 : vector<1x128xf32>
    %438 = arith.mulf %437, %418 : vector<1x128xf32>
    %439 = arith.addf %438, %419 : vector<1x128xf32>
    %c0_176 = arith.constant 0 : index
    %c0_177 = arith.constant 0 : index
    %440 = vector.load %arg23[%c0_176, %c0_177] : memref<1x128xf32, #tpu.memory_space<vmem>>, vector<1x128xf32>
    %441 = arith.mulf %439, %440 : vector<1x128xf32>
    %cst_178 = arith.constant dense<0.000000e+00> : vector<1xf32>
    %442 = vector.multi_reduction <add>, %441, %cst_178 [1] : vector<1x128xf32> to vector<1xf32>
    %443 = vector.shape_cast %442 : vector<1xf32> to vector<1x1xf32>
    %c0_179 = arith.constant 0 : index
    %c0_180 = arith.constant 0 : index
    %444 = vector.load %arg24[%c0_179, %c0_180] : memref<1x1xf32, #tpu.memory_space<vmem>>, vector<1x1xf32>
    %445 = arith.addf %443, %444 : vector<1x1xf32>
    %446 = arith.negf %445 : vector<1x1xf32>
    %447 = math.exp %446 : vector<1x1xf32>
    %cst_181 = arith.constant 1.000000e+00 : f32
    %448 = vector.broadcast %cst_181 : f32 to vector<1x1xf32>
    %449 = arith.addf %448, %447 : vector<1x1xf32>
    %450 = arith.divf %448, %449 : vector<1x1xf32>
    %cst_182 = arith.constant 1.800000e+01 : f32
    %451 = vector.broadcast %cst_182 : f32 to vector<1x1xf32>
    %452 = arith.mulf %450, %451 : vector<1x1xf32>
    %c0_183 = arith.constant 0 : index
    %c0_184 = arith.constant 0 : index
    %c0_185 = arith.constant 0 : index
    %453 = vector.load %arg25[%c0_183, %c0_184, %c0_185] : memref<1x1x1xf32, #tpu.memory_space<vmem>>, vector<1x1x1xf32>
    %454 = vector.shape_cast %453 : vector<1x1x1xf32> to vector<1x1xf32>
    %455 = vector.shape_cast %452 : vector<1x1xf32> to vector<1x1x1xf32>
    tpu.vector_store %arg25[%c0_183, %c0_184, %c0_185], %455 {strides = array<i32>} : memref<1x1x1xf32, #tpu.memory_space<vmem>>, vector<1x1x1xf32>,
    return
  }
  func.func @transform_0(%arg0: i32) -> (i32, i32, i32) {
    %c0_i32 = arith.constant 0 : i32
    %c0_i32_0 = arith.constant 0 : i32
    %c0_i32_1 = arith.constant 0 : i32
    return %arg0, %c0_i32, %c0_i32_0 : i32, i32, i32
  }
  func.func @transform_1(%arg0: i32) -> (i32, i32) {
    %c0_i32 = arith.constant 0 : i32
    %c0_i32_0 = arith.constant 0 : i32
    %c0_i32_1 = arith.constant 0 : i32
    return %c0_i32, %c0_i32_0 : i32, i32
  }
  func.func @transform_2(%arg0: i32) -> (i32, i32) {
    %c0_i32 = arith.constant 0 : i32
    %c0_i32_0 = arith.constant 0 : i32
    %c0_i32_1 = arith.constant 0 : i32
    return %c0_i32, %c0_i32_0 : i32, i32
  }
  func.func @transform_3(%arg0: i32) -> (i32, i32) {
    %c0_i32 = arith.constant 0 : i32
    %c0_i32_0 = arith.constant 0 : i32
    %c0_i32_1 = arith.constant 0 : i32
    return %c0_i32, %c0_i32_0 : i32, i32
  }
  func.func @transform_4(%arg0: i32) -> (i32, i32) {
    %c0_i32 = arith.constant 0 : i32
    %c0_i32_0 = arith.constant 0 : i32
    %c0_i32_1 = arith.constant 0 : i32
    return %c0_i32, %c0_i32_0 : i32, i32
  }
  func.func @transform_5(%arg0: i32) -> (i32, i32) {
    %c0_i32 = arith.constant 0 : i32
    %c0_i32_0 = arith.constant 0 : i32
    %c0_i32_1 = arith.constant 0 : i32
    return %c0_i32, %c0_i32_0 : i32, i32
  }
  func.func @transform_6(%arg0: i32) -> (i32, i32, i32) {
    %c0_i32 = arith.constant 0 : i32
    %c0_i32_0 = arith.constant 0 : i32
    %c0_i32_1 = arith.constant 0 : i32
    %c0_i32_2 = arith.constant 0 : i32
    return %c0_i32, %c0_i32_0, %c0_i32_1 : i32, i32, i32
  }
  func.func @transform_7(%arg0: i32) -> (i32, i32, i32) {
    %c0_i32 = arith.constant 0 : i32
    %c0_i32_0 = arith.constant 0 : i32
    %c0_i32_1 = arith.constant 0 : i32
    %c0_i32_2 = arith.constant 0 : i32
    return %c0_i32, %c0_i32_0, %c0_i32_1 : i32, i32, i32
  }
  func.func @transform_8(%arg0: i32) -> (i32, i32, i32) {
    %c0_i32 = arith.constant 0 : i32
    %c0_i32_0 = arith.constant 0 : i32
    %c0_i32_1 = arith.constant 0 : i32
    %c0_i32_2 = arith.constant 0 : i32
    return %c0_i32, %c0_i32_0, %c0_i32_1 : i32, i32, i32
  }
  func.func @transform_9(%arg0: i32) -> (i32, i32, i32) {
    %c0_i32 = arith.constant 0 : i32
    %c0_i32_0 = arith.constant 0 : i32
    %c0_i32_1 = arith.constant 0 : i32
    %c0_i32_2 = arith.constant 0 : i32
    return %c0_i32, %c0_i32_0, %c0_i32_1 : i32, i32, i32
  }
  func.func @transform_10(%arg0: i32) -> (i32, i32, i32) {
    %c0_i32 = arith.constant 0 : i32
    %c0_i32_0 = arith.constant 0 : i32
    %c0_i32_1 = arith.constant 0 : i32
    %c0_i32_2 = arith.constant 0 : i32
    return %c0_i32, %c0_i32_0, %c0_i32_1 : i32, i32, i32
  }
  func.func @transform_11(%arg0: i32) -> (i32, i32, i32) {
    %c0_i32 = arith.constant 0 : i32
    %c0_i32_0 = arith.constant 0 : i32
    %c0_i32_1 = arith.constant 0 : i32
    %c0_i32_2 = arith.constant 0 : i32
    return %c0_i32, %c0_i32_0, %c0_i32_1 : i32, i32, i32
  }
  func.func @transform_12(%arg0: i32) -> (i32, i32, i32) {
    %c0_i32 = arith.constant 0 : i32
    %c0_i32_0 = arith.constant 0 : i32
    %c0_i32_1 = arith.constant 0 : i32
    %c0_i32_2 = arith.constant 0 : i32
    return %c0_i32, %c0_i32_0, %c0_i32_1 : i32, i32, i32
  }
  func.func @transform_13(%arg0: i32) -> (i32, i32, i32) {
    %c0_i32 = arith.constant 0 : i32
    %c0_i32_0 = arith.constant 0 : i32
    %c0_i32_1 = arith.constant 0 : i32
    %c0_i32_2 = arith.constant 0 : i32
    return %c0_i32, %c0_i32_0, %c0_i32_1 : i32, i32, i32
  }
  func.func @transform_14(%arg0: i32) -> (i32, i32, i32) {
    %c0_i32 = arith.constant 0 : i32
    %c0_i32_0 = arith.constant 0 : i32
    %c0_i32_1 = arith.constant 0 : i32
    %c0_i32_2 = arith.constant 0 : i32
    return %c0_i32, %c0_i32_0, %c0_i32_1 : i32, i32, i32
  }
  func.func @transform_15(%arg0: i32) -> (i32, i32, i32) {
    %c0_i32 = arith.constant 0 : i32
    %c0_i32_0 = arith.constant 0 : i32
    %c0_i32_1 = arith.constant 0 : i32
    %c0_i32_2 = arith.constant 0 : i32
    return %c0_i32, %c0_i32_0, %c0_i32_1 : i32, i32, i32
  }
  func.func @transform_16(%arg0: i32) -> (i32, i32, i32) {
    %c0_i32 = arith.constant 0 : i32
    %c0_i32_0 = arith.constant 0 : i32
    %c0_i32_1 = arith.constant 0 : i32
    %c0_i32_2 = arith.constant 0 : i32
    return %c0_i32, %c0_i32_0, %c0_i32_1 : i32, i32, i32
  }
  func.func @transform_17(%arg0: i32) -> (i32, i32, i32) {
    %c0_i32 = arith.constant 0 : i32
    %c0_i32_0 = arith.constant 0 : i32
    %c0_i32_1 = arith.constant 0 : i32
    %c0_i32_2 = arith.constant 0 : i32
    return %c0_i32, %c0_i32_0, %c0_i32_1 : i32, i32, i32
  }
  func.func @transform_18(%arg0: i32) -> (i32, i32, i32) {
    %c0_i32 = arith.constant 0 : i32
    %c0_i32_0 = arith.constant 0 : i32
    %c0_i32_1 = arith.constant 0 : i32
    %c0_i32_2 = arith.constant 0 : i32
    return %c0_i32, %c0_i32_0, %c0_i32_1 : i32, i32, i32
  }
  func.func @transform_19(%arg0: i32) -> (i32, i32, i32) {
    %c0_i32 = arith.constant 0 : i32
    %c0_i32_0 = arith.constant 0 : i32
    %c0_i32_1 = arith.constant 0 : i32
    %c0_i32_2 = arith.constant 0 : i32
    return %c0_i32, %c0_i32_0, %c0_i32_1 : i32, i32, i32
  }
  func.func @transform_20(%arg0: i32) -> (i32, i32) {
    %c0_i32 = arith.constant 0 : i32
    %c0_i32_0 = arith.constant 0 : i32
    %c0_i32_1 = arith.constant 0 : i32
    return %c0_i32, %c0_i32_0 : i32, i32
  }
  func.func @transform_21(%arg0: i32) -> (i32, i32) {
    %c0_i32 = arith.constant 0 : i32
    %c0_i32_0 = arith.constant 0 : i32
    %c0_i32_1 = arith.constant 0 : i32
    return %c0_i32, %c0_i32_0 : i32, i32
  }
  func.func @transform_22(%arg0: i32) -> (i32, i32) {
    %c0_i32 = arith.constant 0 : i32
    %c0_i32_0 = arith.constant 0 : i32
    %c0_i32_1 = arith.constant 0 : i32
    return %c0_i32, %c0_i32_0 : i32, i32
  }
  func.func @transform_23(%arg0: i32) -> (i32, i32) {
    %c0_i32 = arith.constant 0 : i32
    %c0_i32_0 = arith.constant 0 : i32
    %c0_i32_1 = arith.constant 0 : i32
    return %c0_i32, %c0_i32_0 : i32, i32
  }
  func.func @transform_24(%arg0: i32) -> (i32, i32, i32) {
    %c0_i32 = arith.constant 0 : i32
    %c0_i32_0 = arith.constant 0 : i32
    %c0_i32_1 = arith.constant 0 : i32
    return %arg0, %c0_i32, %c0_i32_0 : i32, i32, i32
  }
}

</mosaic_0001>

<llo_original>
// kernel: eva2_forward.1
$region0: #{eva2_forward.1}
  #allocation0 [shape = 'u32[]', space=smem, size = 0x4, offset = 0x4, fixed_abs, tag = 'smem constant byte address 0x4 - core index']
  #allocation1 [shape = 'u32[72,128]{1,0:T(1,128)}', space=vmem, size = 0x9000, scoped, tag = 'internal scratch']
  #allocation2 [shape = 'f32[1,1]{1,0:T(1,128)S(1)}', space=vmem, size = 0x200, scoped, tag = 'scoped memory for eva2_forward.1']
  %s0 = inlined_call_operand.vmem [shape: bf16[2,8,768], index: 0, kind: input, shape index: {}]
  %s1 = inlined_call_operand.vmem [shape: f32[8,128], index: 1, kind: input, shape index: {}]
  %s2 = inlined_call_operand.vmem [shape: f32[8,128], index: 2, kind: input, shape index: {}]
  %s3 = inlined_call_operand.vmem [shape: f32[8,128], index: 3, kind: input, shape index: {}]
  %s4 = inlined_call_operand.vmem [shape: f32[8,8], index: 4, kind: input, shape index: {}]
  %s5 = inlined_call_operand.vmem [shape: bf16[768,128], index: 5, kind: input, shape index: {}]
  %s6 = inlined_call_operand.vmem [shape: f32[2,1,128], index: 6, kind: input, shape index: {}]
  %s7 = inlined_call_operand.vmem [shape: f32[2,1,128], index: 7, kind: input, shape index: {}]
  %s8 = inlined_call_operand.vmem [shape: bf16[2,128,640], index: 8, kind: input, shape index: {}]
  %s9 = inlined_call_operand.vmem [shape: f32[2,1,640], index: 9, kind: input, shape index: {}]
  %s10 = inlined_call_operand.vmem [shape: bf16[2,128,128], index: 10, kind: input, shape index: {}]
  %s11 = inlined_call_operand.vmem [shape: f32[2,1,128], index: 11, kind: input, shape index: {}]
  %s12 = inlined_call_operand.vmem [shape: f32[2,1,128], index: 12, kind: input, shape index: {}]
  %s13 = inlined_call_operand.vmem [shape: f32[2,1,128], index: 13, kind: input, shape index: {}]
  %s14 = inlined_call_operand.hbm [shape: bf16[2,128,256], index: 14, kind: input, shape index: {}]
  %s15 = inlined_call_operand.vmem [shape: f32[2,1,256], index: 15, kind: input, shape index: {}]
  %s16 = inlined_call_operand.vmem [shape: f32[2,1,128], index: 16, kind: input, shape index: {}]
  %s17 = inlined_call_operand.vmem [shape: f32[2,1,128], index: 17, kind: input, shape index: {}]
  %s18 = inlined_call_operand.hbm [shape: bf16[2,128,128], index: 18, kind: input, shape index: {}]
  %s19 = inlined_call_operand.vmem [shape: f32[2,1,128], index: 19, kind: input, shape index: {}]
  %s20 = inlined_call_operand.vmem [shape: f32[1,128], index: 20, kind: input, shape index: {}]
  %s21 = inlined_call_operand.vmem [shape: f32[1,128], index: 21, kind: input, shape index: {}]
  %s22 = inlined_call_operand.vmem [shape: f32[1,128], index: 22, kind: input, shape index: {}]
  %s23 = inlined_call_operand.<no memory space> [shape: f32[1,1], index: 23, kind: input, shape index: {}]
  %s24 = inlined_call_operand.vmem [shape: f32[2,1,1], index: 24, kind: output, shape index: {}]
  %s25 = sld [smem:[#allocation0]]
  $region137: #{eva2_forward.1} parent=0
    _
  %s27 = ssub.s32 1, %s25
  %s28 = scalar_select 0, %s27, %s25
  %v29 = vstv %s23
  %30 = vst [vmem:[#allocation2] sm:$0x1] %v29
  $region1: #{eva2_forward.1} parent=0
    #allocation3 [shape = 'u8[131072]{0}', space=vmem, size = 0x20000, scoped, tag = 'input window, operand 14, single buffered']
    #allocation4 [shape = 's32[2]{0}', space=sflag, size = 0x8, scoped, tag = 'scoped memory for eva2_forward.1']
    #allocation5 [shape = 'u8[65536]{0}', space=vmem, size = 0x10000, scoped, tag = 'input window, operand 18, single buffered']
    #allocation6 [shape = 's32[1]{0}', space=sflag, size = 0x4, scoped, tag = 'scoped memory for eva2_forward.1']
    %31 = vsyncpa [#allocation4], 0
    %32 = vsyncpa [#allocation6], 0
    loop: start=0, step=1, limit=4
    $region2: #{eva2_forward.1} parent=1 // loop_pre_header
      _
    $region3: #{eva2_forward.1} parent=1 // loop_header
      %s34 = sphi 0, %s38
      %p35 = scmp.ge.s32.totalorder %s34, 4
      %s44 = sphi 0, %s46
      %s47 = sphi 0, %s44
      %s48 = sphi 0, %s47
      %s64 = sphi 0, %s48
      %s68 = sphi 0, %s68
      %s70 = sphi 0, %s68
      %s71 = sphi 0, %s70
      %s85 = sphi 0, %s71
      %s89 = sphi 0, %s89
      %s91 = sphi 0, %s89
      %s92 = sphi 0, %s91
      %s106 = sphi 0, %s92
      %s110 = sphi 0, %s110
      %s112 = sphi 0, %s110
      %s113 = sphi 0, %s112
      %s127 = sphi 0, %s113
      %s131 = sphi 0, %s131
      %s133 = sphi 0, %s131
      %s134 = sphi 0, %s133
      %s148 = sphi 0, %s134
      %s152 = sphi 0, %s152
      %s154 = sphi 0, %s152
      %s155 = sphi 0, %s154
      %s169 = sphi 0, %s155
      %s173 = sphi 0, %s173
      %s175 = sphi 0, %s173
      %s176 = sphi 0, %s175
      %s190 = sphi 0, %s176
      %s194 = sphi 0, %s194
      %s196 = sphi 0, %s194
      %s197 = sphi 0, %s196
      %s211 = sphi 0, %s197
      %s215 = sphi 0, %s215
      %s217 = sphi 0, %s215
      %s218 = sphi 0, %s217
      %s232 = sphi 0, %s218
      %s236 = sphi 0, %s236
      %s238 = sphi 0, %s236
      %s239 = sphi 0, %s238
      %s253 = sphi 0, %s239
      %s257 = sphi 0, %s257
      %s259 = sphi 0, %s257
      %s260 = sphi 0, %s259
      %s274 = sphi 0, %s260
      %s278 = sphi 0, %s278
      %s280 = sphi 0, %s278
      %s281 = sphi 0, %s280
      %s295 = sphi 0, %s281
      %s299 = sphi 0, %s299
      %s301 = sphi 0, %s299
      %s302 = sphi 0, %s301
      %s316 = sphi 0, %s302
      %s320 = sphi 0, %s320
      %s322 = sphi 0, %s320
      %s323 = sphi 0, %s322
      %s337 = sphi 0, %s323
      %s341 = sphi 0, %s341
      %s343 = sphi 0, %s341
      %s344 = sphi 0, %s343
      %s358 = sphi 0, %s344
      %s362 = sphi 0, %s362
      %s364 = sphi 0, %s362
      %s365 = sphi 0, %s364
      %s379 = sphi 0, %s365
      %s383 = sphi 0, %s383
      %s385 = sphi 0, %s383
      %s386 = sphi 0, %s385
      %s400 = sphi 0, %s386
      %s404 = sphi 0, %s404
      %s406 = sphi 0, %s404
      %s407 = sphi 0, %s406
      %s421 = sphi 0, %s407
      %s425 = sphi 0, %s425
      %s427 = sphi 0, %s425
      %s428 = sphi 0, %s427
      %s442 = sphi 0, %s428
      %s446 = sphi 0, %s446
      %s448 = sphi 0, %s446
      %s449 = sphi 0, %s448
      %s463 = sphi 0, %s449
      %s467 = sphi 0, %s467
      %s469 = sphi 0, %s467
      %s470 = sphi 0, %s469
      %s484 = sphi 0, %s470
      %s488 = sphi 0, %s488
      %s490 = sphi 0, %s488
      %s491 = sphi 0, %s490
      %s505 = sphi 0, %s491
      %s509 = sphi 0, %s509
      %s511 = sphi 0, %s509
      %s512 = sphi 0, %s511
      %s526 = sphi 0, %s512
      %s530 = sphi 0, %s530
      %s532 = sphi 0, %s530
      %s533 = sphi 0, %s532
      %s547 = sphi 0, %s533
      %s553 = sphi 0, %s555
      %s556 = sphi 0, %s553
      %s557 = sphi 0, %s556
      %s573 = sphi 0, %s557
    $region4: #{eva2_forward.1} parent=1 // loop_header_branch
      %37 = sbr.rel (%p35) target = $region8
    $region5: #{eva2_forward.1} parent=1 // loop_body
      %s39 = ssub.s32 %s34, 1
      %s40 = ssub.s32 %s34, 2
      %s41 = sadd.s32 %s34, 1
      %s42 = ssub.s32 %s34, %s41
      %p43 = scmp.eq.s32.totalorder %s42, 0
      %s45 = sadd.s32 %s44, 1
      %s46 = scalar_select %p43, %s44, %s45
      %p49 = pneg %p43
      %p50 = scmp.eq.s32.totalorder %s34, 1
      %p51 = por %p49, %p50
      %p52 = scmp.ne.s32.totalorder %s44, %s47
      %p53 = scmp.eq.s32.totalorder %s34, 0
      %p54 = por %p52, %p53
      %p55 = scmp.ne.s32.totalorder %s44, %s47
      %p56 = scmp.eq.s32.totalorder %s39, 1
      %p57 = por %p55, %p56
      %p58 = scmp.ne.s32.totalorder %s47, %s48
      %p59 = scmp.eq.s32.totalorder %s39, 0
      %p60 = por %p58, %p59
      %p61 = scmp.ne.s32.totalorder %s47, %s48
      %p62 = scmp.eq.s32.totalorder %s40, 1
      %p63 = por %p61, %p62
      %p65 = scmp.ne.s32.totalorder %s48, %s64
      %p66 = scmp.eq.s32.totalorder %s40, 0
      %p67 = por %p65, %p66
      %s69 = sadd.s32 %s68, 1
      %p72 = scmp.eq.s32.totalorder %s34, 1
      %p73 = scmp.ne.s32.totalorder %s68, %s70
      %p74 = scmp.eq.s32.totalorder %s34, 0
      %p75 = por %p73, %p74
      %p76 = scmp.ne.s32.totalorder %s68, %s70
      %p77 = scmp.eq.s32.totalorder %s39, 1
      %p78 = por %p76, %p77
      %p79 = scmp.ne.s32.totalorder %s70, %s71
      %p80 = scmp.eq.s32.totalorder %s39, 0
      %p81 = por %p79, %p80
      %p82 = scmp.ne.s32.totalorder %s70, %s71
      %p83 = scmp.eq.s32.totalorder %s40, 1
      %p84 = por %p82, %p83
      %p86 = scmp.ne.s32.totalorder %s71, %s85
      %p87 = scmp.eq.s32.totalorder %s40, 0
      %p88 = por %p86, %p87
      %s90 = sadd.s32 %s89, 1
      %p93 = scmp.eq.s32.totalorder %s34, 1
      %p94 = scmp.ne.s32.totalorder %s89, %s91
      %p95 = scmp.eq.s32.totalorder %s34, 0
      %p96 = por %p94, %p95
      %p97 = scmp.ne.s32.totalorder %s89, %s91
      %p98 = scmp.eq.s32.totalorder %s39, 1
      %p99 = por %p97, %p98
      %p100 = scmp.ne.s32.totalorder %s91, %s92
      %p101 = scmp.eq.s32.totalorder %s39, 0
      %p102 = por %p100, %p101
      %p103 = scmp.ne.s32.totalorder %s91, %s92
      %p104 = scmp.eq.s32.totalorder %s40, 1
      %p105 = por %p103, %p104
      %p107 = scmp.ne.s32.totalorder %s92, %s106
      %p108 = scmp.eq.s32.totalorder %s40, 0
      %p109 = por %p107, %p108
      %s111 = sadd.s32 %s110, 1
      %p114 = scmp.eq.s32.totalorder %s34, 1
      %p115 = scmp.ne.s32.totalorder %s110, %s112
      %p116 = scmp.eq.s32.totalorder %s34, 0
      %p117 = por %p115, %p116
      %p118 = scmp.ne.s32.totalorder %s110, %s112
      %p119 = scmp.eq.s32.totalorder %s39, 1
      %p120 = por %p118, %p119
      %p121 = scmp.ne.s32.totalorder %s112, %s113
      %p122 = scmp.eq.s32.totalorder %s39, 0
      %p123 = por %p121, %p122
      %p124 = scmp.ne.s32.totalorder %s112, %s113
      %p125 = scmp.eq.s32.totalorder %s40, 1
      %p126 = por %p124, %p125
      %p128 = scmp.ne.s32.totalorder %s113, %s127
      %p129 = scmp.eq.s32.totalorder %s40, 0
      %p130 = por %p128, %p129
      %s132 = sadd.s32 %s131, 1
      %p135 = scmp.eq.s32.totalorder %s34, 1
      %p136 = scmp.ne.s32.totalorder %s131, %s133
      %p137 = scmp.eq.s32.totalorder %s34, 0
      %p138 = por %p136, %p137
      %p139 = scmp.ne.s32.totalorder %s131, %s133
      %p140 = scmp.eq.s32.totalorder %s39, 1
      %p141 = por %p139, %p140
      %p142 = scmp.ne.s32.totalorder %s133, %s134
      %p143 = scmp.eq.s32.totalorder %s39, 0
      %p144 = por %p142, %p143
      %p145 = scmp.ne.s32.totalorder %s133, %s134
      %p146 = scmp.eq.s32.totalorder %s40, 1
      %p147 = por %p145, %p146
      %p149 = scmp.ne.s32.totalorder %s134, %s148
      %p150 = scmp.eq.s32.totalorder %s40, 0
      %p151 = por %p149, %p150
      %s153 = sadd.s32 %s152, 1
      %p156 = scmp.eq.s32.totalorder %s34, 1
      %p157 = scmp.ne.s32.totalorder %s152, %s154
      %p158 = scmp.eq.s32.totalorder %s34, 0
      %p159 = por %p157, %p158
      %p160 = scmp.ne.s32.totalorder %s152, %s154
      %p161 = scmp.eq.s32.totalorder %s39, 1
      %p162 = por %p160, %p161
      %p163 = scmp.ne.s32.totalorder %s154, %s155
      %p164 = scmp.eq.s32.totalorder %s39, 0
      %p165 = por %p163, %p164
      %p166 = scmp.ne.s32.totalorder %s154, %s155
      %p167 = scmp.eq.s32.totalorder %s40, 1
      %p168 = por %p166, %p167
      %p170 = scmp.ne.s32.totalorder %s155, %s169
      %p171 = scmp.eq.s32.totalorder %s40, 0
      %p172 = por %p170, %p171
      %s174 = sadd.s32 %s173, 1
      %p177 = scmp.eq.s32.totalorder %s34, 1
      %p178 = scmp.ne.s32.totalorder %s173, %s175
      %p179 = scmp.eq.s32.totalorder %s34, 0
      %p180 = por %p178, %p179
      %p181 = scmp.ne.s32.totalorder %s173, %s175
      %p182 = scmp.eq.s32.totalorder %s39, 1
      %p183 = por %p181, %p182
      %p184 = scmp.ne.s32.totalorder %s175, %s176
      %p185 = scmp.eq.s32.totalorder %s39, 0
      %p186 = por %p184, %p185
      %p187 = scmp.ne.s32.totalorder %s175, %s176
      %p188 = scmp.eq.s32.totalorder %s40, 1
      %p189 = por %p187, %p188
      %p191 = scmp.ne.s32.totalorder %s176, %s190
      %p192 = scmp.eq.s32.totalorder %s40, 0
      %p193 = por %p191, %p192
      %s195 = sadd.s32 %s194, 1
      %p198 = scmp.eq.s32.totalorder %s34, 1
      %p199 = scmp.ne.s32.totalorder %s194, %s196
      %p200 = scmp.eq.s32.totalorder %s34, 0
      %p201 = por %p199, %p200
      %p202 = scmp.ne.s32.totalorder %s194, %s196
      %p203 = scmp.eq.s32.totalorder %s39, 1
      %p204 = por %p202, %p203
      %p205 = scmp.ne.s32.totalorder %s196, %s197
      %p206 = scmp.eq.s32.totalorder %s39, 0
      %p207 = por %p205, %p206
      %p208 = scmp.ne.s32.totalorder %s196, %s197
      %p209 = scmp.eq.s32.totalorder %s40, 1
      %p210 = por %p208, %p209
      %p212 = scmp.ne.s32.totalorder %s197, %s211
      %p213 = scmp.eq.s32.totalorder %s40, 0
      %p214 = por %p212, %p213
      %s216 = sadd.s32 %s215, 1
      %p219 = scmp.eq.s32.totalorder %s34, 1
      %p220 = scmp.ne.s32.totalorder %s215, %s217
      %p221 = scmp.eq.s32.totalorder %s34, 0
      %p222 = por %p220, %p221
      %p223 = scmp.ne.s32.totalorder %s215, %s217
      %p224 = scmp.eq.s32.totalorder %s39, 1
      %p225 = por %p223, %p224
      %p226 = scmp.ne.s32.totalorder %s217, %s218
      %p227 = scmp.eq.s32.totalorder %s39, 0
      %p228 = por %p226, %p227
      %p229 = scmp.ne.s32.totalorder %s217, %s218
      %p230 = scmp.eq.s32.totalorder %s40, 1
      %p231 = por %p229, %p230
      %p233 = scmp.ne.s32.totalorder %s218, %s232
      %p234 = scmp.eq.s32.totalorder %s40, 0
      %p235 = por %p233, %p234
      %s237 = sadd.s32 %s236, 1
      %p240 = scmp.eq.s32.totalorder %s34, 1
      %p241 = scmp.ne.s32.totalorder %s236, %s238
      %p242 = scmp.eq.s32.totalorder %s34, 0
      %p243 = por %p241, %p242
      %p244 = scmp.ne.s32.totalorder %s236, %s238
      %p245 = scmp.eq.s32.totalorder %s39, 1
      %p246 = por %p244, %p245
      %p247 = scmp.ne.s32.totalorder %s238, %s239
      %p248 = scmp.eq.s32.totalorder %s39, 0
      %p249 = por %p247, %p248
      %p250 = scmp.ne.s32.totalorder %s238, %s239
      %p251 = scmp.eq.s32.totalorder %s40, 1
      %p252 = por %p250, %p251
      %p254 = scmp.ne.s32.totalorder %s239, %s253
      %p255 = scmp.eq.s32.totalorder %s40, 0
      %p256 = por %p254, %p255
      %s258 = sadd.s32 %s257, 1
      %p261 = scmp.eq.s32.totalorder %s34, 1
      %p262 = scmp.ne.s32.totalorder %s257, %s259
      %p263 = scmp.eq.s32.totalorder %s34, 0
      %p264 = por %p262, %p263
      %p265 = scmp.ne.s32.totalorder %s257, %s259
      %p266 = scmp.eq.s32.totalorder %s39, 1
      %p267 = por %p265, %p266
      %p268 = scmp.ne.s32.totalorder %s259, %s260
      %p269 = scmp.eq.s32.totalorder %s39, 0
      %p270 = por %p268, %p269
      %p271 = scmp.ne.s32.totalorder %s259, %s260
      %p272 = scmp.eq.s32.totalorder %s40, 1
      %p273 = por %p271, %p272
      %p275 = scmp.ne.s32.totalorder %s260, %s274
      %p276 = scmp.eq.s32.totalorder %s40, 0
      %p277 = por %p275, %p276
      %s279 = sadd.s32 %s278, 1
      %p282 = scmp.eq.s32.totalorder %s34, 1
      %p283 = scmp.ne.s32.totalorder %s278, %s280
      %p284 = scmp.eq.s32.totalorder %s34, 0
      %p285 = por %p283, %p284
      %p286 = scmp.ne.s32.totalorder %s278, %s280
      %p287 = scmp.eq.s32.totalorder %s39, 1
      %p288 = por %p286, %p287
      %p289 = scmp.ne.s32.totalorder %s280, %s281
      %p290 = scmp.eq.s32.totalorder %s39, 0
      %p291 = por %p289, %p290
      %p292 = scmp.ne.s32.totalorder %s280, %s281
      %p293 = scmp.eq.s32.totalorder %s40, 1
      %p294 = por %p292, %p293
      %p296 = scmp.ne.s32.totalorder %s281, %s295
      %p297 = scmp.eq.s32.totalorder %s40, 0
      %p298 = por %p296, %p297
      %s300 = sadd.s32 %s299, 1
      %p303 = scmp.eq.s32.totalorder %s34, 1
      %p304 = scmp.ne.s32.totalorder %s299, %s301
      %p305 = scmp.eq.s32.totalorder %s34, 0
      %p306 = por %p304, %p305
      %p307 = scmp.ne.s32.totalorder %s299, %s301
      %p308 = scmp.eq.s32.totalorder %s39, 1
      %p309 = por %p307, %p308
      %p310 = scmp.ne.s32.totalorder %s301, %s302
      %p311 = scmp.eq.s32.totalorder %s39, 0
      %p312 = por %p310, %p311
      %p313 = scmp.ne.s32.totalorder %s301, %s302
      %p314 = scmp.eq.s32.totalorder %s40, 1
      %p315 = por %p313, %p314
      %p317 = scmp.ne.s32.totalorder %s302, %s316
      %p318 = scmp.eq.s32.totalorder %s40, 0
      %p319 = por %p317, %p318
      %s321 = sadd.s32 %s320, 1
      %p324 = scmp.eq.s32.totalorder %s34, 1
      %p325 = scmp.ne.s32.totalorder %s320, %s322
      %p326 = scmp.eq.s32.totalorder %s34, 0
      %p327 = por %p325, %p326
      %p328 = scmp.ne.s32.totalorder %s320, %s322
      %p329 = scmp.eq.s32.totalorder %s39, 1
      %p330 = por %p328, %p329
      %p331 = scmp.ne.s32.totalorder %s322, %s323
      %p332 = scmp.eq.s32.totalorder %s39, 0
      %p333 = por %p331, %p332
      %p334 = scmp.ne.s32.totalorder %s322, %s323
      %p335 = scmp.eq.s32.totalorder %s40, 1
      %p336 = por %p334, %p335
      %p338 = scmp.ne.s32.totalorder %s323, %s337
      %p339 = scmp.eq.s32.totalorder %s40, 0
      %p340 = por %p338, %p339
      %s342 = sadd.s32 %s341, 1
      %p345 = scmp.eq.s32.totalorder %s34, 1
      %p346 = scmp.ne.s32.totalorder %s341, %s343
      %p347 = scmp.eq.s32.totalorder %s34, 0
      %p348 = por %p346, %p347
      %p349 = scmp.ne.s32.totalorder %s341, %s343
      %p350 = scmp.eq.s32.totalorder %s39, 1
      %p351 = por %p349, %p350
      %p352 = scmp.ne.s32.totalorder %s343, %s344
      %p353 = scmp.eq.s32.totalorder %s39, 0
      %p354 = por %p352, %p353
      %p355 = scmp.ne.s32.totalorder %s343, %s344
      %p356 = scmp.eq.s32.totalorder %s40, 1
      %p357 = por %p355, %p356
      %p359 = scmp.ne.s32.totalorder %s344, %s358
      %p360 = scmp.eq.s32.totalorder %s40, 0
      %p361 = por %p359, %p360
      %s363 = sadd.s32 %s362, 1
      %p366 = scmp.eq.s32.totalorder %s34, 1
      %p367 = scmp.ne.s32.totalorder %s362, %s364
      %p368 = scmp.eq.s32.totalorder %s34, 0
      %p369 = por %p367, %p368
      %p370 = scmp.ne.s32.totalorder %s362, %s364
      %p371 = scmp.eq.s32.totalorder %s39, 1
      %p372 = por %p370, %p371
      %p373 = scmp.ne.s32.totalorder %s364, %s365
      %p374 = scmp.eq.s32.totalorder %s39, 0
      %p375 = por %p373, %p374
      %p376 = scmp.ne.s32.totalorder %s364, %s365
      %p377 = scmp.eq.s32.totalorder %s40, 1
      %p378 = por %p376, %p377
      %p380 = scmp.ne.s32.totalorder %s365, %s379
      %p381 = scmp.eq.s32.totalorder %s40, 0
      %p382 = por %p380, %p381
      %s384 = sadd.s32 %s383, 1
      %p387 = scmp.eq.s32.totalorder %s34, 1
      %p388 = scmp.ne.s32.totalorder %s383, %s385
      %p389 = scmp.eq.s32.totalorder %s34, 0
      %p390 = por %p388, %p389
      %p391 = scmp.ne.s32.totalorder %s383, %s385
      %p392 = scmp.eq.s32.totalorder %s39, 1
      %p393 = por %p391, %p392
      %p394 = scmp.ne.s32.totalorder %s385, %s386
      %p395 = scmp.eq.s32.totalorder %s39, 0
      %p396 = por %p394, %p395
      %p397 = scmp.ne.s32.totalorder %s385, %s386
      %p398 = scmp.eq.s32.totalorder %s40, 1
      %p399 = por %p397, %p398
      %p401 = scmp.ne.s32.totalorder %s386, %s400
      %p402 = scmp.eq.s32.totalorder %s40, 0
      %p403 = por %p401, %p402
      %s405 = sadd.s32 %s404, 1
      %p408 = scmp.eq.s32.totalorder %s34, 1
      %p409 = scmp.ne.s32.totalorder %s404, %s406
      %p410 = scmp.eq.s32.totalorder %s34, 0
      %p411 = por %p409, %p410
      %p412 = scmp.ne.s32.totalorder %s404, %s406
      %p413 = scmp.eq.s32.totalorder %s39, 1
      %p414 = por %p412, %p413
      %p415 = scmp.ne.s32.totalorder %s406, %s407
      %p416 = scmp.eq.s32.totalorder %s39, 0
      %p417 = por %p415, %p416
      %p418 = scmp.ne.s32.totalorder %s406, %s407
      %p419 = scmp.eq.s32.totalorder %s40, 1
      %p420 = por %p418, %p419
      %p422 = scmp.ne.s32.totalorder %s407, %s421
      %p423 = scmp.eq.s32.totalorder %s40, 0
      %p424 = por %p422, %p423
      %s426 = sadd.s32 %s425, 1
      %p429 = scmp.eq.s32.totalorder %s34, 1
      %p430 = scmp.ne.s32.totalorder %s425, %s427
      %p431 = scmp.eq.s32.totalorder %s34, 0
      %p432 = por %p430, %p431
      %p433 = scmp.ne.s32.totalorder %s425, %s427
      %p434 = scmp.eq.s32.totalorder %s39, 1
      %p435 = por %p433, %p434
      %p436 = scmp.ne.s32.totalorder %s427, %s428
      %p437 = scmp.eq.s32.totalorder %s39, 0
      %p438 = por %p436, %p437
      %p439 = scmp.ne.s32.totalorder %s427, %s428
      %p440 = scmp.eq.s32.totalorder %s40, 1
      %p441 = por %p439, %p440
      %p443 = scmp.ne.s32.totalorder %s428, %s442
      %p444 = scmp.eq.s32.totalorder %s40, 0
      %p445 = por %p443, %p444
      %s447 = sadd.s32 %s446, 1
      %p450 = scmp.eq.s32.totalorder %s34, 1
      %p451 = scmp.ne.s32.totalorder %s446, %s448
      %p452 = scmp.eq.s32.totalorder %s34, 0
      %p453 = por %p451, %p452
      %p454 = scmp.ne.s32.totalorder %s446, %s448
      %p455 = scmp.eq.s32.totalorder %s39, 1
      %p456 = por %p454, %p455
      %p457 = scmp.ne.s32.totalorder %s448, %s449
      %p458 = scmp.eq.s32.totalorder %s39, 0
      %p459 = por %p457, %p458
      %p460 = scmp.ne.s32.totalorder %s448, %s449
      %p461 = scmp.eq.s32.totalorder %s40, 1
      %p462 = por %p460, %p461
      %p464 = scmp.ne.s32.totalorder %s449, %s463
      %p465 = scmp.eq.s32.totalorder %s40, 0
      %p466 = por %p464, %p465
      %s468 = sadd.s32 %s467, 1
      %p471 = scmp.eq.s32.totalorder %s34, 1
      %p472 = scmp.ne.s32.totalorder %s467, %s469
      %p473 = scmp.eq.s32.totalorder %s34, 0
      %p474 = por %p472, %p473
      %p475 = scmp.ne.s32.totalorder %s467, %s469
      %p476 = scmp.eq.s32.totalorder %s39, 1
      %p477 = por %p475, %p476
      %p478 = scmp.ne.s32.totalorder %s469, %s470
      %p479 = scmp.eq.s32.totalorder %s39, 0
      %p480 = por %p478, %p479
      %p481 = scmp.ne.s32.totalorder %s469, %s470
      %p482 = scmp.eq.s32.totalorder %s40, 1
      %p483 = por %p481, %p482
      %p485 = scmp.ne.s32.totalorder %s470, %s484
      %p486 = scmp.eq.s32.totalorder %s40, 0
      %p487 = por %p485, %p486
      %s489 = sadd.s32 %s488, 1
      %p492 = scmp.eq.s32.totalorder %s34, 1
      %p493 = scmp.ne.s32.totalorder %s488, %s490
      %p494 = scmp.eq.s32.totalorder %s34, 0
      %p495 = por %p493, %p494
      %p496 = scmp.ne.s32.totalorder %s488, %s490
      %p497 = scmp.eq.s32.totalorder %s39, 1
      %p498 = por %p496, %p497
      %p499 = scmp.ne.s32.totalorder %s490, %s491
      %p500 = scmp.eq.s32.totalorder %s39, 0
      %p501 = por %p499, %p500
      %p502 = scmp.ne.s32.totalorder %s490, %s491
      %p503 = scmp.eq.s32.totalorder %s40, 1
      %p504 = por %p502, %p503
      %p506 = scmp.ne.s32.totalorder %s491, %s505
      %p507 = scmp.eq.s32.totalorder %s40, 0
      %p508 = por %p506, %p507
      %s510 = sadd.s32 %s509, 1
      %p513 = scmp.eq.s32.totalorder %s34, 1
      %p514 = scmp.ne.s32.totalorder %s509, %s511
      %p515 = scmp.eq.s32.totalorder %s34, 0
      %p516 = por %p514, %p515
      %p517 = scmp.ne.s32.totalorder %s509, %s511
      %p518 = scmp.eq.s32.totalorder %s39, 1
      %p519 = por %p517, %p518
      %p520 = scmp.ne.s32.totalorder %s511, %s512
      %p521 = scmp.eq.s32.totalorder %s39, 0
      %p522 = por %p520, %p521
      %p523 = scmp.ne.s32.totalorder %s511, %s512
      %p524 = scmp.eq.s32.totalorder %s40, 1
      %p525 = por %p523, %p524
      %p527 = scmp.ne.s32.totalorder %s512, %s526
      %p528 = scmp.eq.s32.totalorder %s40, 0
      %p529 = por %p527, %p528
      %s531 = sadd.s32 %s530, 1
      %p534 = scmp.eq.s32.totalorder %s34, 1
      %p535 = scmp.ne.s32.totalorder %s530, %s532
      %p536 = scmp.eq.s32.totalorder %s34, 0
      %p537 = por %p535, %p536
      %p538 = scmp.ne.s32.totalorder %s530, %s532
      %p539 = scmp.eq.s32.totalorder %s39, 1
      %p540 = por %p538, %p539
      %p541 = scmp.ne.s32.totalorder %s532, %s533
      %p542 = scmp.eq.s32.totalorder %s39, 0
      %p543 = por %p541, %p542
      %p544 = scmp.ne.s32.totalorder %s532, %s533
      %p545 = scmp.eq.s32.totalorder %s40, 1
      %p546 = por %p544, %p545
      %p548 = scmp.ne.s32.totalorder %s533, %s547
      %p549 = scmp.eq.s32.totalorder %s40, 0
      %p550 = por %p548, %p549
      %s551 = ssub.s32 %s34, %s41
      %p552 = scmp.eq.s32.totalorder %s551, 0
      %s554 = sadd.s32 %s553, 1
      %s555 = scalar_select %p552, %s553, %s554
      %p558 = pneg %p552
      %p559 = scmp.eq.s32.totalorder %s34, 1
      %p560 = por %p558, %p559
      %p561 = scmp.ne.s32.totalorder %s553, %s556
      %p562 = scmp.eq.s32.totalorder %s34, 0
      %p563 = por %p561, %p562
      %p564 = scmp.ne.s32.totalorder %s553, %s556
      %p565 = scmp.eq.s32.totalorder %s39, 1
      %p566 = por %p564, %p565
      %p567 = scmp.ne.s32.totalorder %s556, %s557
      %p568 = scmp.eq.s32.totalorder %s39, 0
      %p569 = por %p567, %p568
      %p570 = scmp.ne.s32.totalorder %s556, %s557
      %p571 = scmp.eq.s32.totalorder %s40, 1
      %p572 = por %p570, %p571
      %p574 = scmp.ne.s32.totalorder %s557, %s573
      %p575 = scmp.eq.s32.totalorder %s40, 0
      %p576 = por %p574, %p575
      %p577 = scmp.le.s32.totalorder 1, %s34
      %p578 = scmp.lt.s32.totalorder %s34, 3
      %p579 = pnand %p577, %p578
      %p580 = pneg %p579
      // Predicated region
      $region9: #{eva2_forward.1} parent=5 // pred_check
        _
      $region10: #{eva2_forward.1} parent=5 // pred_check_branch
        %582 = sbr.rel (%p579) target = $region12
      $region11: #{eva2_forward.1} parent=5 // pred_region
        %s583 = ssub.s32 %s34, 1
        // Predicated region
        $region13: #{eva2_forward.1} parent=11 // pred_check
          %p584 = pneg %p81
        $region14: #{eva2_forward.1} parent=11 // pred_check_branch
          %586 = sbr.rel (%p584) target = $region16
        $region15: #{eva2_forward.1} parent=11 // pred_region
          _
        $region16: #{eva2_forward.1} parent=11 // pred_fallthru
          _
        // Predicated region
        $region17: #{eva2_forward.1} parent=11 // pred_check
          %p587 = pneg %p102
        $region18: #{eva2_forward.1} parent=11 // pred_check_branch
          %589 = sbr.rel (%p587) target = $region20
        $region19: #{eva2_forward.1} parent=11 // pred_region
          _
        $region20: #{eva2_forward.1} parent=11 // pred_fallthru
          _
        // Predicated region
        $region21: #{eva2_forward.1} parent=11 // pred_check
          %p590 = pneg %p123
        $region22: #{eva2_forward.1} parent=11 // pred_check_branch
          %592 = sbr.rel (%p590) target = $region24
        $region23: #{eva2_forward.1} parent=11 // pred_region
          _
        $region24: #{eva2_forward.1} parent=11 // pred_fallthru
          _
        // Predicated region
        $region25: #{eva2_forward.1} parent=11 // pred_check
          %p593 = pneg %p144
        $region26: #{eva2_forward.1} parent=11 // pred_check_branch
          %595 = sbr.rel (%p593) target = $region28
        $region27: #{eva2_forward.1} parent=11 // pred_region
          _
        $region28: #{eva2_forward.1} parent=11 // pred_fallthru
          _
        // Predicated region
        $region29: #{eva2_forward.1} parent=11 // pred_check
          %p596 = pneg %p165
        $region30: #{eva2_forward.1} parent=11 // pred_check_branch
          %598 = sbr.rel (%p596) target = $region32
        $region31: #{eva2_forward.1} parent=11 // pred_region
          _
        $region32: #{eva2_forward.1} parent=11 // pred_fallthru
          _
        // Predicated region
        $region33: #{eva2_forward.1} parent=11 // pred_check
          %p599 = pneg %p186
        $region34: #{eva2_forward.1} parent=11 // pred_check_branch
          %601 = sbr.rel (%p599) target = $region36
        $region35: #{eva2_forward.1} parent=11 // pred_region
          _
        $region36: #{eva2_forward.1} parent=11 // pred_fallthru
          _
        // Predicated region
        $region37: #{eva2_forward.1} parent=11 // pred_check
          %p602 = pneg %p207
        $region38: #{eva2_forward.1} parent=11 // pred_check_branch
          %604 = sbr.rel (%p602) target = $region40
        $region39: #{eva2_forward.1} parent=11 // pred_region
          _
        $region40: #{eva2_forward.1} parent=11 // pred_fallthru
          _
        // Predicated region
        $region41: #{eva2_forward.1} parent=11 // pred_check
          %p605 = pneg %p228
        $region42: #{eva2_forward.1} parent=11 // pred_check_branch
          %607 = sbr.rel (%p605) target = $region44
        $region43: #{eva2_forward.1} parent=11 // pred_region
          _
        $region44: #{eva2_forward.1} parent=11 // pred_fallthru
          _
        // Predicated region
        $region45: #{eva2_forward.1} parent=11 // pred_check
          %p608 = pneg %p249
        $region46: #{eva2_forward.1} parent=11 // pred_check_branch
          %610 = sbr.rel (%p608) target = $region48
        $region47: #{eva2_forward.1} parent=11 // pred_region
          _
        $region48: #{eva2_forward.1} parent=11 // pred_fallthru
          _
        // Predicated region
        $region49: #{eva2_forward.1} parent=11 // pred_check
          %p611 = pneg %p270
        $region50: #{eva2_forward.1} parent=11 // pred_check_branch
          %613 = sbr.rel (%p611) target = $region52
        $region51: #{eva2_forward.1} parent=11 // pred_region
          _
        $region52: #{eva2_forward.1} parent=11 // pred_fallthru
          _
        // Predicated region
        $region53: #{eva2_forward.1} parent=11 // pred_check
          %p614 = pneg %p291
        $region54: #{eva2_forward.1} parent=11 // pred_check_branch
          %616 = sbr.rel (%p614) target = $region56
        $region55: #{eva2_forward.1} parent=11 // pred_region
          _
        $region56: #{eva2_forward.1} parent=11 // pred_fallthru
          _
        // Predicated region
        $region57: #{eva2_forward.1} parent=11 // pred_check
          %p617 = pneg %p312
        $region58: #{eva2_forward.1} parent=11 // pred_check_branch
          %619 = sbr.rel (%p617) target = $region60
        $region59: #{eva2_forward.1} parent=11 // pred_region
          _
        $region60: #{eva2_forward.1} parent=11 // pred_fallthru
          _
        // Predicated region
        $region61: #{eva2_forward.1} parent=11 // pred_check
          %p620 = pneg %p333
        $region62: #{eva2_forward.1} parent=11 // pred_check_branch
          %622 = sbr.rel (%p620) target = $region64
        $region63: #{eva2_forward.1} parent=11 // pred_region
          _
        $region64: #{eva2_forward.1} parent=11 // pred_fallthru
          _
        // Predicated region
        $region65: #{eva2_forward.1} parent=11 // pred_check
          %p623 = pneg %p354
        $region66: #{eva2_forward.1} parent=11 // pred_check_branch
          %625 = sbr.rel (%p623) target = $region68
        $region67: #{eva2_forward.1} parent=11 // pred_region
          %627 = vsyncadd [#allocation4], 0
          %s628 = sshll.u32 %s14, 4
          %s629 = int_to_ptr.hbm [resolvable:$true] %s628
          %s630 = sshll.u32 [#allocation3], 4
          %s631 = int_to_ptr.vmem [resolvable:$true] %s630
          %636 = dma.hbm_to_vmem [thread:$0]  %s629, 4096, %s631, [#allocation4], 128, 128, 8
        $region68: #{eva2_forward.1} parent=11 // pred_fallthru
          _
        // Predicated region
        $region69: #{eva2_forward.1} parent=11 // pred_check
          %p637 = pneg %p375
        $region70: #{eva2_forward.1} parent=11 // pred_check_branch
          %639 = sbr.rel (%p637) target = $region72
        $region71: #{eva2_forward.1} parent=11 // pred_region
          _
        $region72: #{eva2_forward.1} parent=11 // pred_fallthru
          _
        // Predicated region
        $region73: #{eva2_forward.1} parent=11 // pred_check
          %p640 = pneg %p396
        $region74: #{eva2_forward.1} parent=11 // pred_check_branch
          %642 = sbr.rel (%p640) target = $region76
        $region75: #{eva2_forward.1} parent=11 // pred_region
          _
        $region76: #{eva2_forward.1} parent=11 // pred_fallthru
          _
        // Predicated region
        $region77: #{eva2_forward.1} parent=11 // pred_check
          %p643 = pneg %p417
        $region78: #{eva2_forward.1} parent=11 // pred_check_branch
          %645 = sbr.rel (%p643) target = $region80
        $region79: #{eva2_forward.1} parent=11 // pred_region
          _
        $region80: #{eva2_forward.1} parent=11 // pred_fallthru
          _
        // Predicated region
        $region81: #{eva2_forward.1} parent=11 // pred_check
          %p646 = pneg %p438
        $region82: #{eva2_forward.1} parent=11 // pred_check_branch
          %648 = sbr.rel (%p646) target = $region84
        $region83: #{eva2_forward.1} parent=11 // pred_region
          %650 = vsyncadd [#allocation6], 0
          %s651 = sshll.u32 %s18, 4
          %s652 = int_to_ptr.hbm [resolvable:$true] %s651
          %s653 = sshll.u32 [#allocation5], 4
          %s654 = int_to_ptr.vmem [resolvable:$true] %s653
          %659 = dma.hbm_to_vmem [thread:$0]  %s652, 2048, %s654, [#allocation6], 64, 64, 4
        $region84: #{eva2_forward.1} parent=11 // pred_fallthru
          _
        // Predicated region
        $region85: #{eva2_forward.1} parent=11 // pred_check
          %p660 = pneg %p459
        $region86: #{eva2_forward.1} parent=11 // pred_check_branch
          %662 = sbr.rel (%p660) target = $region88
        $region87: #{eva2_forward.1} parent=11 // pred_region
          _
        $region88: #{eva2_forward.1} parent=11 // pred_fallthru
          _
        // Predicated region
        $region89: #{eva2_forward.1} parent=11 // pred_check
          %p663 = pneg %p480
        $region90: #{eva2_forward.1} parent=11 // pred_check_branch
          %665 = sbr.rel (%p663) target = $region92
        $region91: #{eva2_forward.1} parent=11 // pred_region
          _
        $region92: #{eva2_forward.1} parent=11 // pred_fallthru
          _
        // Predicated region
        $region93: #{eva2_forward.1} parent=11 // pred_check
          %p666 = pneg %p501
        $region94: #{eva2_forward.1} parent=11 // pred_check_branch
          %668 = sbr.rel (%p666) target = $region96
        $region95: #{eva2_forward.1} parent=11 // pred_region
          _
        $region96: #{eva2_forward.1} parent=11 // pred_fallthru
          _
        // Predicated region
        $region97: #{eva2_forward.1} parent=11 // pred_check
          %p669 = pneg %p522
        $region98: #{eva2_forward.1} parent=11 // pred_check_branch
          %671 = sbr.rel (%p669) target = $region100
        $region99: #{eva2_forward.1} parent=11 // pred_region
          _
        $region100: #{eva2_forward.1} parent=11 // pred_fallthru
          _
        // Predicated region
        $region101: #{eva2_forward.1} parent=11 // pred_check
          %p672 = pneg %p543
        $region102: #{eva2_forward.1} parent=11 // pred_check_branch
          %674 = sbr.rel (%p672) target = $region104
        $region103: #{eva2_forward.1} parent=11 // pred_region
          _
        $region104: #{eva2_forward.1} parent=11 // pred_fallthru
          _
      $region12: #{eva2_forward.1} parent=5 // pred_fallthru
        _
      %p675 = scmp.lt.s32.totalorder %s34, 2
      // Predicated region
      $region105: #{eva2_forward.1} parent=5 // pred_check
        %p676 = pneg %p675
      $region106: #{eva2_forward.1} parent=5 // pred_check_branch
        %678 = sbr.rel (%p676) target = $region108
      $region107: #{eva2_forward.1} parent=5 // pred_region
        // Predicated region
        $region109: #{eva2_forward.1} parent=107 // pred_check
          %p679 = pneg %p54
        $region110: #{eva2_forward.1} parent=107 // pred_check_branch
          %681 = sbr.rel (%p679) target = $region112
        $region111: #{eva2_forward.1} parent=107 // pred_region
          %p682 = scmp.lt.s32.totalorder %s34, 1
          %s683 = scalar_select %p682, %s34, 1
          %s684 = smul.addr %s683, 6
          %s685 = smul.addr %s684, 4
          %s686 = scalar_lea.vmem %s0, %s685
        $region112: #{eva2_forward.1} parent=107 // pred_fallthru
          _
      $region108: #{eva2_forward.1} parent=5 // pred_fallthru
        _
      %p687 = scmp.le.s32.totalorder 1, %s34
      %p688 = scmp.lt.s32.totalorder %s34, 3
      %p689 = pnand %p687, %p688
      %p690 = pneg %p689
      // Predicated region
      $region113: #{eva2_forward.1} parent=5 // pred_check
        _
      $region114: #{eva2_forward.1} parent=5 // pred_check_branch
        %692 = sbr.rel (%p689) target = $region116
      $region115: #{eva2_forward.1} parent=5 // pred_region
        %s693 = ssub.s32 %s34, 1
        // Predicated region
        $region117: #{eva2_forward.1} parent=115 // pred_check
          %p694 = pneg %p354
        $region118: #{eva2_forward.1} parent=115 // pred_check_branch
          %696 = sbr.rel (%p694) target = $region120
        $region119: #{eva2_forward.1} parent=115 // pred_region
          %698 = dma.done [#allocation4], 4096
        $region120: #{eva2_forward.1} parent=115 // pred_fallthru
          _
        // Predicated region
        $region121: #{eva2_forward.1} parent=115 // pred_check
          %p699 = pneg %p438
        $region122: #{eva2_forward.1} parent=115 // pred_check_branch
          %701 = sbr.rel (%p699) target = $region124
        $region123: #{eva2_forward.1} parent=115 // pred_region
          %703 = dma.done [#allocation6], 2048
        $region124: #{eva2_forward.1} parent=115 // pred_fallthru
          _
        %p704 = scmp.lt.s32.totalorder %s39, 1
        %s705 = scalar_select %p704, %s39, 1
        %s706 = smul.addr %s705, 6
        %s707 = smul.addr %s706, 4
        %s708 = scalar_lea.vmem %s0, %s707
        %p709 = pneg %p60
        %p710 = pneg %p57
        %p711 = pneg %p81
        %p712 = pneg %p78
        %p713 = pneg %p102
        %p714 = pneg %p99
        %p715 = pneg %p123
        %p716 = pneg %p120
        %p717 = pneg %p144
        %p718 = pneg %p141
        %p719 = pneg %p165
        %p720 = pneg %p162
        %p721 = pneg %p186
        %p722 = pneg %p183
        %p723 = pneg %p207
        %p724 = pneg %p204
        %p725 = pneg %p228
        %p726 = pneg %p225
        %p727 = pneg %p249
        %p728 = pneg %p246
        %p729 = pneg %p270
        %p730 = pneg %p267
        %p731 = pneg %p291
        %p732 = pneg %p288
        %p733 = pneg %p312
        %p734 = pneg %p309
        %p735 = pneg %p333
        %p736 = pneg %p330
        %p737 = pneg %p354
        %p738 = pneg %p351
        %p739 = pneg %p375
        %p740 = pneg %p372
        %p741 = pneg %p396
        %p742 = pneg %p393
        %p743 = pneg %p417
        %p744 = pneg %p414
        %p745 = pneg %p438
        %p746 = pneg %p435
        %p747 = pneg %p459
        %p748 = pneg %p456
        %p749 = pneg %p480
        %p750 = pneg %p477
        %p751 = pneg %p501
        %p752 = pneg %p498
        %p753 = pneg %p522
        %p754 = pneg %p519
        %p755 = pneg %p543
        %p756 = pneg %p540
        %p757 = pneg %p569
        %p758 = pneg %p566
        %p759 = scmp.lt.s32.totalorder %s39, 1
        %s760 = scalar_select %p759, %s39, 1
        %s761 = scalar_lea.vmem %s24, %s760
        %p762 = scmp.lt.s32.totalorder %s39, 1
        %s763 = scalar_select %p762, %s39, 1
        %s764 = smul.addr %s763, 6
        %s765 = smul.addr %s764, 4
        %s766 = scalar_lea.vmem %s0, %s765
        %p767 = scmp.lt.s32.totalorder %s39, 1
        %s768 = scalar_select %p767, %s39, 1
        %s769 = scalar_lea.vmem %s24, %s768
        %v771 = vld [vmem:[%s1] sm:$0xff]
        %v772 = vld [vmem:[%s766] sm:$0xff]
        %v773 = vld [vmem:[%s766 + $0x8] sm:$0xff]
        %v774 = vld [vmem:[%s766 + $0x10] sm:$0xff]
        %v775 = vld [vmem:[%s5] sm:$0xf]
        %v776 = vld [vmem:[%s5 + $0x4] sm:$0xf]
        %v777 = vld [vmem:[%s5 + $0x8] sm:$0xf]
        %v778 = vld [vmem:[%s5 + $0xc] sm:$0xf]
        %v779 = vld [vmem:[%s5 + $0x10] sm:$0xf]
        %v780 = vld [vmem:[%s5 + $0x14] sm:$0xf]
        %v781 = vld [vmem:[%s5 + $0x18] sm:$0xf]
        %v782 = vld [vmem:[%s5 + $0x1c] sm:$0xf]
        %v783 = vld [vmem:[%s5 + $0x20] sm:$0xf]
        %v784 = vld [vmem:[%s5 + $0x24] sm:$0xf]
        %v785 = vld [vmem:[%s5 + $0x28] sm:$0xf]
        %v786 = vld [vmem:[%s5 + $0x2c] sm:$0xf]
        %v787 = vld [vmem:[%s5 + $0x30] sm:$0xf]
        %v788 = vld [vmem:[%s5 + $0x34] sm:$0xf]
        %v789 = vld [vmem:[%s5 + $0x38] sm:$0xf]
        %v790 = vld [vmem:[%s5 + $0x3c] sm:$0xf]
        %v791 = vld [vmem:[%s5 + $0x40] sm:$0xf]
        %v792 = vld [vmem:[%s5 + $0x44] sm:$0xf]
        %v793 = vld [vmem:[%s5 + $0x48] sm:$0xf]
        %v794 = vld [vmem:[%s5 + $0x4c] sm:$0xf]
        %v795 = vld [vmem:[%s5 + $0x50] sm:$0xf]
        %v796 = vld [vmem:[%s5 + $0x54] sm:$0xf]
        %v797 = vld [vmem:[%s5 + $0x58] sm:$0xf]
        %v798 = vld [vmem:[%s5 + $0x5c] sm:$0xf]
        %v799 = vld [vmem:[%s5 + $0x60] sm:$0xf]
        %v800 = vld [vmem:[%s5 + $0x64] sm:$0xf]
        %v801 = vld [vmem:[%s5 + $0x68] sm:$0xf]
        %v802 = vld [vmem:[%s5 + $0x6c] sm:$0xf]
        %v803 = vld [vmem:[%s5 + $0x70] sm:$0xf]
        %v804 = vld [vmem:[%s5 + $0x74] sm:$0xf]
        %v805 = vld [vmem:[%s5 + $0x78] sm:$0xf]
        %v806 = vld [vmem:[%s5 + $0x7c] sm:$0xf]
        %v807 = vld [vmem:[%s5 + $0x80] sm:$0xf]
        %v808 = vld [vmem:[%s5 + $0x84] sm:$0xf]
        %v809 = vld [vmem:[%s5 + $0x88] sm:$0xf]
        %v810 = vld [vmem:[%s5 + $0x8c] sm:$0xf]
        %v811 = vld [vmem:[%s5 + $0x90] sm:$0xf]
        %v812 = vld [vmem:[%s5 + $0x94] sm:$0xf]
        %v813 = vld [vmem:[%s5 + $0x98] sm:$0xf]
        %v814 = vld [vmem:[%s5 + $0x9c] sm:$0xf]
        %v815 = vld [vmem:[%s5 + $0xa0] sm:$0xf]
        %v816 = vld [vmem:[%s5 + $0xa4] sm:$0xf]
        %v817 = vld [vmem:[%s5 + $0xa8] sm:$0xf]
        %v818 = vld [vmem:[%s5 + $0xac] sm:$0xf]
        %v819 = vld [vmem:[%s5 + $0xb0] sm:$0xf]
        %v820 = vld [vmem:[%s5 + $0xb4] sm:$0xf]
        %v821 = vld [vmem:[%s5 + $0xb8] sm:$0xf]
        %v822 = vld [vmem:[%s5 + $0xbc] sm:$0xf]
        %v823 = vld [vmem:[%s5 + $0xc0] sm:$0xf]
        %v824 = vld [vmem:[%s5 + $0xc4] sm:$0xf]
        %v825 = vld [vmem:[%s5 + $0xc8] sm:$0xf]
        %v826 = vld [vmem:[%s5 + $0xcc] sm:$0xf]
        %v827 = vld [vmem:[%s5 + $0xd0] sm:$0xf]
        %v828 = vld [vmem:[%s5 + $0xd4] sm:$0xf]
        %v829 = vld [vmem:[%s5 + $0xd8] sm:$0xf]
        %v830 = vld [vmem:[%s5 + $0xdc] sm:$0xf]
        %v831 = vld [vmem:[%s5 + $0xe0] sm:$0xf]
        %v832 = vld [vmem:[%s5 + $0xe4] sm:$0xf]
        %v833 = vld [vmem:[%s5 + $0xe8] sm:$0xf]
        %v834 = vld [vmem:[%s5 + $0xec] sm:$0xf]
        %v835 = vld [vmem:[%s5 + $0xf0] sm:$0xf]
        %v836 = vld [vmem:[%s5 + $0xf4] sm:$0xf]
        %v837 = vld [vmem:[%s5 + $0xf8] sm:$0xf]
        %v838 = vld [vmem:[%s5 + $0xfc] sm:$0xf]
        %v839 = vld [vmem:[%s5 + $0x100] sm:$0xf]
        %v840 = vld [vmem:[%s5 + $0x104] sm:$0xf]
        %v841 = vld [vmem:[%s5 + $0x108] sm:$0xf]
        %v842 = vld [vmem:[%s5 + $0x10c] sm:$0xf]
        %v843 = vld [vmem:[%s5 + $0x110] sm:$0xf]
        %v844 = vld [vmem:[%s5 + $0x114] sm:$0xf]
        %v845 = vld [vmem:[%s5 + $0x118] sm:$0xf]
        %v846 = vld [vmem:[%s5 + $0x11c] sm:$0xf]
        %v847 = vld [vmem:[%s5 + $0x120] sm:$0xf]
        %v848 = vld [vmem:[%s5 + $0x124] sm:$0xf]
        %v849 = vld [vmem:[%s5 + $0x128] sm:$0xf]
        %v850 = vld [vmem:[%s5 + $0x12c] sm:$0xf]
        %v851 = vld [vmem:[%s5 + $0x130] sm:$0xf]
        %v852 = vld [vmem:[%s5 + $0x134] sm:$0xf]
        %v853 = vld [vmem:[%s5 + $0x138] sm:$0xf]
        %v854 = vld [vmem:[%s5 + $0x13c] sm:$0xf]
        %v855 = vld [vmem:[%s5 + $0x140] sm:$0xf]
        %v856 = vld [vmem:[%s5 + $0x144] sm:$0xf]
        %v857 = vld [vmem:[%s5 + $0x148] sm:$0xf]
        %v858 = vld [vmem:[%s5 + $0x14c] sm:$0xf]
        %v859 = vld [vmem:[%s5 + $0x150] sm:$0xf]
        %v860 = vld [vmem:[%s5 + $0x154] sm:$0xf]
        %v861 = vld [vmem:[%s5 + $0x158] sm:$0xf]
        %v862 = vld [vmem:[%s5 + $0x15c] sm:$0xf]
        %v863 = vld [vmem:[%s5 + $0x160] sm:$0xf]
        %v864 = vld [vmem:[%s5 + $0x164] sm:$0xf]
        %v865 = vld [vmem:[%s5 + $0x168] sm:$0xf]
        %v866 = vld [vmem:[%s5 + $0x16c] sm:$0xf]
        %v867 = vld [vmem:[%s5 + $0x170] sm:$0xf]
        %v868 = vld [vmem:[%s5 + $0x174] sm:$0xf]
        %v869 = vld [vmem:[%s5 + $0x178] sm:$0xf]
        %v870 = vld [vmem:[%s5 + $0x17c] sm:$0xf]
        %v874 = vunpack.c.l.b16 %v772
        %v875 = vunpack.c.h.b16 %v772
        %v876 = vunpack.c.l.b16 %v773
        %v877 = vunpack.c.h.b16 %v773
        %v878 = vunpack.c.l.b16 %v774
        %v879 = vunpack.c.h.b16 %v774
        %v880 = vpack.c.b16 %v874, %v874
        %v881 = vpack.c.b16 %v875, %v875
        %v882 = vpack.c.b16 %v876, %v876
        %v883 = vpack.c.b16 %v877, %v877
        %v884 = vpack.c.b16 %v878, %v878
        %v885 = vpack.c.b16 %v879, %v879
        %v988 = vunpack.c.l.b16 %v775
        %v989 = vunpack.c.l.b16 %v776
        %v990 = vunpack.c.l.b16 %v777
        %v991 = vunpack.c.l.b16 %v778
        %v992 = vunpack.c.l.b16 %v779
        %v993 = vunpack.c.l.b16 %v780
        %v994 = vunpack.c.l.b16 %v781
        %v995 = vunpack.c.l.b16 %v782
        %v996 = vunpack.c.l.b16 %v783
        %v997 = vunpack.c.l.b16 %v784
        %v998 = vunpack.c.l.b16 %v785
        %v999 = vunpack.c.l.b16 %v786
        %v1000 = vunpack.c.l.b16 %v787
        %v1001 = vunpack.c.l.b16 %v788
        %v1002 = vunpack.c.l.b16 %v789
        %v1003 = vunpack.c.l.b16 %v790
        %v1004 = vunpack.c.l.b16 %v791
        %v1005 = vunpack.c.l.b16 %v792
        %v1006 = vunpack.c.l.b16 %v793
        %v1007 = vunpack.c.l.b16 %v794
        %v1008 = vunpack.c.l.b16 %v795
        %v1009 = vunpack.c.l.b16 %v796
        %v1010 = vunpack.c.l.b16 %v797
        %v1011 = vunpack.c.l.b16 %v798
        %v1012 = vunpack.c.l.b16 %v799
        %v1013 = vunpack.c.l.b16 %v800
        %v1014 = vunpack.c.l.b16 %v801
        %v1015 = vunpack.c.l.b16 %v802
        %v1016 = vunpack.c.l.b16 %v803
        %v1017 = vunpack.c.l.b16 %v804
        %v1018 = vunpack.c.l.b16 %v805
        %v1019 = vunpack.c.l.b16 %v806
        %v1020 = vunpack.c.l.b16 %v807
        %v1021 = vunpack.c.l.b16 %v808
        %v1022 = vunpack.c.l.b16 %v809
        %v1023 = vunpack.c.l.b16 %v810
        %v1024 = vunpack.c.l.b16 %v811
        %v1025 = vunpack.c.l.b16 %v812
        %v1026 = vunpack.c.l.b16 %v813
        %v1027 = vunpack.c.l.b16 %v814
        %v1028 = vunpack.c.l.b16 %v815
        %v1029 = vunpack.c.l.b16 %v816
        %v1030 = vunpack.c.l.b16 %v817
        %v1031 = vunpack.c.l.b16 %v818
        %v1032 = vunpack.c.l.b16 %v819
        %v1033 = vunpack.c.l.b16 %v820
        %v1034 = vunpack.c.l.b16 %v821
        %v1035 = vunpack.c.l.b16 %v822
        %v1036 = vunpack.c.l.b16 %v823
        %v1037 = vunpack.c.l.b16 %v824
        %v1038 = vunpack.c.l.b16 %v825
        %v1039 = vunpack.c.l.b16 %v826
        %v1040 = vunpack.c.l.b16 %v827
        %v1041 = vunpack.c.l.b16 %v828
        %v1042 = vunpack.c.l.b16 %v829
        %v1043 = vunpack.c.l.b16 %v830
        %v1044 = vunpack.c.l.b16 %v831
        %v1045 = vunpack.c.l.b16 %v832
        %v1046 = vunpack.c.l.b16 %v833
        %v1047 = vunpack.c.l.b16 %v834
        %v1048 = vunpack.c.l.b16 %v835
        %v1049 = vunpack.c.l.b16 %v836
        %v1050 = vunpack.c.l.b16 %v837
        %v1051 = vunpack.c.l.b16 %v838
        %v1052 = vunpack.c.l.b16 %v839
        %v1053 = vunpack.c.l.b16 %v840
        %v1054 = vunpack.c.l.b16 %v841
        %v1055 = vunpack.c.l.b16 %v842
        %v1056 = vunpack.c.l.b16 %v843
        %v1057 = vunpack.c.l.b16 %v844
        %v1058 = vunpack.c.l.b16 %v845
        %v1059 = vunpack.c.l.b16 %v846
        %v1060 = vunpack.c.l.b16 %v847
        %v1061 = vunpack.c.l.b16 %v848
        %v1062 = vunpack.c.l.b16 %v849
        %v1063 = vunpack.c.l.b16 %v850
        %v1064 = vunpack.c.l.b16 %v851
        %v1065 = vunpack.c.l.b16 %v852
        %v1066 = vunpack.c.l.b16 %v853
        %v1067 = vunpack.c.l.b16 %v854
        %v1068 = vunpack.c.l.b16 %v855
        %v1069 = vunpack.c.l.b16 %v856
        %v1070 = vunpack.c.l.b16 %v857
        %v1071 = vunpack.c.l.b16 %v858
        %v1072 = vunpack.c.l.b16 %v859
        %v1073 = vunpack.c.l.b16 %v860
        %v1074 = vunpack.c.l.b16 %v861
        %v1075 = vunpack.c.l.b16 %v862
        %v1076 = vunpack.c.l.b16 %v863
        %v1077 = vunpack.c.l.b16 %v864
        %v1078 = vunpack.c.l.b16 %v865
        %v1079 = vunpack.c.l.b16 %v866
        %v1080 = vunpack.c.l.b16 %v867
        %v1081 = vunpack.c.l.b16 %v868
        %v1082 = vunpack.c.l.b16 %v869
        %v1083 = vunpack.c.l.b16 %v870
        %v1084 = vpack.c.b16 %v989, %v988
        %v1085 = vpack.c.b16 %v991, %v990
        %v1086 = vpack.c.b16 %v993, %v992
        %v1087 = vpack.c.b16 %v995, %v994
        %v1088 = vpack.c.b16 %v997, %v996
        %v1089 = vpack.c.b16 %v999, %v998
        %v1090 = vpack.c.b16 %v1001, %v1000
        %v1091 = vpack.c.b16 %v1003, %v1002
        %v1092 = vpack.c.b16 %v1005, %v1004
        %v1093 = vpack.c.b16 %v1007, %v1006
        %v1094 = vpack.c.b16 %v1009, %v1008
        %v1095 = vpack.c.b16 %v1011, %v1010
        %v1096 = vpack.c.b16 %v1013, %v1012
        %v1097 = vpack.c.b16 %v1015, %v1014
        %v1098 = vpack.c.b16 %v1017, %v1016
        %v1099 = vpack.c.b16 %v1019, %v1018
        %v1100 = vpack.c.b16 %v1021, %v1020
        %v1101 = vpack.c.b16 %v1023, %v1022
        %v1102 = vpack.c.b16 %v1025, %v1024
        %v1103 = vpack.c.b16 %v1027, %v1026
        %v1104 = vpack.c.b16 %v1029, %v1028
        %v1105 = vpack.c.b16 %v1031, %v1030
        %v1106 = vpack.c.b16 %v1033, %v1032
        %v1107 = vpack.c.b16 %v1035, %v1034
        %v1108 = vpack.c.b16 %v1037, %v1036
        %v1109 = vpack.c.b16 %v1039, %v1038
        %v1110 = vpack.c.b16 %v1041, %v1040
        %v1111 = vpack.c.b16 %v1043, %v1042
        %v1112 = vpack.c.b16 %v1045, %v1044
        %v1113 = vpack.c.b16 %v1047, %v1046
        %v1114 = vpack.c.b16 %v1049, %v1048
        %v1115 = vpack.c.b16 %v1051, %v1050
        %v1116 = vpack.c.b16 %v1053, %v1052
        %v1117 = vpack.c.b16 %v1055, %v1054
        %v1118 = vpack.c.b16 %v1057, %v1056
        %v1119 = vpack.c.b16 %v1059, %v1058
        %v1120 = vpack.c.b16 %v1061, %v1060
        %v1121 = vpack.c.b16 %v1063, %v1062
        %v1122 = vpack.c.b16 %v1065, %v1064
        %v1123 = vpack.c.b16 %v1067, %v1066
        %v1124 = vpack.c.b16 %v1069, %v1068
        %v1125 = vpack.c.b16 %v1071, %v1070
        %v1126 = vpack.c.b16 %v1073, %v1072
        %v1127 = vpack.c.b16 %v1075, %v1074
        %v1128 = vpack.c.b16 %v1077, %v1076
        %v1129 = vpack.c.b16 %v1079, %v1078
        %v1130 = vpack.c.b16 %v1081, %v1080
        %v1131 = vpack.c.b16 %v1083, %v1082
        %1180 = vmatpush.bf16.msra.mxu0 %v1091
        %1181 = vmatpush.bf16.msra.mxu0 %v1090
        %1182 = vmatpush.bf16.msra.mxu0 %v1089
        %1183 = vmatpush.bf16.msra.mxu0 %v1088
        %1184 = vmatpush.bf16.msra.mxu0 %v1087
        %1185 = vmatpush.bf16.msra.mxu0 %v1086
        %1186 = vmatpush.bf16.msra.mxu0 %v1085
        %1187 = vmatpush.bf16.msra.mxu0 %v1084
        %1188 = vmatmul.bf16.gmra.mxu0 %v880
        %v1189 = vpop.f32.mrf.mxu0
        %v1190 = vadd.f32 0.0, %v1189
        %v1191 = vpop.f32.mrf.mxu0
        %1192 = vdwg.mxu0
        %1193 = vmatpush.bf16.msra.mxu0 %v1099
        %1194 = vmatpush.bf16.msra.mxu0 %v1098
        %1195 = vmatpush.bf16.msra.mxu0 %v1097
        %1196 = vmatpush.bf16.msra.mxu0 %v1096
        %1197 = vmatpush.bf16.msra.mxu0 %v1095
        %1198 = vmatpush.bf16.msra.mxu0 %v1094
        %1199 = vmatpush.bf16.msra.mxu0 %v1093
        %1200 = vmatpush.bf16.msra.mxu0 %v1092
        %1201 = vmatmul.bf16.gmra.mxu0 %v881
        %v1202 = vpop.f32.mrf.mxu0
        %v1203 = vadd.f32 %v1190, %v1202
        %v1204 = vpop.f32.mrf.mxu0
        %1205 = vdwg.mxu0
        %1206 = vmatpush.bf16.msra.mxu0 %v1107
        %1207 = vmatpush.bf16.msra.mxu0 %v1106
        %1208 = vmatpush.bf16.msra.mxu0 %v1105
        %1209 = vmatpush.bf16.msra.mxu0 %v1104
        %1210 = vmatpush.bf16.msra.mxu0 %v1103
        %1211 = vmatpush.bf16.msra.mxu0 %v1102
        %1212 = vmatpush.bf16.msra.mxu0 %v1101
        %1213 = vmatpush.bf16.msra.mxu0 %v1100
        %1214 = vmatmul.bf16.gmra.mxu0 %v882
        %v1215 = vpop.f32.mrf.mxu0
        %v1216 = vadd.f32 %v1203, %v1215
        %v1217 = vpop.f32.mrf.mxu0
        %1218 = vdwg.mxu0
        %1219 = vmatpush.bf16.msra.mxu0 %v1115
        %1220 = vmatpush.bf16.msra.mxu0 %v1114
        %1221 = vmatpush.bf16.msra.mxu0 %v1113
        %1222 = vmatpush.bf16.msra.mxu0 %v1112
        %1223 = vmatpush.bf16.msra.mxu0 %v1111
        %1224 = vmatpush.bf16.msra.mxu0 %v1110
        %1225 = vmatpush.bf16.msra.mxu0 %v1109
        %1226 = vmatpush.bf16.msra.mxu0 %v1108
        %1227 = vmatmul.bf16.gmra.mxu0 %v883
        %v1228 = vpop.f32.mrf.mxu0
        %v1229 = vadd.f32 %v1216, %v1228
        %v1230 = vpop.f32.mrf.mxu0
        %1231 = vdwg.mxu0
        %1232 = vmatpush.bf16.msra.mxu0 %v1123
        %1233 = vmatpush.bf16.msra.mxu0 %v1122
        %1234 = vmatpush.bf16.msra.mxu0 %v1121
        %1235 = vmatpush.bf16.msra.mxu0 %v1120
        %1236 = vmatpush.bf16.msra.mxu0 %v1119
        %1237 = vmatpush.bf16.msra.mxu0 %v1118
        %1238 = vmatpush.bf16.msra.mxu0 %v1117
        %1239 = vmatpush.bf16.msra.mxu0 %v1116
        %1240 = vmatmul.bf16.gmra.mxu0 %v884
        %v1241 = vpop.f32.mrf.mxu0
        %v1242 = vadd.f32 %v1229, %v1241
        %v1243 = vpop.f32.mrf.mxu0
        %1244 = vdwg.mxu0
        %1245 = vmatpush.bf16.msra.mxu0 %v1131
        %1246 = vmatpush.bf16.msra.mxu0 %v1130
        %1247 = vmatpush.bf16.msra.mxu0 %v1129
        %1248 = vmatpush.bf16.msra.mxu0 %v1128
        %1249 = vmatpush.bf16.msra.mxu0 %v1127
        %1250 = vmatpush.bf16.msra.mxu0 %v1126
        %1251 = vmatpush.bf16.msra.mxu0 %v1125
        %1252 = vmatpush.bf16.msra.mxu0 %v1124
        %1253 = vmatmul.bf16.gmra.mxu0 %v885
        %v1254 = vpop.f32.mrf.mxu0
        %v1255 = vadd.f32 %v1242, %v1254
        %v1256 = vpop.f32.mrf.mxu0
        %1257 = vdwg.mxu0
        %v1258 = vadd.f32 %v771, %v1255
        %v1259 = vld [vmem:[%s2] sm:$0xff]
        %v1260 = vld [vmem:[%s3] sm:$0xff]
        %v1261 = vld [vmem:[%s4] sm:$0xff]
        %v1262 = vld [vmem:[%s6] sm:$0x1]
        %v1263 = vld [vmem:[%s7] sm:$0x1]
        %1264 = vadd.xlane.f32.xlu0 %v1258
        %v1265 = vpop.xlane.xlu0 %1264
        %v1266 = vrcp.pop 128.0
        %v1267 = vmul.f32 128.0, %v1266
        %v1268 = vsub.f32 1.0, %v1267
        %v1269 = vmul.f32 %v1266, %v1268
        %v1270 = vadd.f32 %v1266, %v1269
        %vm1271 = vweird.f32 %v1266
        %v1272 = vsel %vm1271, %v1266, %v1270
        %v1273 = vmul.f32 %v1265, %v1272
        %v1274 = vsub.f32 %v1258, %v1273
        %v1275 = vmul.f32 %v1274, %v1274
        %1276 = vadd.xlane.f32.xlu0 %v1275
        %v1277 = vpop.xlane.xlu0 %1276
        %v1278 = vmul.f32 %v1277, %v1272
        %v1279 = vadd.f32 %v1278, 1e-06
        %v1280 = vrsqrt.pop %v1279
        %v1281 = vmul.f32 %v1280, %v1279
        %v1282 = vmul.f32 %v1281, %v1280
        %v1283 = vmul.f32 0.5, %v1282
        %v1284 = vsub.f32 1.5, %v1283
        %v1285 = vmul.f32 %v1280, %v1284
        %vm1286 = vweird.f32 %v1279
        %vm1287 = vweird.f32 %v1280
        %vm1288 = vmor %vm1286, %vm1287
        %v1289 = vsel %vm1288, %v1280, %v1285
        %v1290 = vmul.f32 %v1274, %v1289
        %v1292 = vperm.slane %v1262, 0
        %v1294 = vmul.f32 %v1290, %v1292
        %v1296 = vperm.slane %v1263, 0
        %v1298 = vadd.f32 %v1294, %v1296
        %v1299 = vpack.c.bf16 %v1298, %v1298
        %v1300 = vld [vmem:[%s8] sm:$0xff]
        %v1301 = vld [vmem:[%s8 + $0x8] sm:$0xff]
        %v1302 = vld [vmem:[%s8 + $0x10] sm:$0xf]
        %v1303 = vld [vmem:[%s8 + $0x14] sm:$0xff]
        %v1304 = vld [vmem:[%s8 + $0x1c] sm:$0xff]
        %v1305 = vld [vmem:[%s8 + $0x24] sm:$0xf]
        %v1306 = vld [vmem:[%s8 + $0x28] sm:$0xff]
        %v1307 = vld [vmem:[%s8 + $0x30] sm:$0xff]
        %v1308 = vld [vmem:[%s8 + $0x38] sm:$0xf]
        %v1309 = vld [vmem:[%s8 + $0x3c] sm:$0xff]
        %v1310 = vld [vmem:[%s8 + $0x44] sm:$0xff]
        %v1311 = vld [vmem:[%s8 + $0x4c] sm:$0xf]
        %v1312 = vld [vmem:[%s8 + $0x50] sm:$0xff]
        %v1313 = vld [vmem:[%s8 + $0x58] sm:$0xff]
        %v1314 = vld [vmem:[%s8 + $0x60] sm:$0xf]
        %v1315 = vld [vmem:[%s8 + $0x64] sm:$0xff]
        %v1316 = vld [vmem:[%s8 + $0x6c] sm:$0xff]
        %v1317 = vld [vmem:[%s8 + $0x74] sm:$0xf]
        %v1318 = vld [vmem:[%s8 + $0x78] sm:$0xff]
        %v1319 = vld [vmem:[%s8 + $0x80] sm:$0xff]
        %v1320 = vld [vmem:[%s8 + $0x88] sm:$0xf]
        %v1321 = vld [vmem:[%s8 + $0x8c] sm:$0xff]
        %v1322 = vld [vmem:[%s8 + $0x94] sm:$0xff]
        %v1323 = vld [vmem:[%s8 + $0x9c] sm:$0xf]
        %v1324 = vld [vmem:[%s8 + $0xa0] sm:$0xff]
        %v1325 = vld [vmem:[%s8 + $0xa8] sm:$0xff]
        %v1326 = vld [vmem:[%s8 + $0xb0] sm:$0xf]
        %v1327 = vld [vmem:[%s8 + $0xb4] sm:$0xff]
        %v1328 = vld [vmem:[%s8 + $0xbc] sm:$0xff]
        %v1329 = vld [vmem:[%s8 + $0xc4] sm:$0xf]
        %v1330 = vld [vmem:[%s8 + $0xc8] sm:$0xff]
        %v1331 = vld [vmem:[%s8 + $0xd0] sm:$0xff]
        %v1332 = vld [vmem:[%s8 + $0xd8] sm:$0xf]
        %v1333 = vld [vmem:[%s8 + $0xdc] sm:$0xff]
        %v1334 = vld [vmem:[%s8 + $0xe4] sm:$0xff]
        %v1335 = vld [vmem:[%s8 + $0xec] sm:$0xf]
        %v1336 = vld [vmem:[%s8 + $0xf0] sm:$0xff]
        %v1337 = vld [vmem:[%s8 + $0xf8] sm:$0xff]
        %v1338 = vld [vmem:[%s8 + $0x100] sm:$0xf]
        %v1339 = vld [vmem:[%s8 + $0x104] sm:$0xff]
        %v1340 = vld [vmem:[%s8 + $0x10c] sm:$0xff]
        %v1341 = vld [vmem:[%s8 + $0x114] sm:$0xf]
        %v1342 = vld [vmem:[%s8 + $0x118] sm:$0xff]
        %v1343 = vld [vmem:[%s8 + $0x120] sm:$0xff]
        %v1344 = vld [vmem:[%s8 + $0x128] sm:$0xf]
        %v1345 = vld [vmem:[%s8 + $0x12c] sm:$0xff]
        %v1346 = vld [vmem:[%s8 + $0x134] sm:$0xff]
        %v1347 = vld [vmem:[%s8 + $0x13c] sm:$0xf]
        %v1348 = vld [vmem:[%s9] sm:$0x1f]
        %v1350 = vperm.slane %v1348, 0
        %v1351 = vperm.slane %v1348, 1
        %v1352 = vperm.slane %v1348, 2
        %v1353 = vperm.slane %v1348, 3
        %v1354 = vperm.slane %v1348, 4
        %v1408 = vunpack.c.l.b16 %v1300
        %v1409 = vunpack.c.h.b16 %v1300
        %v1410 = vunpack.c.l.b16 %v1301
        %v1411 = vunpack.c.h.b16 %v1301
        %v1412 = vunpack.c.l.b16 %v1302
        %v1413 = vunpack.c.l.b16 %v1303
        %v1414 = vunpack.c.h.b16 %v1303
        %v1415 = vunpack.c.l.b16 %v1304
        %v1416 = vunpack.c.h.b16 %v1304
        %v1417 = vunpack.c.l.b16 %v1305
        %v1418 = vunpack.c.l.b16 %v1306
        %v1419 = vunpack.c.h.b16 %v1306
        %v1420 = vunpack.c.l.b16 %v1307
        %v1421 = vunpack.c.h.b16 %v1307
        %v1422 = vunpack.c.l.b16 %v1308
        %v1423 = vunpack.c.l.b16 %v1309
        %v1424 = vunpack.c.h.b16 %v1309
        %v1425 = vunpack.c.l.b16 %v1310
        %v1426 = vunpack.c.h.b16 %v1310
        %v1427 = vunpack.c.l.b16 %v1311
        %v1428 = vunpack.c.l.b16 %v1312
        %v1429 = vunpack.c.h.b16 %v1312
        %v1430 = vunpack.c.l.b16 %v1313
        %v1431 = vunpack.c.h.b16 %v1313
        %v1432 = vunpack.c.l.b16 %v1314
        %v1433 = vunpack.c.l.b16 %v1315
        %v1434 = vunpack.c.h.b16 %v1315
        %v1435 = vunpack.c.l.b16 %v1316
        %v1436 = vunpack.c.h.b16 %v1316
        %v1437 = vunpack.c.l.b16 %v1317
        %v1438 = vunpack.c.l.b16 %v1318
        %v1439 = vunpack.c.h.b16 %v1318
        %v1440 = vunpack.c.l.b16 %v1319
        %v1441 = vunpack.c.h.b16 %v1319
        %v1442 = vunpack.c.l.b16 %v1320
        %v1443 = vunpack.c.l.b16 %v1321
        %v1444 = vunpack.c.h.b16 %v1321
        %v1445 = vunpack.c.l.b16 %v1322
        %v1446 = vunpack.c.h.b16 %v1322
        %v1447 = vunpack.c.l.b16 %v1323
        %v1448 = vunpack.c.l.b16 %v1324
        %v1449 = vunpack.c.h.b16 %v1324
        %v1450 = vunpack.c.l.b16 %v1325
        %v1451 = vunpack.c.h.b16 %v1325
        %v1452 = vunpack.c.l.b16 %v1326
        %v1453 = vunpack.c.l.b16 %v1327
        %v1454 = vunpack.c.h.b16 %v1327
        %v1455 = vunpack.c.l.b16 %v1328
        %v1456 = vunpack.c.h.b16 %v1328
        %v1457 = vunpack.c.l.b16 %v1329
        %v1458 = vunpack.c.l.b16 %v1330
        %v1459 = vunpack.c.h.b16 %v1330
        %v1460 = vunpack.c.l.b16 %v1331
        %v1461 = vunpack.c.h.b16 %v1331
        %v1462 = vunpack.c.l.b16 %v1332
        %v1463 = vunpack.c.l.b16 %v1333
        %v1464 = vunpack.c.h.b16 %v1333
        %v1465 = vunpack.c.l.b16 %v1334
        %v1466 = vunpack.c.h.b16 %v1334
        %v1467 = vunpack.c.l.b16 %v1335
        %v1468 = vunpack.c.l.b16 %v1336
        %v1469 = vunpack.c.h.b16 %v1336
        %v1470 = vunpack.c.l.b16 %v1337
        %v1471 = vunpack.c.h.b16 %v1337
        %v1472 = vunpack.c.l.b16 %v1338
        %v1473 = vunpack.c.l.b16 %v1339
        %v1474 = vunpack.c.h.b16 %v1339
        %v1475 = vunpack.c.l.b16 %v1340
        %v1476 = vunpack.c.h.b16 %v1340
        %v1477 = vunpack.c.l.b16 %v1341
        %v1478 = vunpack.c.l.b16 %v1342
        %v1479 = vunpack.c.h.b16 %v1342
        %v1480 = vunpack.c.l.b16 %v1343
        %v1481 = vunpack.c.h.b16 %v1343
        %v1482 = vunpack.c.l.b16 %v1344
        %v1483 = vunpack.c.l.b16 %v1345
        %v1484 = vunpack.c.h.b16 %v1345
        %v1485 = vunpack.c.l.b16 %v1346
        %v1486 = vunpack.c.h.b16 %v1346
        %v1487 = vunpack.c.l.b16 %v1347
        %v1488 = vpack.c.b16 %v1413, %v1408
        %v1489 = vpack.c.b16 %v1414, %v1409
        %v1490 = vpack.c.b16 %v1415, %v1410
        %v1491 = vpack.c.b16 %v1416, %v1411
        %v1492 = vpack.c.b16 %v1417, %v1412
        %v1493 = vpack.c.b16 %v1423, %v1418
        %v1494 = vpack.c.b16 %v1424, %v1419
        %v1495 = vpack.c.b16 %v1425, %v1420
        %v1496 = vpack.c.b16 %v1426, %v1421
        %v1497 = vpack.c.b16 %v1427, %v1422
        %v1498 = vpack.c.b16 %v1433, %v1428
        %v1499 = vpack.c.b16 %v1434, %v1429
        %v1500 = vpack.c.b16 %v1435, %v1430
        %v1501 = vpack.c.b16 %v1436, %v1431
        %v1502 = vpack.c.b16 %v1437, %v1432
        %v1503 = vpack.c.b16 %v1443, %v1438
        %v1504 = vpack.c.b16 %v1444, %v1439
        %v1505 = vpack.c.b16 %v1445, %v1440
        %v1506 = vpack.c.b16 %v1446, %v1441
        %v1507 = vpack.c.b16 %v1447, %v1442
        %v1508 = vpack.c.b16 %v1453, %v1448
        %v1509 = vpack.c.b16 %v1454, %v1449
        %v1510 = vpack.c.b16 %v1455, %v1450
        %v1511 = vpack.c.b16 %v1456, %v1451
        %v1512 = vpack.c.b16 %v1457, %v1452
        %v1513 = vpack.c.b16 %v1463, %v1458
        %v1514 = vpack.c.b16 %v1464, %v1459
        %v1515 = vpack.c.b16 %v1465, %v1460
        %v1516 = vpack.c.b16 %v1466, %v1461
        %v1517 = vpack.c.b16 %v1467, %v1462
        %v1518 = vpack.c.b16 %v1473, %v1468
        %v1519 = vpack.c.b16 %v1474, %v1469
        %v1520 = vpack.c.b16 %v1475, %v1470
        %v1521 = vpack.c.b16 %v1476, %v1471
        %v1522 = vpack.c.b16 %v1477, %v1472
        %v1523 = vpack.c.b16 %v1483, %v1478
        %v1524 = vpack.c.b16 %v1484, %v1479
        %v1525 = vpack.c.b16 %v1485, %v1480
        %v1526 = vpack.c.b16 %v1486, %v1481
        %v1527 = vpack.c.b16 %v1487, %v1482
        %1568 = vmatpush.bf16.msra.mxu0 %v1523
        %1569 = vmatpush.bf16.msra.mxu0 %v1518
        %1570 = vmatpush.bf16.msra.mxu0 %v1513
        %1571 = vmatpush.bf16.msra.mxu0 %v1508
        %1572 = vmatpush.bf16.msra.mxu0 %v1503
        %1573 = vmatpush.bf16.msra.mxu0 %v1498
        %1574 = vmatpush.bf16.msra.mxu0 %v1493
        %1575 = vmatpush.bf16.msra.mxu0 %v1488
        %1576 = vmatmul.bf16.gmra.mxu0 %v1299
        %v1577 = vpop.f32.mrf.mxu0
        %v1578 = vadd.f32 %v1350, %v1577
        %v1579 = vpop.f32.mrf.mxu0
        %1580 = vdwg.mxu0
        %1581 = vmatpush.bf16.msra.mxu0 %v1524
        %1582 = vmatpush.bf16.msra.mxu0 %v1519
        %1583 = vmatpush.bf16.msra.mxu0 %v1514
        %1584 = vmatpush.bf16.msra.mxu0 %v1509
        %1585 = vmatpush.bf16.msra.mxu0 %v1504
        %1586 = vmatpush.bf16.msra.mxu0 %v1499
        %1587 = vmatpush.bf16.msra.mxu0 %v1494
        %1588 = vmatpush.bf16.msra.mxu0 %v1489
        %1589 = vmatmul.bf16.gmra.mxu0 %v1299
        %v1590 = vpop.f32.mrf.mxu0
        %v1591 = vadd.f32 %v1351, %v1590
        %v1592 = vpop.f32.mrf.mxu0
        %1593 = vdwg.mxu0
        %1594 = vmatpush.bf16.msra.mxu0 %v1525
        %1595 = vmatpush.bf16.msra.mxu0 %v1520
        %1596 = vmatpush.bf16.msra.mxu0 %v1515
        %1597 = vmatpush.bf16.msra.mxu0 %v1510
        %1598 = vmatpush.bf16.msra.mxu0 %v1505
        %1599 = vmatpush.bf16.msra.mxu0 %v1500
        %1600 = vmatpush.bf16.msra.mxu0 %v1495
        %1601 = vmatpush.bf16.msra.mxu0 %v1490
        %1602 = vmatmul.bf16.gmra.mxu0 %v1299
        %v1603 = vpop.f32.mrf.mxu0
        %v1604 = vadd.f32 %v1352, %v1603
        %v1605 = vpop.f32.mrf.mxu0
        %1606 = vdwg.mxu0
        %1607 = vmatpush.bf16.msra.mxu0 %v1526
        %1608 = vmatpush.bf16.msra.mxu0 %v1521
        %1609 = vmatpush.bf16.msra.mxu0 %v1516
        %1610 = vmatpush.bf16.msra.mxu0 %v1511
        %1611 = vmatpush.bf16.msra.mxu0 %v1506
        %1612 = vmatpush.bf16.msra.mxu0 %v1501
        %1613 = vmatpush.bf16.msra.mxu0 %v1496
        %1614 = vmatpush.bf16.msra.mxu0 %v1491
        %1615 = vmatmul.bf16.gmra.mxu0 %v1299
        %v1616 = vpop.f32.mrf.mxu0
        %v1617 = vadd.f32 %v1353, %v1616
        %v1618 = vpop.f32.mrf.mxu0
        %1619 = vdwg.mxu0
        %1620 = vmatpush.bf16.msra.mxu0 %v1527
        %1621 = vmatpush.bf16.msra.mxu0 %v1522
        %1622 = vmatpush.bf16.msra.mxu0 %v1517
        %1623 = vmatpush.bf16.msra.mxu0 %v1512
        %1624 = vmatpush.bf16.msra.mxu0 %v1507
        %1625 = vmatpush.bf16.msra.mxu0 %v1502
        %1626 = vmatpush.bf16.msra.mxu0 %v1497
        %1627 = vmatpush.bf16.msra.mxu0 %v1492
        %1628 = vmatmul.bf16.gmra.mxu0 %v1299
        %v1629 = vpop.f32.mrf.mxu0
        %v1630 = vadd.f32 %v1354, %v1629
        %v1631 = vpop.f32.mrf.mxu0
        %1632 = vdwg.mxu0
        %v1633 = vpack.c.bf16 %v1604, %v1604
        %v1634 = vmul.f32 %v1578, %v1259
        %v1635 = vmul.f32 %v1617, %v1260
        %v1636 = vadd.f32 %v1634, %v1635
        %v1637 = vpack.c.bf16 %v1636, %v1636
        %v1638 = vmul.f32 %v1591, %v1259
        %v1639 = vmul.f32 %v1630, %v1260
        %v1640 = vadd.f32 %v1638, %v1639
        %v1641 = vpack.c.bf16 %v1640, %v1640
        %vm1642 = vcmask 261120
        %v1644 = vsel %vm1642, %v1637, 0
        %v1647 = vsel %vm1642, %v1641, 0
        %1649 = vmatpush.bf16.xpose.msra.mxu0 0
        %1650 = vmatpush.bf16.xpose.msra.mxu0 0
        %1651 = vmatpush.bf16.xpose.msra.mxu0 0
        %1652 = vmatpush.bf16.xpose.msra.mxu0 0
        %1653 = vmatpush.bf16.xpose.msra.mxu0 0
        %1654 = vmatpush.bf16.xpose.msra.mxu0 0
        %1655 = vmatpush.bf16.xpose.msra.mxu0 0
        %1656 = vmatpush.bf16.xpose.msra.mxu0 %v1647
        %1657 = vmatmul.bf16.gmra.mxu0 %v1644
        %v1658 = vpop.f32.mrf.mxu0
        %v1659 = vadd.f32 %v1261, %v1658
        %v1660 = vpop.f32.mrf.mxu0
        %1661 = vdwg.mxu0
        %vm1662 = vcmask 64512
        %v1663 = vsel %vm1662, %v1659, -inf
        %1664 = vmax.xlane.f32.xlu0 %v1663
        %v1665 = vpop.xlane.xlu0 %1664
        %v1666 = vsub.f32 %v1659, %v1665
        %v1667 = vmul.f32 %v1666, 1.442695
        %v1668 = vpow.pop %v1667
        %v1669 = vsel %vm1662, %v1668, 0.0
        %1670 = vadd.xlane.f32.xlu0 %v1669
        %v1671 = vpop.xlane.xlu0 %1670
        %v1672 = vrcp.pop %v1671
        %v1673 = vmul.f32 %v1668, %v1672
        %v1674 = vpack.c.bf16 %v1673, %v1673
        %v1676 = vsel %vm1662, %v1674, 0
        %vm1678 = vcmask 1043456
        %v1680 = vsel %vm1678, %v1633, 0
        %1682 = vmatpush.bf16.msra.mxu0 0
        %1683 = vmatpush.bf16.msra.mxu0 0
        %1684 = vmatpush.bf16.msra.mxu0 0
        %1685 = vmatpush.bf16.msra.mxu0 0
        %1686 = vmatpush.bf16.msra.mxu0 0
        %1687 = vmatpush.bf16.msra.mxu0 0
        %1688 = vmatpush.bf16.msra.mxu0 0
        %1689 = vmatpush.bf16.msra.mxu0 %v1680
        %1690 = vmatmul.bf16.gmra.mxu0 %v1676
        %v1691 = vpop.f32.mrf.mxu0
        %v1692 = vadd.f32 0.0, %v1691
        %v1693 = vpop.f32.mrf.mxu0
        %1694 = vdwg.mxu0
        %v1696 = vunpack.c.l.b16 %v1637
        %v1697 = vpack.c.b16 %v1696, %v1696
        %1698 = vrot.lane.b32.xlu0 %v1697, 96
        %v1699 = vpop.permute.xlu0 %1698
        %v1701 = vunpack.c.l.b16 %v1641
        %v1702 = vpack.c.b16 %v1701, %v1701
        %1703 = vrot.lane.b32.xlu0 %v1702, 96
        %v1704 = vpop.permute.xlu0 %1703
        %v1706 = vsel %vm1642, %v1699, 0
        %v1709 = vsel %vm1642, %v1704, 0
        %1711 = vmatpush.bf16.xpose.msra.mxu0 0
        %1712 = vmatpush.bf16.xpose.msra.mxu0 0
        %1713 = vmatpush.bf16.xpose.msra.mxu0 0
        %1714 = vmatpush.bf16.xpose.msra.mxu0 0
        %1715 = vmatpush.bf16.xpose.msra.mxu0 0
        %1716 = vmatpush.bf16.xpose.msra.mxu0 0
        %1717 = vmatpush.bf16.xpose.msra.mxu0 0
        %1718 = vmatpush.bf16.xpose.msra.mxu0 %v1709
        %1719 = vmatmul.bf16.gmra.mxu0 %v1706
        %v1720 = vpop.f32.mrf.mxu0
        %v1721 = vadd.f32 %v1261, %v1720
        %v1722 = vpop.f32.mrf.mxu0
        %1723 = vdwg.mxu0
        %v1724 = vsel %vm1662, %v1721, -inf
        %1725 = vmax.xlane.f32.xlu0 %v1724
        %v1726 = vpop.xlane.xlu0 %1725
        %v1727 = vsub.f32 %v1721, %v1726
        %v1728 = vmul.f32 %v1727, 1.442695
        %v1729 = vpow.pop %v1728
        %v1730 = vsel %vm1662, %v1729, 0.0
        %1731 = vadd.xlane.f32.xlu0 %v1730
        %v1732 = vpop.xlane.xlu0 %1731
        %v1733 = vrcp.pop %v1732
        %v1734 = vmul.f32 %v1729, %v1733
        %v1735 = vpack.c.bf16 %v1734, %v1734
        %v1737 = vunpack.c.l.b16 %v1633
        %v1738 = vpack.c.b16 %v1737, %v1737
        %1739 = vrot.lane.b32.xlu0 %v1738, 96
        %v1740 = vpop.permute.xlu0 %1739
        %v1742 = vsel %vm1662, %v1735, 0
        %v1745 = vsel %vm1678, %v1740, 0
        %1747 = vmatpush.bf16.msra.mxu0 0
        %1748 = vmatpush.bf16.msra.mxu0 0
        %1749 = vmatpush.bf16.msra.mxu0 0
        %1750 = vmatpush.bf16.msra.mxu0 0
        %1751 = vmatpush.bf16.msra.mxu0 0
        %1752 = vmatpush.bf16.msra.mxu0 0
        %1753 = vmatpush.bf16.msra.mxu0 0
        %1754 = vmatpush.bf16.msra.mxu0 %v1745
        %1755 = vmatmul.bf16.gmra.mxu0 %v1742
        %v1756 = vpop.f32.mrf.mxu0
        %v1757 = vadd.f32 0.0, %v1756
        %v1758 = vpop.f32.mrf.mxu0
        %1759 = vdwg.mxu0
        %1760 = vrot.lane.b32.xlu0 %v1697, 64
        %v1761 = vpop.permute.xlu0 %1760
        %1762 = vrot.lane.b32.xlu0 %v1702, 64
        %v1763 = vpop.permute.xlu0 %1762
        %v1765 = vsel %vm1642, %v1761, 0
        %v1768 = vsel %vm1642, %v1763, 0
        %1770 = vmatpush.bf16.xpose.msra.mxu0 0
        %1771 = vmatpush.bf16.xpose.msra.mxu0 0
        %1772 = vmatpush.bf16.xpose.msra.mxu0 0
        %1773 = vmatpush.bf16.xpose.msra.mxu0 0
        %1774 = vmatpush.bf16.xpose.msra.mxu0 0
        %1775 = vmatpush.bf16.xpose.msra.mxu0 0
        %1776 = vmatpush.bf16.xpose.msra.mxu0 0
        %1777 = vmatpush.bf16.xpose.msra.mxu0 %v1768
        %1778 = vmatmul.bf16.gmra.mxu0 %v1765
        %v1779 = vpop.f32.mrf.mxu0
        %v1780 = vadd.f32 %v1261, %v1779
        %v1781 = vpop.f32.mrf.mxu0
        %1782 = vdwg.mxu0
        %v1783 = vsel %vm1662, %v1780, -inf
        %1784 = vmax.xlane.f32.xlu0 %v1783
        %v1785 = vpop.xlane.xlu0 %1784
        %v1786 = vsub.f32 %v1780, %v1785
        %v1787 = vmul.f32 %v1786, 1.442695
        %v1788 = vpow.pop %v1787
        %v1789 = vsel %vm1662, %v1788, 0.0
        %1790 = vadd.xlane.f32.xlu0 %v1789
        %v1791 = vpop.xlane.xlu0 %1790
        %v1792 = vrcp.pop %v1791
        %v1793 = vmul.f32 %v1788, %v1792
        %v1794 = vpack.c.bf16 %v1793, %v1793
        %1795 = vrot.lane.b32.xlu0 %v1738, 64
        %v1796 = vpop.permute.xlu0 %1795
        %v1798 = vsel %vm1662, %v1794, 0
        %v1801 = vsel %vm1678, %v1796, 0
        %1803 = vmatpush.bf16.msra.mxu0 0
        %1804 = vmatpush.bf16.msra.mxu0 0
        %1805 = vmatpush.bf16.msra.mxu0 0
        %1806 = vmatpush.bf16.msra.mxu0 0
        %1807 = vmatpush.bf16.msra.mxu0 0
        %1808 = vmatpush.bf16.msra.mxu0 0
        %1809 = vmatpush.bf16.msra.mxu0 0
        %1810 = vmatpush.bf16.msra.mxu0 %v1801
        %1811 = vmatmul.bf16.gmra.mxu0 %v1798
        %v1812 = vpop.f32.mrf.mxu0
        %v1813 = vadd.f32 0.0, %v1812
        %v1814 = vpop.f32.mrf.mxu0
        %1815 = vdwg.mxu0
        %1816 = vrot.lane.b32.xlu0 %v1697, 32
        %v1817 = vpop.permute.xlu0 %1816
        %1818 = vrot.lane.b32.xlu0 %v1702, 32
        %v1819 = vpop.permute.xlu0 %1818
        %v1821 = vsel %vm1642, %v1817, 0
        %v1824 = vsel %vm1642, %v1819, 0
        %1826 = vmatpush.bf16.xpose.msra.mxu0 0
        %1827 = vmatpush.bf16.xpose.msra.mxu0 0
        %1828 = vmatpush.bf16.xpose.msra.mxu0 0
        %1829 = vmatpush.bf16.xpose.msra.mxu0 0
        %1830 = vmatpush.bf16.xpose.msra.mxu0 0
        %1831 = vmatpush.bf16.xpose.msra.mxu0 0
        %1832 = vmatpush.bf16.xpose.msra.mxu0 0
        %1833 = vmatpush.bf16.xpose.msra.mxu0 %v1824
        %1834 = vmatmul.bf16.gmra.mxu0 %v1821
        %v1835 = vpop.f32.mrf.mxu0
        %v1836 = vadd.f32 %v1261, %v1835
        %v1837 = vpop.f32.mrf.mxu0
        %1838 = vdwg.mxu0
        %v1839 = vsel %vm1662, %v1836, -inf
        %1840 = vmax.xlane.f32.xlu0 %v1839
        %v1841 = vpop.xlane.xlu0 %1840
        %v1842 = vsub.f32 %v1836, %v1841
        %v1843 = vmul.f32 %v1842, 1.442695
        %v1844 = vpow.pop %v1843
        %v1845 = vsel %vm1662, %v1844, 0.0
        %1846 = vadd.xlane.f32.xlu0 %v1845
        %v1847 = vpop.xlane.xlu0 %1846
        %v1848 = vrcp.pop %v1847
        %v1849 = vmul.f32 %v1844, %v1848
        %v1850 = vpack.c.bf16 %v1849, %v1849
        %1851 = vrot.lane.b32.xlu0 %v1738, 32
        %v1852 = vpop.permute.xlu0 %1851
        %v1854 = vsel %vm1662, %v1850, 0
        %v1857 = vsel %vm1678, %v1852, 0
        %1859 = vmatpush.bf16.msra.mxu0 0
        %1860 = vmatpush.bf16.msra.mxu0 0
        %1861 = vmatpush.bf16.msra.mxu0 0
        %1862 = vmatpush.bf16.msra.mxu0 0
        %1863 = vmatpush.bf16.msra.mxu0 0
        %1864 = vmatpush.bf16.msra.mxu0 0
        %1865 = vmatpush.bf16.msra.mxu0 0
        %1866 = vmatpush.bf16.msra.mxu0 %v1857
        %1867 = vmatmul.bf16.gmra.mxu0 %v1854
        %v1868 = vpop.f32.mrf.mxu0
        %v1869 = vadd.f32 0.0, %v1868
        %v1870 = vpop.f32.mrf.mxu0
        %1871 = vdwg.mxu0
        %1873 = vrot.lane.b32.xlu0 %v1757, 32
        %v1874 = vpop.permute.xlu0 %1873
        %1877 = vrot.lane.b32.xlu0 %v1813, 64
        %v1878 = vpop.permute.xlu0 %1877
        %1881 = vrot.lane.b32.xlu0 %v1869, 96
        %v1882 = vpop.permute.xlu0 %1881
        %v1884 = vsel %vm1642, %v1692, %v1874
        %vm1885 = vcmask 523264
        %v1886 = vsel %vm1885, %v1884, %v1878
        %vm1887 = vcmask 785408
        %v1888 = vsel %vm1887, %v1886, %v1882
        %v1889 = vpack.c.bf16 %v1888, %v1888
        %v1890 = vld [vmem:[%s10] sm:$0xf]
        %v1891 = vld [vmem:[%s10 + $0x4] sm:$0xf]
        %v1892 = vld [vmem:[%s10 + $0x8] sm:$0xf]
        %v1893 = vld [vmem:[%s10 + $0xc] sm:$0xf]
        %v1894 = vld [vmem:[%s10 + $0x10] sm:$0xf]
        %v1895 = vld [vmem:[%s10 + $0x14] sm:$0xf]
        %v1896 = vld [vmem:[%s10 + $0x18] sm:$0xf]
        %v1897 = vld [vmem:[%s10 + $0x1c] sm:$0xf]
        %v1898 = vld [vmem:[%s10 + $0x20] sm:$0xf]
        %v1899 = vld [vmem:[%s10 + $0x24] sm:$0xf]
        %v1900 = vld [vmem:[%s10 + $0x28] sm:$0xf]
        %v1901 = vld [vmem:[%s10 + $0x2c] sm:$0xf]
        %v1902 = vld [vmem:[%s10 + $0x30] sm:$0xf]
        %v1903 = vld [vmem:[%s10 + $0x34] sm:$0xf]
        %v1904 = vld [vmem:[%s10 + $0x38] sm:$0xf]
        %v1905 = vld [vmem:[%s10 + $0x3c] sm:$0xf]
        %v1922 = vunpack.c.l.b16 %v1890
        %v1923 = vunpack.c.l.b16 %v1891
        %v1924 = vunpack.c.l.b16 %v1892
        %v1925 = vunpack.c.l.b16 %v1893
        %v1926 = vunpack.c.l.b16 %v1894
        %v1927 = vunpack.c.l.b16 %v1895
        %v1928 = vunpack.c.l.b16 %v1896
        %v1929 = vunpack.c.l.b16 %v1897
        %v1930 = vunpack.c.l.b16 %v1898
        %v1931 = vunpack.c.l.b16 %v1899
        %v1932 = vunpack.c.l.b16 %v1900
        %v1933 = vunpack.c.l.b16 %v1901
        %v1934 = vunpack.c.l.b16 %v1902
        %v1935 = vunpack.c.l.b16 %v1903
        %v1936 = vunpack.c.l.b16 %v1904
        %v1937 = vunpack.c.l.b16 %v1905
        %v1938 = vpack.c.b16 %v1923, %v1922
        %v1939 = vpack.c.b16 %v1925, %v1924
        %v1940 = vpack.c.b16 %v1927, %v1926
        %v1941 = vpack.c.b16 %v1929, %v1928
        %v1942 = vpack.c.b16 %v1931, %v1930
        %v1943 = vpack.c.b16 %v1933, %v1932
        %v1944 = vpack.c.b16 %v1935, %v1934
        %v1945 = vpack.c.b16 %v1937, %v1936
        %1954 = vmatpush.bf16.msra.mxu0 %v1945
        %1955 = vmatpush.bf16.msra.mxu0 %v1944
        %1956 = vmatpush.bf16.msra.mxu0 %v1943
        %1957 = vmatpush.bf16.msra.mxu0 %v1942
        %1958 = vmatpush.bf16.msra.mxu0 %v1941
        %1959 = vmatpush.bf16.msra.mxu0 %v1940
        %1960 = vmatpush.bf16.msra.mxu0 %v1939
        %1961 = vmatpush.bf16.msra.mxu0 %v1938
        %1962 = vmatmul.bf16.gmra.mxu0 %v1889
        %v1963 = vpop.f32.mrf.mxu0
        %v1964 = vadd.f32 0.0, %v1963
        %v1965 = vpop.f32.mrf.mxu0
        %1966 = vdwg.mxu0
        %v1967 = vadd.f32 %v1258, %v1964
        %v1968 = vld [vmem:[%s11] sm:$0x1]
        %v1970 = vperm.slane %v1968, 0
        %v1972 = vadd.f32 %v1967, %v1970
        %v1973 = vld [vmem:[%s12] sm:$0x1]
        %v1974 = vld [vmem:[%s13] sm:$0x1]
        %1975 = vadd.xlane.f32.xlu0 %v1972
        %v1976 = vpop.xlane.xlu0 %1975
        %v1977 = vmul.f32 %v1976, %v1272
        %v1978 = vsub.f32 %v1972, %v1977
        %v1979 = vmul.f32 %v1978, %v1978
        %1980 = vadd.xlane.f32.xlu0 %v1979
        %v1981 = vpop.xlane.xlu0 %1980
        %v1982 = vmul.f32 %v1981, %v1272
        %v1983 = vadd.f32 %v1982, 1e-06
        %v1984 = vrsqrt.pop %v1983
        %v1985 = vmul.f32 %v1984, %v1983
        %v1986 = vmul.f32 %v1985, %v1984
        %v1987 = vmul.f32 0.5, %v1986
        %v1988 = vsub.f32 1.5, %v1987
        %v1989 = vmul.f32 %v1984, %v1988
        %vm1990 = vweird.f32 %v1983
        %vm1991 = vweird.f32 %v1984
        %vm1992 = vmor %vm1990, %vm1991
        %v1993 = vsel %vm1992, %v1984, %v1989
        %v1994 = vmul.f32 %v1978, %v1993
        %v1996 = vperm.slane %v1973, 0
        %v1998 = vmul.f32 %v1994, %v1996
        %v2000 = vperm.slane %v1974, 0
        %v2002 = vadd.f32 %v1998, %v2000
        %v2003 = vpack.c.bf16 %v2002, %v2002
        %v2004 = vld [vmem:[#allocation3] sm:$0xff]
        %v2005 = vld [vmem:[#allocation3 + $0x8] sm:$0xff]
        %v2006 = vld [vmem:[#allocation3 + $0x10] sm:$0xff]
        %v2007 = vld [vmem:[#allocation3 + $0x18] sm:$0xff]
        %v2008 = vld [vmem:[#allocation3 + $0x20] sm:$0xff]
        %v2009 = vld [vmem:[#allocation3 + $0x28] sm:$0xff]
        %v2010 = vld [vmem:[#allocation3 + $0x30] sm:$0xff]
        %v2011 = vld [vmem:[#allocation3 + $0x38] sm:$0xff]
        %v2012 = vld [vmem:[#allocation3 + $0x40] sm:$0xff]
        %v2013 = vld [vmem:[#allocation3 + $0x48] sm:$0xff]
        %v2014 = vld [vmem:[#allocation3 + $0x50] sm:$0xff]
        %v2015 = vld [vmem:[#allocation3 + $0x58] sm:$0xff]
        %v2016 = vld [vmem:[#allocation3 + $0x60] sm:$0xff]
        %v2017 = vld [vmem:[#allocation3 + $0x68] sm:$0xff]
        %v2018 = vld [vmem:[#allocation3 + $0x70] sm:$0xff]
        %v2019 = vld [vmem:[#allocation3 + $0x78] sm:$0xff]
        %v2020 = vld [vmem:[%s15] sm:$0x3]
        %v2022 = vperm.slane %v2020, 0
        %v2023 = vperm.slane %v2020, 1
        %v2042 = vunpack.c.l.b16 %v2004
        %v2043 = vunpack.c.h.b16 %v2004
        %v2044 = vunpack.c.l.b16 %v2005
        %v2045 = vunpack.c.h.b16 %v2005
        %v2046 = vunpack.c.l.b16 %v2006
        %v2047 = vunpack.c.h.b16 %v2006
        %v2048 = vunpack.c.l.b16 %v2007
        %v2049 = vunpack.c.h.b16 %v2007
        %v2050 = vunpack.c.l.b16 %v2008
        %v2051 = vunpack.c.h.b16 %v2008
        %v2052 = vunpack.c.l.b16 %v2009
        %v2053 = vunpack.c.h.b16 %v2009
        %v2054 = vunpack.c.l.b16 %v2010
        %v2055 = vunpack.c.h.b16 %v2010
        %v2056 = vunpack.c.l.b16 %v2011
        %v2057 = vunpack.c.h.b16 %v2011
        %v2058 = vunpack.c.l.b16 %v2012
        %v2059 = vunpack.c.h.b16 %v2012
        %v2060 = vunpack.c.l.b16 %v2013
        %v2061 = vunpack.c.h.b16 %v2013
        %v2062 = vunpack.c.l.b16 %v2014
        %v2063 = vunpack.c.h.b16 %v2014
        %v2064 = vunpack.c.l.b16 %v2015
        %v2065 = vunpack.c.h.b16 %v2015
        %v2066 = vunpack.c.l.b16 %v2016
        %v2067 = vunpack.c.h.b16 %v2016
        %v2068 = vunpack.c.l.b16 %v2017
        %v2069 = vunpack.c.h.b16 %v2017
        %v2070 = vunpack.c.l.b16 %v2018
        %v2071 = vunpack.c.h.b16 %v2018
        %v2072 = vunpack.c.l.b16 %v2019
        %v2073 = vunpack.c.h.b16 %v2019
        %v2074 = vpack.c.b16 %v2044, %v2042
        %v2075 = vpack.c.b16 %v2045, %v2043
        %v2076 = vpack.c.b16 %v2048, %v2046
        %v2077 = vpack.c.b16 %v2049, %v2047
        %v2078 = vpack.c.b16 %v2052, %v2050
        %v2079 = vpack.c.b16 %v2053, %v2051
        %v2080 = vpack.c.b16 %v2056, %v2054
        %v2081 = vpack.c.b16 %v2057, %v2055
        %v2082 = vpack.c.b16 %v2060, %v2058
        %v2083 = vpack.c.b16 %v2061, %v2059
        %v2084 = vpack.c.b16 %v2064, %v2062
        %v2085 = vpack.c.b16 %v2065, %v2063
        %v2086 = vpack.c.b16 %v2068, %v2066
        %v2087 = vpack.c.b16 %v2069, %v2067
        %v2088 = vpack.c.b16 %v2072, %v2070
        %v2089 = vpack.c.b16 %v2073, %v2071
        %2106 = vmatpush.bf16.msra.mxu0 %v2088
        %2107 = vmatpush.bf16.msra.mxu0 %v2086
        %2108 = vmatpush.bf16.msra.mxu0 %v2084
        %2109 = vmatpush.bf16.msra.mxu0 %v2082
        %2110 = vmatpush.bf16.msra.mxu0 %v2080
        %2111 = vmatpush.bf16.msra.mxu0 %v2078
        %2112 = vmatpush.bf16.msra.mxu0 %v2076
        %2113 = vmatpush.bf16.msra.mxu0 %v2074
        %2114 = vmatmul.bf16.gmra.mxu0 %v2003
        %v2115 = vpop.f32.mrf.mxu0
        %v2116 = vadd.f32 %v2022, %v2115
        %v2117 = vpop.f32.mrf.mxu0
        %2118 = vdwg.mxu0
        %2119 = vmatpush.bf16.msra.mxu0 %v2089
        %2120 = vmatpush.bf16.msra.mxu0 %v2087
        %2121 = vmatpush.bf16.msra.mxu0 %v2085
        %2122 = vmatpush.bf16.msra.mxu0 %v2083
        %2123 = vmatpush.bf16.msra.mxu0 %v2081
        %2124 = vmatpush.bf16.msra.mxu0 %v2079
        %2125 = vmatpush.bf16.msra.mxu0 %v2077
        %2126 = vmatpush.bf16.msra.mxu0 %v2075
        %2127 = vmatmul.bf16.gmra.mxu0 %v2003
        %v2128 = vpop.f32.mrf.mxu0
        %v2129 = vadd.f32 %v2023, %v2128
        %v2130 = vpop.f32.mrf.mxu0
        %2131 = vdwg.mxu0
        %v2132 = vxor.u32 %v2116, 2147483648
        %v2133 = vmul.f32 %v2132, 1.442695
        %v2134 = vpow.pop %v2133
        %v2135 = vadd.f32 %v2134, 1.0
        %v2136 = vrcp.pop %v2135
        %v2137 = vmul.f32 %v2135, %v2136
        %v2138 = vsub.f32 1.0, %v2137
        %v2139 = vmul.f32 %v2136, %v2138
        %v2140 = vadd.f32 %v2136, %v2139
        %vm2141 = vweird.f32 %v2135
        %vm2142 = vweird.f32 %v2136
        %vm2143 = vmor %vm2141, %vm2142
        %v2144 = vsel %vm2143, %v2136, %v2140
        %v2145 = vand.u32 2147483647, %v2135
        %vm2146 = vcmp.eq.f32.partialorder %v2145, 8.507059e+37
        %v2147 = vand.u32 %v2135, 2147483648
        %v2148 = vor.u32 1.1754944e-38, %v2147
        %v2149 = vsel %vm2146, %v2148, %v2144
        %v2150 = vmul.f32 1.0, %v2149
        %v2151 = vmul.f32 %v2116, %v2150
        %v2152 = vmul.f32 %v2151, %v2129
        %v2153 = vld [vmem:[%s16] sm:$0x1]
        %v2154 = vld [vmem:[%s17] sm:$0x1]
        %2155 = vadd.xlane.f32.xlu0 %v2152
        %v2156 = vpop.xlane.xlu0 %2155
        %v2157 = vmul.f32 %v2156, %v1272
        %v2158 = vsub.f32 %v2152, %v2157
        %v2159 = vmul.f32 %v2158, %v2158
        %2160 = vadd.xlane.f32.xlu0 %v2159
        %v2161 = vpop.xlane.xlu0 %2160
        %v2162 = vmul.f32 %v2161, %v1272
        %v2163 = vadd.f32 %v2162, 1e-06
        %v2164 = vrsqrt.pop %v2163
        %v2165 = vmul.f32 %v2164, %v2163
        %v2166 = vmul.f32 %v2165, %v2164
        %v2167 = vmul.f32 0.5, %v2166
        %v2168 = vsub.f32 1.5, %v2167
        %v2169 = vmul.f32 %v2164, %v2168
        %vm2170 = vweird.f32 %v2163
        %vm2171 = vweird.f32 %v2164
        %vm2172 = vmor %vm2170, %vm2171
        %v2173 = vsel %vm2172, %v2164, %v2169
        %v2174 = vmul.f32 %v2158, %v2173
        %v2176 = vperm.slane %v2153, 0
        %v2178 = vmul.f32 %v2174, %v2176
        %v2180 = vperm.slane %v2154, 0
        %v2182 = vadd.f32 %v2178, %v2180
        %v2183 = vpack.c.bf16 %v2182, %v2182
        %v2184 = vld [vmem:[#allocation5] sm:$0xf]
        %v2185 = vld [vmem:[#allocation5 + $0x4] sm:$0xf]
        %v2186 = vld [vmem:[#allocation5 + $0x8] sm:$0xf]
        %v2187 = vld [vmem:[#allocation5 + $0xc] sm:$0xf]
        %v2188 = vld [vmem:[#allocation5 + $0x10] sm:$0xf]
        %v2189 = vld [vmem:[#allocation5 + $0x14] sm:$0xf]
        %v2190 = vld [vmem:[#allocation5 + $0x18] sm:$0xf]
        %v2191 = vld [vmem:[#allocation5 + $0x1c] sm:$0xf]
        %v2192 = vld [vmem:[#allocation5 + $0x20] sm:$0xf]
        %v2193 = vld [vmem:[#allocation5 + $0x24] sm:$0xf]
        %v2194 = vld [vmem:[#allocation5 + $0x28] sm:$0xf]
        %v2195 = vld [vmem:[#allocation5 + $0x2c] sm:$0xf]
        %v2196 = vld [vmem:[#allocation5 + $0x30] sm:$0xf]
        %v2197 = vld [vmem:[#allocation5 + $0x34] sm:$0xf]
        %v2198 = vld [vmem:[#allocation5 + $0x38] sm:$0xf]
        %v2199 = vld [vmem:[#allocation5 + $0x3c] sm:$0xf]
        %v2216 = vunpack.c.l.b16 %v2184
        %v2217 = vunpack.c.l.b16 %v2185
        %v2218 = vunpack.c.l.b16 %v2186
        %v2219 = vunpack.c.l.b16 %v2187
        %v2220 = vunpack.c.l.b16 %v2188
        %v2221 = vunpack.c.l.b16 %v2189
        %v2222 = vunpack.c.l.b16 %v2190
        %v2223 = vunpack.c.l.b16 %v2191
        %v2224 = vunpack.c.l.b16 %v2192
        %v2225 = vunpack.c.l.b16 %v2193
        %v2226 = vunpack.c.l.b16 %v2194
        %v2227 = vunpack.c.l.b16 %v2195
        %v2228 = vunpack.c.l.b16 %v2196
        %v2229 = vunpack.c.l.b16 %v2197
        %v2230 = vunpack.c.l.b16 %v2198
        %v2231 = vunpack.c.l.b16 %v2199
        %v2232 = vpack.c.b16 %v2217, %v2216
        %v2233 = vpack.c.b16 %v2219, %v2218
        %v2234 = vpack.c.b16 %v2221, %v2220
        %v2235 = vpack.c.b16 %v2223, %v2222
        %v2236 = vpack.c.b16 %v2225, %v2224
        %v2237 = vpack.c.b16 %v2227, %v2226
        %v2238 = vpack.c.b16 %v2229, %v2228
        %v2239 = vpack.c.b16 %v2231, %v2230
        %2248 = vmatpush.bf16.msra.mxu0 %v2239
        %2249 = vmatpush.bf16.msra.mxu0 %v2238
        %2250 = vmatpush.bf16.msra.mxu0 %v2237
        %2251 = vmatpush.bf16.msra.mxu0 %v2236
        %2252 = vmatpush.bf16.msra.mxu0 %v2235
        %2253 = vmatpush.bf16.msra.mxu0 %v2234
        %2254 = vmatpush.bf16.msra.mxu0 %v2233
        %2255 = vmatpush.bf16.msra.mxu0 %v2232
        %2256 = vmatmul.bf16.gmra.mxu0 %v2183
        %v2257 = vpop.f32.mrf.mxu0
        %v2258 = vadd.f32 0.0, %v2257
        %v2259 = vpop.f32.mrf.mxu0
        %2260 = vdwg.mxu0
        %v2261 = vadd.f32 %v1972, %v2258
        %v2262 = vld [vmem:[%s19] sm:$0x1]
        %v2264 = vperm.slane %v2262, 0
        %v2266 = vadd.f32 %v2261, %v2264
        %s2267 = scalar_lea.vmem %s6, 1
        %v2268 = vld [vmem:[%s2267] sm:$0x1]
        %s2269 = scalar_lea.vmem %s7, 1
        %v2270 = vld [vmem:[%s2269] sm:$0x1]
        %2271 = vadd.xlane.f32.xlu0 %v2266
        %v2272 = vpop.xlane.xlu0 %2271
        %v2273 = vmul.f32 %v2272, %v1272
        %v2274 = vsub.f32 %v2266, %v2273
        %v2275 = vmul.f32 %v2274, %v2274
        %2276 = vadd.xlane.f32.xlu0 %v2275
        %v2277 = vpop.xlane.xlu0 %2276
        %v2278 = vmul.f32 %v2277, %v1272
        %v2279 = vadd.f32 %v2278, 1e-06
        %v2280 = vrsqrt.pop %v2279
        %v2281 = vmul.f32 %v2280, %v2279
        %v2282 = vmul.f32 %v2281, %v2280
        %v2283 = vmul.f32 0.5, %v2282
        %v2284 = vsub.f32 1.5, %v2283
        %v2285 = vmul.f32 %v2280, %v2284
        %vm2286 = vweird.f32 %v2279
        %vm2287 = vweird.f32 %v2280
        %vm2288 = vmor %vm2286, %vm2287
        %v2289 = vsel %vm2288, %v2280, %v2285
        %v2290 = vmul.f32 %v2274, %v2289
        %v2292 = vperm.slane %v2268, 0
        %v2294 = vmul.f32 %v2290, %v2292
        %v2296 = vperm.slane %v2270, 0
        %v2298 = vadd.f32 %v2294, %v2296
        %v2299 = vpack.c.bf16 %v2298, %v2298
        %s2300 = scalar_lea.vmem %s8, 320
        %v2301 = vld [vmem:[%s2300] sm:$0xff]
        %v2302 = vld [vmem:[%s2300 + $0x8] sm:$0xff]
        %v2303 = vld [vmem:[%s2300 + $0x10] sm:$0xf]
        %v2304 = vld [vmem:[%s2300 + $0x14] sm:$0xff]
        %v2305 = vld [vmem:[%s2300 + $0x1c] sm:$0xff]
        %v2306 = vld [vmem:[%s2300 + $0x24] sm:$0xf]
        %v2307 = vld [vmem:[%s2300 + $0x28] sm:$0xff]
        %v2308 = vld [vmem:[%s2300 + $0x30] sm:$0xff]
        %v2309 = vld [vmem:[%s2300 + $0x38] sm:$0xf]
        %v2310 = vld [vmem:[%s2300 + $0x3c] sm:$0xff]
        %v2311 = vld [vmem:[%s2300 + $0x44] sm:$0xff]
        %v2312 = vld [vmem:[%s2300 + $0x4c] sm:$0xf]
        %v2313 = vld [vmem:[%s2300 + $0x50] sm:$0xff]
        %v2314 = vld [vmem:[%s2300 + $0x58] sm:$0xff]
        %v2315 = vld [vmem:[%s2300 + $0x60] sm:$0xf]
        %v2316 = vld [vmem:[%s2300 + $0x64] sm:$0xff]
        %v2317 = vld [vmem:[%s2300 + $0x6c] sm:$0xff]
        %v2318 = vld [vmem:[%s2300 + $0x74] sm:$0xf]
        %v2319 = vld [vmem:[%s2300 + $0x78] sm:$0xff]
        %v2320 = vld [vmem:[%s2300 + $0x80] sm:$0xff]
        %v2321 = vld [vmem:[%s2300 + $0x88] sm:$0xf]
        %v2322 = vld [vmem:[%s2300 + $0x8c] sm:$0xff]
        %v2323 = vld [vmem:[%s2300 + $0x94] sm:$0xff]
        %v2324 = vld [vmem:[%s2300 + $0x9c] sm:$0xf]
        %v2325 = vld [vmem:[%s2300 + $0xa0] sm:$0xff]
        %v2326 = vld [vmem:[%s2300 + $0xa8] sm:$0xff]
        %v2327 = vld [vmem:[%s2300 + $0xb0] sm:$0xf]
        %v2328 = vld [vmem:[%s2300 + $0xb4] sm:$0xff]
        %v2329 = vld [vmem:[%s2300 + $0xbc] sm:$0xff]
        %v2330 = vld [vmem:[%s2300 + $0xc4] sm:$0xf]
        %v2331 = vld [vmem:[%s2300 + $0xc8] sm:$0xff]
        %v2332 = vld [vmem:[%s2300 + $0xd0] sm:$0xff]
        %v2333 = vld [vmem:[%s2300 + $0xd8] sm:$0xf]
        %v2334 = vld [vmem:[%s2300 + $0xdc] sm:$0xff]
        %v2335 = vld [vmem:[%s2300 + $0xe4] sm:$0xff]
        %v2336 = vld [vmem:[%s2300 + $0xec] sm:$0xf]
        %v2337 = vld [vmem:[%s2300 + $0xf0] sm:$0xff]
        %v2338 = vld [vmem:[%s2300 + $0xf8] sm:$0xff]
        %v2339 = vld [vmem:[%s2300 + $0x100] sm:$0xf]
        %v2340 = vld [vmem:[%s2300 + $0x104] sm:$0xff]
        %v2341 = vld [vmem:[%s2300 + $0x10c] sm:$0xff]
        %v2342 = vld [vmem:[%s2300 + $0x114] sm:$0xf]
        %v2343 = vld [vmem:[%s2300 + $0x118] sm:$0xff]
        %v2344 = vld [vmem:[%s2300 + $0x120] sm:$0xff]
        %v2345 = vld [vmem:[%s2300 + $0x128] sm:$0xf]
        %v2346 = vld [vmem:[%s2300 + $0x12c] sm:$0xff]
        %v2347 = vld [vmem:[%s2300 + $0x134] sm:$0xff]
        %v2348 = vld [vmem:[%s2300 + $0x13c] sm:$0xf]
        %s2349 = scalar_lea.vmem %s9, 5
        %v2350 = vld [vmem:[%s2349] sm:$0x1f]
        %v2352 = vperm.slane %v2350, 0
        %v2353 = vperm.slane %v2350, 1
        %v2354 = vperm.slane %v2350, 2
        %v2355 = vperm.slane %v2350, 3
        %v2356 = vperm.slane %v2350, 4
        %v2410 = vunpack.c.l.b16 %v2301
        %v2411 = vunpack.c.h.b16 %v2301
        %v2412 = vunpack.c.l.b16 %v2302
        %v2413 = vunpack.c.h.b16 %v2302
        %v2414 = vunpack.c.l.b16 %v2303
        %v2415 = vunpack.c.l.b16 %v2304
        %v2416 = vunpack.c.h.b16 %v2304
        %v2417 = vunpack.c.l.b16 %v2305
        %v2418 = vunpack.c.h.b16 %v2305
        %v2419 = vunpack.c.l.b16 %v2306
        %v2420 = vunpack.c.l.b16 %v2307
        %v2421 = vunpack.c.h.b16 %v2307
        %v2422 = vunpack.c.l.b16 %v2308
        %v2423 = vunpack.c.h.b16 %v2308
        %v2424 = vunpack.c.l.b16 %v2309
        %v2425 = vunpack.c.l.b16 %v2310
        %v2426 = vunpack.c.h.b16 %v2310
        %v2427 = vunpack.c.l.b16 %v2311
        %v2428 = vunpack.c.h.b16 %v2311
        %v2429 = vunpack.c.l.b16 %v2312
        %v2430 = vunpack.c.l.b16 %v2313
        %v2431 = vunpack.c.h.b16 %v2313
        %v2432 = vunpack.c.l.b16 %v2314
        %v2433 = vunpack.c.h.b16 %v2314
        %v2434 = vunpack.c.l.b16 %v2315
        %v2435 = vunpack.c.l.b16 %v2316
        %v2436 = vunpack.c.h.b16 %v2316
        %v2437 = vunpack.c.l.b16 %v2317
        %v2438 = vunpack.c.h.b16 %v2317
        %v2439 = vunpack.c.l.b16 %v2318
        %v2440 = vunpack.c.l.b16 %v2319
        %v2441 = vunpack.c.h.b16 %v2319
        %v2442 = vunpack.c.l.b16 %v2320
        %v2443 = vunpack.c.h.b16 %v2320
        %v2444 = vunpack.c.l.b16 %v2321
        %v2445 = vunpack.c.l.b16 %v2322
        %v2446 = vunpack.c.h.b16 %v2322
        %v2447 = vunpack.c.l.b16 %v2323
        %v2448 = vunpack.c.h.b16 %v2323
        %v2449 = vunpack.c.l.b16 %v2324
        %v2450 = vunpack.c.l.b16 %v2325
        %v2451 = vunpack.c.h.b16 %v2325
        %v2452 = vunpack.c.l.b16 %v2326
        %v2453 = vunpack.c.h.b16 %v2326
        %v2454 = vunpack.c.l.b16 %v2327
        %v2455 = vunpack.c.l.b16 %v2328
        %v2456 = vunpack.c.h.b16 %v2328
        %v2457 = vunpack.c.l.b16 %v2329
        %v2458 = vunpack.c.h.b16 %v2329
        %v2459 = vunpack.c.l.b16 %v2330
        %v2460 = vunpack.c.l.b16 %v2331
        %v2461 = vunpack.c.h.b16 %v2331
        %v2462 = vunpack.c.l.b16 %v2332
        %v2463 = vunpack.c.h.b16 %v2332
        %v2464 = vunpack.c.l.b16 %v2333
        %v2465 = vunpack.c.l.b16 %v2334
        %v2466 = vunpack.c.h.b16 %v2334
        %v2467 = vunpack.c.l.b16 %v2335
        %v2468 = vunpack.c.h.b16 %v2335
        %v2469 = vunpack.c.l.b16 %v2336
        %v2470 = vunpack.c.l.b16 %v2337
        %v2471 = vunpack.c.h.b16 %v2337
        %v2472 = vunpack.c.l.b16 %v2338
        %v2473 = vunpack.c.h.b16 %v2338
        %v2474 = vunpack.c.l.b16 %v2339
        %v2475 = vunpack.c.l.b16 %v2340
        %v2476 = vunpack.c.h.b16 %v2340
        %v2477 = vunpack.c.l.b16 %v2341
        %v2478 = vunpack.c.h.b16 %v2341
        %v2479 = vunpack.c.l.b16 %v2342
        %v2480 = vunpack.c.l.b16 %v2343
        %v2481 = vunpack.c.h.b16 %v2343
        %v2482 = vunpack.c.l.b16 %v2344
        %v2483 = vunpack.c.h.b16 %v2344
        %v2484 = vunpack.c.l.b16 %v2345
        %v2485 = vunpack.c.l.b16 %v2346
        %v2486 = vunpack.c.h.b16 %v2346
        %v2487 = vunpack.c.l.b16 %v2347
        %v2488 = vunpack.c.h.b16 %v2347
        %v2489 = vunpack.c.l.b16 %v2348
        %v2490 = vpack.c.b16 %v2415, %v2410
        %v2491 = vpack.c.b16 %v2416, %v2411
        %v2492 = vpack.c.b16 %v2417, %v2412
        %v2493 = vpack.c.b16 %v2418, %v2413
        %v2494 = vpack.c.b16 %v2419, %v2414
        %v2495 = vpack.c.b16 %v2425, %v2420
        %v2496 = vpack.c.b16 %v2426, %v2421
        %v2497 = vpack.c.b16 %v2427, %v2422
        %v2498 = vpack.c.b16 %v2428, %v2423
        %v2499 = vpack.c.b16 %v2429, %v2424
        %v2500 = vpack.c.b16 %v2435, %v2430
        %v2501 = vpack.c.b16 %v2436, %v2431
        %v2502 = vpack.c.b16 %v2437, %v2432
        %v2503 = vpack.c.b16 %v2438, %v2433
        %v2504 = vpack.c.b16 %v2439, %v2434
        %v2505 = vpack.c.b16 %v2445, %v2440
        %v2506 = vpack.c.b16 %v2446, %v2441
        %v2507 = vpack.c.b16 %v2447, %v2442
        %v2508 = vpack.c.b16 %v2448, %v2443
        %v2509 = vpack.c.b16 %v2449, %v2444
        %v2510 = vpack.c.b16 %v2455, %v2450
        %v2511 = vpack.c.b16 %v2456, %v2451
        %v2512 = vpack.c.b16 %v2457, %v2452
        %v2513 = vpack.c.b16 %v2458, %v2453
        %v2514 = vpack.c.b16 %v2459, %v2454
        %v2515 = vpack.c.b16 %v2465, %v2460
        %v2516 = vpack.c.b16 %v2466, %v2461
        %v2517 = vpack.c.b16 %v2467, %v2462
        %v2518 = vpack.c.b16 %v2468, %v2463
        %v2519 = vpack.c.b16 %v2469, %v2464
        %v2520 = vpack.c.b16 %v2475, %v2470
        %v2521 = vpack.c.b16 %v2476, %v2471
        %v2522 = vpack.c.b16 %v2477, %v2472
        %v2523 = vpack.c.b16 %v2478, %v2473
        %v2524 = vpack.c.b16 %v2479, %v2474
        %v2525 = vpack.c.b16 %v2485, %v2480
        %v2526 = vpack.c.b16 %v2486, %v2481
        %v2527 = vpack.c.b16 %v2487, %v2482
        %v2528 = vpack.c.b16 %v2488, %v2483
        %v2529 = vpack.c.b16 %v2489, %v2484
        %2570 = vmatpush.bf16.msra.mxu0 %v2525
        %2571 = vmatpush.bf16.msra.mxu0 %v2520
        %2572 = vmatpush.bf16.msra.mxu0 %v2515
        %2573 = vmatpush.bf16.msra.mxu0 %v2510
        %2574 = vmatpush.bf16.msra.mxu0 %v2505
        %2575 = vmatpush.bf16.msra.mxu0 %v2500
        %2576 = vmatpush.bf16.msra.mxu0 %v2495
        %2577 = vmatpush.bf16.msra.mxu0 %v2490
        %2578 = vmatmul.bf16.gmra.mxu0 %v2299
        %v2579 = vpop.f32.mrf.mxu0
        %v2580 = vadd.f32 %v2352, %v2579
        %v2581 = vpop.f32.mrf.mxu0
        %2582 = vdwg.mxu0
        %2583 = vmatpush.bf16.msra.mxu0 %v2526
        %2584 = vmatpush.bf16.msra.mxu0 %v2521
        %2585 = vmatpush.bf16.msra.mxu0 %v2516
        %2586 = vmatpush.bf16.msra.mxu0 %v2511
        %2587 = vmatpush.bf16.msra.mxu0 %v2506
        %2588 = vmatpush.bf16.msra.mxu0 %v2501
        %2589 = vmatpush.bf16.msra.mxu0 %v2496
        %2590 = vmatpush.bf16.msra.mxu0 %v2491
        %2591 = vmatmul.bf16.gmra.mxu0 %v2299
        %v2592 = vpop.f32.mrf.mxu0
        %v2593 = vadd.f32 %v2353, %v2592
        %v2594 = vpop.f32.mrf.mxu0
        %2595 = vdwg.mxu0
        %2596 = vmatpush.bf16.msra.mxu0 %v2527
        %2597 = vmatpush.bf16.msra.mxu0 %v2522
        %2598 = vmatpush.bf16.msra.mxu0 %v2517
        %2599 = vmatpush.bf16.msra.mxu0 %v2512
        %2600 = vmatpush.bf16.msra.mxu0 %v2507
        %2601 = vmatpush.bf16.msra.mxu0 %v2502
        %2602 = vmatpush.bf16.msra.mxu0 %v2497
        %2603 = vmatpush.bf16.msra.mxu0 %v2492
        %2604 = vmatmul.bf16.gmra.mxu0 %v2299
        %v2605 = vpop.f32.mrf.mxu0
        %v2606 = vadd.f32 %v2354, %v2605
        %v2607 = vpop.f32.mrf.mxu0
        %2608 = vdwg.mxu0
        %2609 = vmatpush.bf16.msra.mxu0 %v2528
        %2610 = vmatpush.bf16.msra.mxu0 %v2523
        %2611 = vmatpush.bf16.msra.mxu0 %v2518
        %2612 = vmatpush.bf16.msra.mxu0 %v2513
        %2613 = vmatpush.bf16.msra.mxu0 %v2508
        %2614 = vmatpush.bf16.msra.mxu0 %v2503
        %2615 = vmatpush.bf16.msra.mxu0 %v2498
        %2616 = vmatpush.bf16.msra.mxu0 %v2493
        %2617 = vmatmul.bf16.gmra.mxu0 %v2299
        %v2618 = vpop.f32.mrf.mxu0
        %v2619 = vadd.f32 %v2355, %v2618
        %v2620 = vpop.f32.mrf.mxu0
        %2621 = vdwg.mxu0
        %2622 = vmatpush.bf16.msra.mxu0 %v2529
        %2623 = vmatpush.bf16.msra.mxu0 %v2524
        %2624 = vmatpush.bf16.msra.mxu0 %v2519
        %2625 = vmatpush.bf16.msra.mxu0 %v2514
        %2626 = vmatpush.bf16.msra.mxu0 %v2509
        %2627 = vmatpush.bf16.msra.mxu0 %v2504
        %2628 = vmatpush.bf16.msra.mxu0 %v2499
        %2629 = vmatpush.bf16.msra.mxu0 %v2494
        %2630 = vmatmul.bf16.gmra.mxu0 %v2299
        %v2631 = vpop.f32.mrf.mxu0
        %v2632 = vadd.f32 %v2356, %v2631
        %v2633 = vpop.f32.mrf.mxu0
        %2634 = vdwg.mxu0
        %v2635 = vpack.c.bf16 %v2606, %v2606
        %v2636 = vmul.f32 %v2580, %v1259
        %v2637 = vmul.f32 %v2619, %v1260
        %v2638 = vadd.f32 %v2636, %v2637
        %v2639 = vpack.c.bf16 %v2638, %v2638
        %v2640 = vmul.f32 %v2593, %v1259
        %v2641 = vmul.f32 %v2632, %v1260
        %v2642 = vadd.f32 %v2640, %v2641
        %v2643 = vpack.c.bf16 %v2642, %v2642
        %v2645 = vsel %vm1642, %v2639, 0
        %v2648 = vsel %vm1642, %v2643, 0
        %2650 = vmatpush.bf16.xpose.msra.mxu0 0
        %2651 = vmatpush.bf16.xpose.msra.mxu0 0
        %2652 = vmatpush.bf16.xpose.msra.mxu0 0
        %2653 = vmatpush.bf16.xpose.msra.mxu0 0
        %2654 = vmatpush.bf16.xpose.msra.mxu0 0
        %2655 = vmatpush.bf16.xpose.msra.mxu0 0
        %2656 = vmatpush.bf16.xpose.msra.mxu0 0
        %2657 = vmatpush.bf16.xpose.msra.mxu0 %v2648
        %2658 = vmatmul.bf16.gmra.mxu0 %v2645
        %v2659 = vpop.f32.mrf.mxu0
        %v2660 = vadd.f32 %v1261, %v2659
        %v2661 = vpop.f32.mrf.mxu0
        %2662 = vdwg.mxu0
        %v2663 = vsel %vm1662, %v2660, -inf
        %2664 = vmax.xlane.f32.xlu0 %v2663
        %v2665 = vpop.xlane.xlu0 %2664
        %v2666 = vsub.f32 %v2660, %v2665
        %v2667 = vmul.f32 %v2666, 1.442695
        %v2668 = vpow.pop %v2667
        %v2669 = vsel %vm1662, %v2668, 0.0
        %2670 = vadd.xlane.f32.xlu0 %v2669
        %v2671 = vpop.xlane.xlu0 %2670
        %v2672 = vrcp.pop %v2671
        %v2673 = vmul.f32 %v2668, %v2672
        %v2674 = vpack.c.bf16 %v2673, %v2673
        %v2676 = vsel %vm1662, %v2674, 0
        %v2679 = vsel %vm1678, %v2635, 0
        %2681 = vmatpush.bf16.msra.mxu0 0
        %2682 = vmatpush.bf16.msra.mxu0 0
        %2683 = vmatpush.bf16.msra.mxu0 0
        %2684 = vmatpush.bf16.msra.mxu0 0
        %2685 = vmatpush.bf16.msra.mxu0 0
        %2686 = vmatpush.bf16.msra.mxu0 0
        %2687 = vmatpush.bf16.msra.mxu0 0
        %2688 = vmatpush.bf16.msra.mxu0 %v2679
        %2689 = vmatmul.bf16.gmra.mxu0 %v2676
        %v2690 = vpop.f32.mrf.mxu0
        %v2691 = vadd.f32 0.0, %v2690
        %v2692 = vpop.f32.mrf.mxu0
        %2693 = vdwg.mxu0
        %v2695 = vunpack.c.l.b16 %v2639
        %v2696 = vpack.c.b16 %v2695, %v2695
        %2697 = vrot.lane.b32.xlu0 %v2696, 96
        %v2698 = vpop.permute.xlu0 %2697
        %v2700 = vunpack.c.l.b16 %v2643
        %v2701 = vpack.c.b16 %v2700, %v2700
        %2702 = vrot.lane.b32.xlu0 %v2701, 96
        %v2703 = vpop.permute.xlu0 %2702
        %v2705 = vsel %vm1642, %v2698, 0
        %v2708 = vsel %vm1642, %v2703, 0
        %2710 = vmatpush.bf16.xpose.msra.mxu0 0
        %2711 = vmatpush.bf16.xpose.msra.mxu0 0
        %2712 = vmatpush.bf16.xpose.msra.mxu0 0
        %2713 = vmatpush.bf16.xpose.msra.mxu0 0
        %2714 = vmatpush.bf16.xpose.msra.mxu0 0
        %2715 = vmatpush.bf16.xpose.msra.mxu0 0
        %2716 = vmatpush.bf16.xpose.msra.mxu0 0
        %2717 = vmatpush.bf16.xpose.msra.mxu0 %v2708
        %2718 = vmatmul.bf16.gmra.mxu0 %v2705
        %v2719 = vpop.f32.mrf.mxu0
        %v2720 = vadd.f32 %v1261, %v2719
        %v2721 = vpop.f32.mrf.mxu0
        %2722 = vdwg.mxu0
        %v2723 = vsel %vm1662, %v2720, -inf
        %2724 = vmax.xlane.f32.xlu0 %v2723
        %v2725 = vpop.xlane.xlu0 %2724
        %v2726 = vsub.f32 %v2720, %v2725
        %v2727 = vmul.f32 %v2726, 1.442695
        %v2728 = vpow.pop %v2727
        %v2729 = vsel %vm1662, %v2728, 0.0
        %2730 = vadd.xlane.f32.xlu0 %v2729
        %v2731 = vpop.xlane.xlu0 %2730
        %v2732 = vrcp.pop %v2731
        %v2733 = vmul.f32 %v2728, %v2732
        %v2734 = vpack.c.bf16 %v2733, %v2733
        %v2736 = vunpack.c.l.b16 %v2635
        %v2737 = vpack.c.b16 %v2736, %v2736
        %2738 = vrot.lane.b32.xlu0 %v2737, 96
        %v2739 = vpop.permute.xlu0 %2738
        %v2741 = vsel %vm1662, %v2734, 0
        %v2744 = vsel %vm1678, %v2739, 0
        %2746 = vmatpush.bf16.msra.mxu0 0
        %2747 = vmatpush.bf16.msra.mxu0 0
        %2748 = vmatpush.bf16.msra.mxu0 0
        %2749 = vmatpush.bf16.msra.mxu0 0
        %2750 = vmatpush.bf16.msra.mxu0 0
        %2751 = vmatpush.bf16.msra.mxu0 0
        %2752 = vmatpush.bf16.msra.mxu0 0
        %2753 = vmatpush.bf16.msra.mxu0 %v2744
        %2754 = vmatmul.bf16.gmra.mxu0 %v2741
        %v2755 = vpop.f32.mrf.mxu0
        %v2756 = vadd.f32 0.0, %v2755
        %v2757 = vpop.f32.mrf.mxu0
        %2758 = vdwg.mxu0
        %2759 = vrot.lane.b32.xlu0 %v2696, 64
        %v2760 = vpop.permute.xlu0 %2759
        %2761 = vrot.lane.b32.xlu0 %v2701, 64
        %v2762 = vpop.permute.xlu0 %2761
        %v2764 = vsel %vm1642, %v2760, 0
        %v2767 = vsel %vm1642, %v2762, 0
        %2769 = vmatpush.bf16.xpose.msra.mxu0 0
        %2770 = vmatpush.bf16.xpose.msra.mxu0 0
        %2771 = vmatpush.bf16.xpose.msra.mxu0 0
        %2772 = vmatpush.bf16.xpose.msra.mxu0 0
        %2773 = vmatpush.bf16.xpose.msra.mxu0 0
        %2774 = vmatpush.bf16.xpose.msra.mxu0 0
        %2775 = vmatpush.bf16.xpose.msra.mxu0 0
        %2776 = vmatpush.bf16.xpose.msra.mxu0 %v2767
        %2777 = vmatmul.bf16.gmra.mxu0 %v2764
        %v2778 = vpop.f32.mrf.mxu0
        %v2779 = vadd.f32 %v1261, %v2778
        %v2780 = vpop.f32.mrf.mxu0
        %2781 = vdwg.mxu0
        %v2782 = vsel %vm1662, %v2779, -inf
        %2783 = vmax.xlane.f32.xlu0 %v2782
        %v2784 = vpop.xlane.xlu0 %2783
        %v2785 = vsub.f32 %v2779, %v2784
        %v2786 = vmul.f32 %v2785, 1.442695
        %v2787 = vpow.pop %v2786
        %v2788 = vsel %vm1662, %v2787, 0.0
        %2789 = vadd.xlane.f32.xlu0 %v2788
        %v2790 = vpop.xlane.xlu0 %2789
        %v2791 = vrcp.pop %v2790
        %v2792 = vmul.f32 %v2787, %v2791
        %v2793 = vpack.c.bf16 %v2792, %v2792
        %2794 = vrot.lane.b32.xlu0 %v2737, 64
        %v2795 = vpop.permute.xlu0 %2794
        %v2797 = vsel %vm1662, %v2793, 0
        %v2800 = vsel %vm1678, %v2795, 0
        %2802 = vmatpush.bf16.msra.mxu0 0
        %2803 = vmatpush.bf16.msra.mxu0 0
        %2804 = vmatpush.bf16.msra.mxu0 0
        %2805 = vmatpush.bf16.msra.mxu0 0
        %2806 = vmatpush.bf16.msra.mxu0 0
        %2807 = vmatpush.bf16.msra.mxu0 0
        %2808 = vmatpush.bf16.msra.mxu0 0
        %2809 = vmatpush.bf16.msra.mxu0 %v2800
        %2810 = vmatmul.bf16.gmra.mxu0 %v2797
        %v2811 = vpop.f32.mrf.mxu0
        %v2812 = vadd.f32 0.0, %v2811
        %v2813 = vpop.f32.mrf.mxu0
        %2814 = vdwg.mxu0
        %2815 = vrot.lane.b32.xlu0 %v2696, 32
        %v2816 = vpop.permute.xlu0 %2815
        %2817 = vrot.lane.b32.xlu0 %v2701, 32
        %v2818 = vpop.permute.xlu0 %2817
        %v2820 = vsel %vm1642, %v2816, 0
        %v2823 = vsel %vm1642, %v2818, 0
        %2825 = vmatpush.bf16.xpose.msra.mxu0 0
        %2826 = vmatpush.bf16.xpose.msra.mxu0 0
        %2827 = vmatpush.bf16.xpose.msra.mxu0 0
        %2828 = vmatpush.bf16.xpose.msra.mxu0 0
        %2829 = vmatpush.bf16.xpose.msra.mxu0 0
        %2830 = vmatpush.bf16.xpose.msra.mxu0 0
        %2831 = vmatpush.bf16.xpose.msra.mxu0 0
        %2832 = vmatpush.bf16.xpose.msra.mxu0 %v2823
        %2833 = vmatmul.bf16.gmra.mxu0 %v2820
        %v2834 = vpop.f32.mrf.mxu0
        %v2835 = vadd.f32 %v1261, %v2834
        %v2836 = vpop.f32.mrf.mxu0
        %2837 = vdwg.mxu0
        %v2838 = vsel %vm1662, %v2835, -inf
        %2839 = vmax.xlane.f32.xlu0 %v2838
        %v2840 = vpop.xlane.xlu0 %2839
        %v2841 = vsub.f32 %v2835, %v2840
        %v2842 = vmul.f32 %v2841, 1.442695
        %v2843 = vpow.pop %v2842
        %v2844 = vsel %vm1662, %v2843, 0.0
        %2845 = vadd.xlane.f32.xlu0 %v2844
        %v2846 = vpop.xlane.xlu0 %2845
        %v2847 = vrcp.pop %v2846
        %v2848 = vmul.f32 %v2843, %v2847
        %v2849 = vpack.c.bf16 %v2848, %v2848
        %2850 = vrot.lane.b32.xlu0 %v2737, 32
        %v2851 = vpop.permute.xlu0 %2850
        %v2853 = vsel %vm1662, %v2849, 0
        %v2856 = vsel %vm1678, %v2851, 0
        %2858 = vmatpush.bf16.msra.mxu0 0
        %2859 = vmatpush.bf16.msra.mxu0 0
        %2860 = vmatpush.bf16.msra.mxu0 0
        %2861 = vmatpush.bf16.msra.mxu0 0
        %2862 = vmatpush.bf16.msra.mxu0 0
        %2863 = vmatpush.bf16.msra.mxu0 0
        %2864 = vmatpush.bf16.msra.mxu0 0
        %2865 = vmatpush.bf16.msra.mxu0 %v2856
        %2866 = vmatmul.bf16.gmra.mxu0 %v2853
        %v2867 = vpop.f32.mrf.mxu0
        %v2868 = vadd.f32 0.0, %v2867
        %v2869 = vpop.f32.mrf.mxu0
        %2870 = vdwg.mxu0
        %2872 = vrot.lane.b32.xlu0 %v2756, 32
        %v2873 = vpop.permute.xlu0 %2872
        %2876 = vrot.lane.b32.xlu0 %v2812, 64
        %v2877 = vpop.permute.xlu0 %2876
        %2880 = vrot.lane.b32.xlu0 %v2868, 96
        %v2881 = vpop.permute.xlu0 %2880
        %v2883 = vsel %vm1642, %v2691, %v2873
        %v2884 = vsel %vm1885, %v2883, %v2877
        %v2885 = vsel %vm1887, %v2884, %v2881
        %v2886 = vpack.c.bf16 %v2885, %v2885
        %s2887 = scalar_lea.vmem %s10, 64
        %v2888 = vld [vmem:[%s2887] sm:$0xf]
        %v2889 = vld [vmem:[%s2887 + $0x4] sm:$0xf]
        %v2890 = vld [vmem:[%s2887 + $0x8] sm:$0xf]
        %v2891 = vld [vmem:[%s2887 + $0xc] sm:$0xf]
        %v2892 = vld [vmem:[%s2887 + $0x10] sm:$0xf]
        %v2893 = vld [vmem:[%s2887 + $0x14] sm:$0xf]
        %v2894 = vld [vmem:[%s2887 + $0x18] sm:$0xf]
        %v2895 = vld [vmem:[%s2887 + $0x1c] sm:$0xf]
        %v2896 = vld [vmem:[%s2887 + $0x20] sm:$0xf]
        %v2897 = vld [vmem:[%s2887 + $0x24] sm:$0xf]
        %v2898 = vld [vmem:[%s2887 + $0x28] sm:$0xf]
        %v2899 = vld [vmem:[%s2887 + $0x2c] sm:$0xf]
        %v2900 = vld [vmem:[%s2887 + $0x30] sm:$0xf]
        %v2901 = vld [vmem:[%s2887 + $0x34] sm:$0xf]
        %v2902 = vld [vmem:[%s2887 + $0x38] sm:$0xf]
        %v2903 = vld [vmem:[%s2887 + $0x3c] sm:$0xf]
        %v2920 = vunpack.c.l.b16 %v2888
        %v2921 = vunpack.c.l.b16 %v2889
        %v2922 = vunpack.c.l.b16 %v2890
        %v2923 = vunpack.c.l.b16 %v2891
        %v2924 = vunpack.c.l.b16 %v2892
        %v2925 = vunpack.c.l.b16 %v2893
        %v2926 = vunpack.c.l.b16 %v2894
        %v2927 = vunpack.c.l.b16 %v2895
        %v2928 = vunpack.c.l.b16 %v2896
        %v2929 = vunpack.c.l.b16 %v2897
        %v2930 = vunpack.c.l.b16 %v2898
        %v2931 = vunpack.c.l.b16 %v2899
        %v2932 = vunpack.c.l.b16 %v2900
        %v2933 = vunpack.c.l.b16 %v2901
        %v2934 = vunpack.c.l.b16 %v2902
        %v2935 = vunpack.c.l.b16 %v2903
        %v2936 = vpack.c.b16 %v2921, %v2920
        %v2937 = vpack.c.b16 %v2923, %v2922
        %v2938 = vpack.c.b16 %v2925, %v2924
        %v2939 = vpack.c.b16 %v2927, %v2926
        %v2940 = vpack.c.b16 %v2929, %v2928
        %v2941 = vpack.c.b16 %v2931, %v2930
        %v2942 = vpack.c.b16 %v2933, %v2932
        %v2943 = vpack.c.b16 %v2935, %v2934
        %2952 = vmatpush.bf16.msra.mxu0 %v2943
        %2953 = vmatpush.bf16.msra.mxu0 %v2942
        %2954 = vmatpush.bf16.msra.mxu0 %v2941
        %2955 = vmatpush.bf16.msra.mxu0 %v2940
        %2956 = vmatpush.bf16.msra.mxu0 %v2939
        %2957 = vmatpush.bf16.msra.mxu0 %v2938
        %2958 = vmatpush.bf16.msra.mxu0 %v2937
        %2959 = vmatpush.bf16.msra.mxu0 %v2936
        %2960 = vmatmul.bf16.gmra.mxu0 %v2886
        %v2961 = vpop.f32.mrf.mxu0
        %v2962 = vadd.f32 0.0, %v2961
        %v2963 = vpop.f32.mrf.mxu0
        %2964 = vdwg.mxu0
        %v2965 = vadd.f32 %v2266, %v2962
        %s2966 = scalar_lea.vmem %s11, 1
        %v2967 = vld [vmem:[%s2966] sm:$0x1]
        %v2969 = vperm.slane %v2967, 0
        %v2971 = vadd.f32 %v2965, %v2969
        %s2972 = scalar_lea.vmem %s12, 1
        %v2973 = vld [vmem:[%s2972] sm:$0x1]
        %s2974 = scalar_lea.vmem %s13, 1
        %v2975 = vld [vmem:[%s2974] sm:$0x1]
        %2976 = vadd.xlane.f32.xlu0 %v2971
        %v2977 = vpop.xlane.xlu0 %2976
        %v2978 = vmul.f32 %v2977, %v1272
        %v2979 = vsub.f32 %v2971, %v2978
        %v2980 = vmul.f32 %v2979, %v2979
        %2981 = vadd.xlane.f32.xlu0 %v2980
        %v2982 = vpop.xlane.xlu0 %2981
        %v2983 = vmul.f32 %v2982, %v1272
        %v2984 = vadd.f32 %v2983, 1e-06
        %v2985 = vrsqrt.pop %v2984
        %v2986 = vmul.f32 %v2985, %v2984
        %v2987 = vmul.f32 %v2986, %v2985
        %v2988 = vmul.f32 0.5, %v2987
        %v2989 = vsub.f32 1.5, %v2988
        %v2990 = vmul.f32 %v2985, %v2989
        %vm2991 = vweird.f32 %v2984
        %vm2992 = vweird.f32 %v2985
        %vm2993 = vmor %vm2991, %vm2992
        %v2994 = vsel %vm2993, %v2985, %v2990
        %v2995 = vmul.f32 %v2979, %v2994
        %v2997 = vperm.slane %v2973, 0
        %v2999 = vmul.f32 %v2995, %v2997
        %v3001 = vperm.slane %v2975, 0
        %v3003 = vadd.f32 %v2999, %v3001
        %v3004 = vpack.c.bf16 %v3003, %v3003
        %s3005 = scalar_lea.vmem [#allocation3], 128
        %v3006 = vld [vmem:[%s3005] sm:$0xff]
        %v3007 = vld [vmem:[%s3005 + $0x8] sm:$0xff]
        %v3008 = vld [vmem:[%s3005 + $0x10] sm:$0xff]
        %v3009 = vld [vmem:[%s3005 + $0x18] sm:$0xff]
        %v3010 = vld [vmem:[%s3005 + $0x20] sm:$0xff]
        %v3011 = vld [vmem:[%s3005 + $0x28] sm:$0xff]
        %v3012 = vld [vmem:[%s3005 + $0x30] sm:$0xff]
        %v3013 = vld [vmem:[%s3005 + $0x38] sm:$0xff]
        %v3014 = vld [vmem:[%s3005 + $0x40] sm:$0xff]
        %v3015 = vld [vmem:[%s3005 + $0x48] sm:$0xff]
        %v3016 = vld [vmem:[%s3005 + $0x50] sm:$0xff]
        %v3017 = vld [vmem:[%s3005 + $0x58] sm:$0xff]
        %v3018 = vld [vmem:[%s3005 + $0x60] sm:$0xff]
        %v3019 = vld [vmem:[%s3005 + $0x68] sm:$0xff]
        %v3020 = vld [vmem:[%s3005 + $0x70] sm:$0xff]
        %v3021 = vld [vmem:[%s3005 + $0x78] sm:$0xff]
        %s3022 = scalar_lea.vmem %s15, 2
        %v3023 = vld [vmem:[%s3022] sm:$0x3]
        %v3025 = vperm.slane %v3023, 0
        %v3026 = vperm.slane %v3023, 1
        %v3045 = vunpack.c.l.b16 %v3006
        %v3046 = vunpack.c.h.b16 %v3006
        %v3047 = vunpack.c.l.b16 %v3007
        %v3048 = vunpack.c.h.b16 %v3007
        %v3049 = vunpack.c.l.b16 %v3008
        %v3050 = vunpack.c.h.b16 %v3008
        %v3051 = vunpack.c.l.b16 %v3009
        %v3052 = vunpack.c.h.b16 %v3009
        %v3053 = vunpack.c.l.b16 %v3010
        %v3054 = vunpack.c.h.b16 %v3010
        %v3055 = vunpack.c.l.b16 %v3011
        %v3056 = vunpack.c.h.b16 %v3011
        %v3057 = vunpack.c.l.b16 %v3012
        %v3058 = vunpack.c.h.b16 %v3012
        %v3059 = vunpack.c.l.b16 %v3013
        %v3060 = vunpack.c.h.b16 %v3013
        %v3061 = vunpack.c.l.b16 %v3014
        %v3062 = vunpack.c.h.b16 %v3014
        %v3063 = vunpack.c.l.b16 %v3015
        %v3064 = vunpack.c.h.b16 %v3015
        %v3065 = vunpack.c.l.b16 %v3016
        %v3066 = vunpack.c.h.b16 %v3016
        %v3067 = vunpack.c.l.b16 %v3017
        %v3068 = vunpack.c.h.b16 %v3017
        %v3069 = vunpack.c.l.b16 %v3018
        %v3070 = vunpack.c.h.b16 %v3018
        %v3071 = vunpack.c.l.b16 %v3019
        %v3072 = vunpack.c.h.b16 %v3019
        %v3073 = vunpack.c.l.b16 %v3020
        %v3074 = vunpack.c.h.b16 %v3020
        %v3075 = vunpack.c.l.b16 %v3021
        %v3076 = vunpack.c.h.b16 %v3021
        %v3077 = vpack.c.b16 %v3047, %v3045
        %v3078 = vpack.c.b16 %v3048, %v3046
        %v3079 = vpack.c.b16 %v3051, %v3049
        %v3080 = vpack.c.b16 %v3052, %v3050
        %v3081 = vpack.c.b16 %v3055, %v3053
        %v3082 = vpack.c.b16 %v3056, %v3054
        %v3083 = vpack.c.b16 %v3059, %v3057
        %v3084 = vpack.c.b16 %v3060, %v3058
        %v3085 = vpack.c.b16 %v3063, %v3061
        %v3086 = vpack.c.b16 %v3064, %v3062
        %v3087 = vpack.c.b16 %v3067, %v3065
        %v3088 = vpack.c.b16 %v3068, %v3066
        %v3089 = vpack.c.b16 %v3071, %v3069
        %v3090 = vpack.c.b16 %v3072, %v3070
        %v3091 = vpack.c.b16 %v3075, %v3073
        %v3092 = vpack.c.b16 %v3076, %v3074
        %3109 = vmatpush.bf16.msra.mxu0 %v3091
        %3110 = vmatpush.bf16.msra.mxu0 %v3089
        %3111 = vmatpush.bf16.msra.mxu0 %v3087
        %3112 = vmatpush.bf16.msra.mxu0 %v3085
        %3113 = vmatpush.bf16.msra.mxu0 %v3083
        %3114 = vmatpush.bf16.msra.mxu0 %v3081
        %3115 = vmatpush.bf16.msra.mxu0 %v3079
        %3116 = vmatpush.bf16.msra.mxu0 %v3077
        %3117 = vmatmul.bf16.gmra.mxu0 %v3004
        %v3118 = vpop.f32.mrf.mxu0
        %v3119 = vadd.f32 %v3025, %v3118
        %v3120 = vpop.f32.mrf.mxu0
        %3121 = vdwg.mxu0
        %3122 = vmatpush.bf16.msra.mxu0 %v3092
        %3123 = vmatpush.bf16.msra.mxu0 %v3090
        %3124 = vmatpush.bf16.msra.mxu0 %v3088
        %3125 = vmatpush.bf16.msra.mxu0 %v3086
        %3126 = vmatpush.bf16.msra.mxu0 %v3084
        %3127 = vmatpush.bf16.msra.mxu0 %v3082
        %3128 = vmatpush.bf16.msra.mxu0 %v3080
        %3129 = vmatpush.bf16.msra.mxu0 %v3078
        %3130 = vmatmul.bf16.gmra.mxu0 %v3004
        %v3131 = vpop.f32.mrf.mxu0
        %v3132 = vadd.f32 %v3026, %v3131
        %v3133 = vpop.f32.mrf.mxu0
        %3134 = vdwg.mxu0
        %v3135 = vxor.u32 %v3119, 2147483648
        %v3136 = vmul.f32 %v3135, 1.442695
        %v3137 = vpow.pop %v3136
        %v3138 = vadd.f32 %v3137, 1.0
        %v3139 = vrcp.pop %v3138
        %v3140 = vmul.f32 %v3138, %v3139
        %v3141 = vsub.f32 1.0, %v3140
        %v3142 = vmul.f32 %v3139, %v3141
        %v3143 = vadd.f32 %v3139, %v3142
        %vm3144 = vweird.f32 %v3138
        %vm3145 = vweird.f32 %v3139
        %vm3146 = vmor %vm3144, %vm3145
        %v3147 = vsel %vm3146, %v3139, %v3143
        %v3148 = vand.u32 2147483647, %v3138
        %vm3149 = vcmp.eq.f32.partialorder %v3148, 8.507059e+37
        %v3150 = vand.u32 %v3138, 2147483648
        %v3151 = vor.u32 1.1754944e-38, %v3150
        %v3152 = vsel %vm3149, %v3151, %v3147
        %v3153 = vmul.f32 1.0, %v3152
        %v3154 = vmul.f32 %v3119, %v3153
        %v3155 = vmul.f32 %v3154, %v3132
        %s3156 = scalar_lea.vmem %s16, 1
        %v3157 = vld [vmem:[%s3156] sm:$0x1]
        %s3158 = scalar_lea.vmem %s17, 1
        %v3159 = vld [vmem:[%s3158] sm:$0x1]
        %3160 = vadd.xlane.f32.xlu0 %v3155
        %v3161 = vpop.xlane.xlu0 %3160
        %v3162 = vmul.f32 %v3161, %v1272
        %v3163 = vsub.f32 %v3155, %v3162
        %v3164 = vmul.f32 %v3163, %v3163
        %3165 = vadd.xlane.f32.xlu0 %v3164
        %v3166 = vpop.xlane.xlu0 %3165
        %v3167 = vmul.f32 %v3166, %v1272
        %v3168 = vadd.f32 %v3167, 1e-06
        %v3169 = vrsqrt.pop %v3168
        %v3170 = vmul.f32 %v3169, %v3168
        %v3171 = vmul.f32 %v3170, %v3169
        %v3172 = vmul.f32 0.5, %v3171
        %v3173 = vsub.f32 1.5, %v3172
        %v3174 = vmul.f32 %v3169, %v3173
        %vm3175 = vweird.f32 %v3168
        %vm3176 = vweird.f32 %v3169
        %vm3177 = vmor %vm3175, %vm3176
        %v3178 = vsel %vm3177, %v3169, %v3174
        %v3179 = vmul.f32 %v3163, %v3178
        %v3181 = vperm.slane %v3157, 0
        %v3183 = vmul.f32 %v3179, %v3181
        %v3185 = vperm.slane %v3159, 0
        %v3187 = vadd.f32 %v3183, %v3185
        %v3188 = vpack.c.bf16 %v3187, %v3187
        %s3189 = scalar_lea.vmem [#allocation5], 64
        %v3190 = vld [vmem:[%s3189] sm:$0xf]
        %v3191 = vld [vmem:[%s3189 + $0x4] sm:$0xf]
        %v3192 = vld [vmem:[%s3189 + $0x8] sm:$0xf]
        %v3193 = vld [vmem:[%s3189 + $0xc] sm:$0xf]
        %v3194 = vld [vmem:[%s3189 + $0x10] sm:$0xf]
        %v3195 = vld [vmem:[%s3189 + $0x14] sm:$0xf]
        %v3196 = vld [vmem:[%s3189 + $0x18] sm:$0xf]
        %v3197 = vld [vmem:[%s3189 + $0x1c] sm:$0xf]
        %v3198 = vld [vmem:[%s3189 + $0x20] sm:$0xf]
        %v3199 = vld [vmem:[%s3189 + $0x24] sm:$0xf]
        %v3200 = vld [vmem:[%s3189 + $0x28] sm:$0xf]
        %v3201 = vld [vmem:[%s3189 + $0x2c] sm:$0xf]
        %v3202 = vld [vmem:[%s3189 + $0x30] sm:$0xf]
        %v3203 = vld [vmem:[%s3189 + $0x34] sm:$0xf]
        %v3204 = vld [vmem:[%s3189 + $0x38] sm:$0xf]
        %v3205 = vld [vmem:[%s3189 + $0x3c] sm:$0xf]
        %v3222 = vunpack.c.l.b16 %v3190
        %v3223 = vunpack.c.l.b16 %v3191
        %v3224 = vunpack.c.l.b16 %v3192
        %v3225 = vunpack.c.l.b16 %v3193
        %v3226 = vunpack.c.l.b16 %v3194
        %v3227 = vunpack.c.l.b16 %v3195
        %v3228 = vunpack.c.l.b16 %v3196
        %v3229 = vunpack.c.l.b16 %v3197
        %v3230 = vunpack.c.l.b16 %v3198
        %v3231 = vunpack.c.l.b16 %v3199
        %v3232 = vunpack.c.l.b16 %v3200
        %v3233 = vunpack.c.l.b16 %v3201
        %v3234 = vunpack.c.l.b16 %v3202
        %v3235 = vunpack.c.l.b16 %v3203
        %v3236 = vunpack.c.l.b16 %v3204
        %v3237 = vunpack.c.l.b16 %v3205
        %v3238 = vpack.c.b16 %v3223, %v3222
        %v3239 = vpack.c.b16 %v3225, %v3224
        %v3240 = vpack.c.b16 %v3227, %v3226
        %v3241 = vpack.c.b16 %v3229, %v3228
        %v3242 = vpack.c.b16 %v3231, %v3230
        %v3243 = vpack.c.b16 %v3233, %v3232
        %v3244 = vpack.c.b16 %v3235, %v3234
        %v3245 = vpack.c.b16 %v3237, %v3236
        %3254 = vmatpush.bf16.msra.mxu0 %v3245
        %3255 = vmatpush.bf16.msra.mxu0 %v3244
        %3256 = vmatpush.bf16.msra.mxu0 %v3243
        %3257 = vmatpush.bf16.msra.mxu0 %v3242
        %3258 = vmatpush.bf16.msra.mxu0 %v3241
        %3259 = vmatpush.bf16.msra.mxu0 %v3240
        %3260 = vmatpush.bf16.msra.mxu0 %v3239
        %3261 = vmatpush.bf16.msra.mxu0 %v3238
        %3262 = vmatmul.bf16.gmra.mxu0 %v3188
        %v3263 = vpop.f32.mrf.mxu0
        %v3264 = vadd.f32 0.0, %v3263
        %v3265 = vpop.f32.mrf.mxu0
        %3266 = vdwg.mxu0
        %v3267 = vadd.f32 %v2971, %v3264
        %s3268 = scalar_lea.vmem %s19, 1
        %v3269 = vld [vmem:[%s3268] sm:$0x1]
        %v3271 = vperm.slane %v3269, 0
        %v3273 = vadd.f32 %v3267, %v3271
        %v3274 = vld [vmem:[%s20] sm:$0x1]
        %v3275 = vld [vmem:[%s21] sm:$0x1]
        %vm3276 = vcmask 1040384
        %v3277 = vsel %vm3276, %v3273, 0.0
        %3278 = vadd.xlane.f32.xlu0 %v3277
        %v3279 = vpop.xlane.xlu0 %3278
        %v3280 = vmul.f32 %v3279, %v1272
        %v3281 = vsub.f32 %v3273, %v3280
        %v3282 = vmul.f32 %v3281, %v3281
        %v3283 = vsel %vm3276, %v3282, 0.0
        %3284 = vadd.xlane.f32.xlu0 %v3283
        %v3285 = vpop.xlane.xlu0 %3284
        %v3286 = vmul.f32 %v3285, %v1272
        %v3287 = vadd.f32 %v3286, 1e-06
        %v3288 = vrsqrt.pop %v3287
        %v3289 = vmul.f32 %v3288, %v3287
        %v3290 = vmul.f32 %v3289, %v3288
        %v3291 = vmul.f32 0.5, %v3290
        %v3292 = vsub.f32 1.5, %v3291
        %v3293 = vmul.f32 %v3288, %v3292
        %vm3294 = vweird.f32 %v3287
        %vm3295 = vweird.f32 %v3288
        %vm3296 = vmor %vm3294, %vm3295
        %v3297 = vsel %vm3296, %v3288, %v3293
        %v3298 = vmul.f32 %v3281, %v3297
        %v3299 = vmul.f32 %v3298, %v3274
        %v3300 = vadd.f32 %v3299, %v3275
        %v3301 = vld [vmem:[%s22] sm:$0x1]
        %v3302 = vmul.f32 %v3300, %v3301
        %v3303 = vsel %vm3276, %v3302, 0.0
        %3304 = vadd.xlane.f32.xlu0 %v3303
        %v3305 = vpop.xlane.xlu0 %3304
        %v3306 = vld [vmem:[#allocation2] sm:$0x1]
        %v3307 = vadd.f32 %v3305, %v3306
        %v3308 = vxor.u32 %v3307, 2147483648
        %v3309 = vmul.f32 %v3308, 1.442695
        %v3310 = vpow.pop %v3309
        %v3311 = vadd.f32 %v3310, 1.0
        %v3312 = vrcp.pop %v3311
        %v3313 = vmul.f32 %v3311, %v3312
        %v3314 = vsub.f32 1.0, %v3313
        %v3315 = vmul.f32 %v3312, %v3314
        %v3316 = vadd.f32 %v3312, %v3315
        %vm3317 = vweird.f32 %v3311
        %vm3318 = vweird.f32 %v3312
        %vm3319 = vmor %vm3317, %vm3318
        %v3320 = vsel %vm3319, %v3312, %v3316
        %v3321 = vand.u32 2147483647, %v3311
        %vm3322 = vcmp.eq.f32.partialorder %v3321, 8.507059e+37
        %v3323 = vand.u32 %v3311, 2147483648
        %v3324 = vor.u32 1.1754944e-38, %v3323
        %v3325 = vsel %vm3322, %v3324, %v3320
        %v3326 = vmul.f32 1.0, %v3325
        %v3327 = vmul.f32 %v3326, 18.0
        %vm3328 = vcmask 0
        %3329 = vst.msk [vmem:[%s769] sm:$0x1] %vm3328, %v3327
        %p3330 = scmp.lt.s32.totalorder %s39, 1
        %s3331 = scalar_select %p3330, %s39, 1
        %s3332 = scalar_lea.vmem %s24, %s3331
        // Predicated region
        $region125: #{eva2_forward.1} parent=115 // pred_check
          %p3333 = pneg %p566
        $region126: #{eva2_forward.1} parent=115 // pred_check_branch
          %3335 = sbr.rel (%p3333) target = $region128
        $region127: #{eva2_forward.1} parent=115 // pred_region
          _
        $region128: #{eva2_forward.1} parent=115 // pred_fallthru
          _
      $region116: #{eva2_forward.1} parent=5 // pred_fallthru
        _
      %p3336 = scmp.le.s32.totalorder 2, %s34
      // Predicated region
      $region129: #{eva2_forward.1} parent=5 // pred_check
        %p3337 = pneg %p3336
      $region130: #{eva2_forward.1} parent=5 // pred_check_branch
        %3339 = sbr.rel (%p3337) target = $region132
      $region131: #{eva2_forward.1} parent=5 // pred_region
        %s3340 = ssub.s32 %s34, 2
        // Predicated region
        $region133: #{eva2_forward.1} parent=131 // pred_check
          %p3341 = pneg %p572
        $region134: #{eva2_forward.1} parent=131 // pred_check_branch
          %3343 = sbr.rel (%p3341) target = $region136
        $region135: #{eva2_forward.1} parent=131 // pred_region
          %p3344 = scmp.lt.s32.totalorder %s40, 1
          %s3345 = scalar_select %p3344, %s40, 1
          %s3346 = scalar_lea.vmem %s24, %s3345
        $region136: #{eva2_forward.1} parent=131 // pred_fallthru
          _
      $region132: #{eva2_forward.1} parent=5 // pred_fallthru
        _
    $region6: #{eva2_forward.1} parent=1 // loop_footer
      %s38 = sadd.s32 1, %s34
    $region7: #{eva2_forward.1} parent=1 // loop_footer_branch
      %33 = sbr.rel target = $region3
    $region8: #{eva2_forward.1} parent=1 // loop_exit
      _
    %3347 = vsyncpa [#allocation4], 1
    %s3348 = scalar_lea.sflag [#allocation4], 1
    %3349 = vsyncpa %s3348, 1
    %3350 = vsyncpa [#allocation6], 1

</llo_original>
